<compile_context>
chip_gen: v7x
topology: tpu7x:2x2x1
jax: 0.10.0
libtpu: 0.0.40
codegen_flags: <defaults>
</compile_context>

<pallas_src>
import jax
import jax.numpy as jnp
from jax import lax
from jax.experimental import pallas as pl
from jax.experimental.pallas import tpu as pltpu

# ----------------------------- sizes (small, consistent with the module) ----
B, S, H = 2, 8, 32          # batch, seq, hidden (hidden_size analogue of 768)
NH, HD = 4, 8               # heads, head dim (NH * HD == H)
FF = 64                     # FFN intermediate
C = 5                       # num_classes
VOCAB = 100
N_SEG = 2
DR_RATE = 0.1               # dr_rate (dropout active, training semantics, deterministic key)
LN_EPS = 1e-12
LANE = 128                  # lane-dense padded logits width


# ----------------------------- BlockSpec helpers ------------------------------
def _const_spec(shape):
    """Weights: same block every grid step (stays resident in VMEM)."""
    n = len(shape)
    return pl.BlockSpec(tuple(shape), lambda b, n=n: (0,) * n)


def _batch_spec(shape):
    """Per-batch tensors: leading dim mapped to the batch grid axis."""
    n = len(shape)
    return pl.BlockSpec((1,) + tuple(shape[1:]), lambda b, n=n: (b,) + (0,) * (n - 1))


# ----------------------------- the fused kernel -------------------------------
def bert_kernel(valid_ref, x_ref, wqkv_ref, bqkv_ref, wo_ref, bo_ref,
                ln1g_ref, ln1b_ref, w1_ref, b1_ref, w2_ref, b2_ref,
                ln2g_ref, ln2b_ref, wp_ref, bp_ref, wc_ref, bc_ref,
                drop_ref, out_ref):
    # One batch element per grid step ("parallel" axis -> shardable across TCs on v7x).
    x = x_ref[0]                                                     # [S, H] f32

    # ---- gen_attention_mask: key position < valid_length -> additive bias ----
    pos = lax.broadcasted_iota(jnp.int32, (1, S), 1)
    key_ok = pos < valid_ref[0]                                      # [1, S] bool
    bias = jnp.where(key_ok, 0.0, -1e9).astype(jnp.float32)          # keep f32

    def dense(v, w_ref, b_ref):
        # bf16 MXU inputs, f32 accumulation, f32 bias add.
        return jnp.dot(v.astype(jnp.bfloat16), w_ref[...],
                       preferred_element_type=jnp.float32) + b_ref[...]

    # ---- fused QKV projection: one [S,H] x [H,3H] matmul ----------------------
    qkv = dense(x, wqkv_ref, bqkv_ref)                               # [S, 3H] f32
    scale = 1.0 / jnp.sqrt(jnp.float32(HD))
    q = (qkv[:, :H] * scale).reshape(S, NH, HD)                      # scale folded into q once
    k = qkv[:, H:2 * H].reshape(S, NH, HD)
    v = qkv[:, 2 * H:].reshape(S, NH, HD)

    # ---- attention: all heads in one batched contraction (no per-head loop) ---
    s = jnp.einsum('qhd,khd->hqk', q.astype(jnp.bfloat16), k.astype(jnp.bfloat16),
                   preferred_element_type=jnp.float32)               # [NH, S, S]
    s = s + bias[None]                                               # mask padded keys
    s = s - jnp.max(s, axis=-1, keepdims=True)
    p = jnp.exp(s)
    # TODO(synk): pl.reciprocal(..., approx=True) would move this divide to the EUP slot,
    #             but it lacks an interpret/CPU lowering; plain divide kept for portability.
    p = p / jnp.sum(p, axis=-1, keepdims=True)                       # f32 softmax stats
    ctx = jnp.einsum('hqk,khd->qhd', p.astype(jnp.bfloat16), v.astype(jnp.bfloat16),
                     preferred_element_type=jnp.float32)             # [S, NH, HD]
    attn = dense(ctx.reshape(S, H), wo_ref, bo_ref)                  # [S, H]

    def layernorm(val, g_ref, b_ref):                                # f32 stats (v5e-friendly)
        mu = jnp.mean(val, axis=-1, keepdims=True)
        var = jnp.mean(jnp.square(val - mu), axis=-1, keepdims=True)
        return (val - mu) * lax.rsqrt(var + LN_EPS) * g_ref[...] + b_ref[...]

    h1 = layernorm(x + attn, ln1g_ref, ln1b_ref)                     # [S, H]
    ff = jax.nn.gelu(dense(h1, w1_ref, b1_ref), approximate=True)    # [S, FF]
    ff = dense(ff, w2_ref, b2_ref)                                   # [S, H]
    h2 = layernorm(h1 + ff, ln2g_ref, ln2b_ref)                      # [S, H]

    # ---- pooler(CLS) + dropout + classifier, same launch ----------------------
    cls = h2[0:1, :]                                                 # [1, H]  (CLS token)
    pooled = jnp.tanh(dense(cls, wp_ref, bp_ref))                    # [1, H]
    dropped = pooled * drop_ref[0]                                   # keep/(1-p) mask
    logits = dense(dropped, wc_ref, bc_ref)                          # [1, LANE] lane-dense
    out_ref[0] = logits


# ----------------------------- parameters -------------------------------------
def init_params(key):
    ks = jax.random.split(key, 11)
    w = lambda k, shape: (0.02 * jax.random.normal(k, shape)).astype(jnp.float32)
    zeros = lambda shape: jnp.zeros(shape, jnp.float32)
    ones = lambda shape: jnp.ones(shape, jnp.float32)
    return {
        'tok_emb': w(ks[0], (VOCAB, H)),
        'seg_emb': w(ks[1], (N_SEG, H)),
        'pos_emb': w(ks[2], (S, H)),
        'wq': w(ks[3], (H, H)),  'bq': zeros((1, H)),
        'wk': w(ks[4], (H, H)),  'bk': zeros((1, H)),
        'wv': w(ks[5], (H, H)),  'bv': zeros((1, H)),
        'wo': w(ks[6], (H, H)),  'bo': zeros((1, H)),
        'ln1_g': ones((1, H)),   'ln1_b': zeros((1, H)),
        'w1': w(ks[7], (H, FF)), 'b1': zeros((1, FF)),
        'w2': w(ks[8], (FF, H)), 'b2': zeros((1, H)),
        'ln2_g': ones((1, H)),   'ln2_b': zeros((1, H)),
        'wp': w(ks[9], (H, H)),  'bp': zeros((1, H)),   # pooler
        'wc': w(ks[10], (H, C)), 'bc': zeros((1, C)),   # classifier
    }


# ----------------------------- forward -----------------------------------------
def bert_classifier_forward(params, token_ids, valid_length, segment_ids, dropout_rng):
    p = params
    # 1) embeddings: gathers + add stay as plain-JAX glue (XLA fuses them into one op).
    x = (p['tok_emb'][token_ids]
         + p['seg_emb'][segment_ids]
         + p['pos_emb'][None, :, :]).astype(jnp.float32)              # [B, S, H]
    valid3 = valid_length.reshape(B, 1, 1).astype(jnp.int32)          # [B, 1, 1]

    # dropout keep-mask (nn.Dropout training semantics, deterministic key); generated
    # host-side because pltpu.prng_* has no interpret/CPU lowering.
    keep = jax.random.bernoulli(dropout_rng, 1.0 - DR_RATE, (B, 1, H))
    drop_mask = keep.astype(jnp.float32) / (1.0 - DR_RATE)            # [B, 1, H]

    bf16 = lambda a: a.astype(jnp.bfloat16)
    # fused QKV weight [H, 3H]; classifier padded lane-dense to [H, 128].
    wqkv = bf16(jnp.concatenate([p['wq'], p['wk'], p['wv']], axis=1))
    bqkv = jnp.concatenate([p['bq'], p['bk'], p['bv']], axis=1)
    wc_pad = bf16(jnp.zeros((H, LANE), jnp.float32).at[:, :C].set(p['wc']))
    bc_pad = jnp.zeros((1, LANE), jnp.float32).at[:, :C].set(p['bc'])

    args = (valid3, x,
            wqkv, bqkv, bf16(p['wo']), p['bo'],
            p['ln1_g'], p['ln1_b'],
            bf16(p['w1']), p['b1'], bf16(p['w2']), p['b2'],
            p['ln2_g'], p['ln2_b'],
            bf16(p['wp']), p['bp'], wc_pad, bc_pad,
            drop_mask)
    per_batch = {0, 1, 18}                        # valid3, x, drop_mask vary per batch step
    in_specs = [(_batch_spec(a.shape) if i in per_batch else _const_spec(a.shape))
                for i, a in enumerate(args)]

    logits_pad = pl.pallas_call(
        bert_kernel,
        out_shape=jax.ShapeDtypeStruct((B, 1, LANE), jnp.float32),
        grid=(B,),
        in_specs=in_specs,
        out_specs=_batch_spec((B, 1, LANE)),
        compiler_params=pltpu.CompilerParams(dimension_semantics=("parallel",)),
    )(*args)

    return logits_pad.reshape(B, LANE)[:, :C]     # slice padded lane-dense logits to C


# ----------------------------- main --------------------------------------------
if __name__ == "__main__":
    key = jax.random.PRNGKey(0)
    k_tok, k_params, k_drop = jax.random.split(key, 3)

    token_ids = jax.random.randint(k_tok, (B, S), 0, VOCAB, dtype=jnp.int32)
    segment_ids = (jnp.arange(S)[None, :] >= S // 2).astype(jnp.int32)
    segment_ids = jnp.broadcast_to(segment_ids, (B, S))
    valid_length = jnp.array([5, 8], dtype=jnp.int32)

    params = init_params(k_params)

    logits = bert_classifier_forward(params, token_ids, valid_length, segment_ids, k_drop)
    logits = jax.block_until_ready(logits)

    assert logits.shape == (B, C)
    assert bool(jnp.all(jnp.isfinite(logits)))
    print("KERNEL_OK")
</pallas_src>

<mosaic_0001>
module attributes {stable_mosaic.version = 11 : i64} {
  func.func @bert_kernel(%arg0: i32, %arg1: memref<1x1x1xi32, #tpu.memory_space<vmem>>, %arg2: memref<1x8x32xf32, #tpu.memory_space<vmem>>, %arg3: memref<32x96xbf16, #tpu.memory_space<vmem>>, %arg4: memref<1x96xf32, #tpu.memory_space<vmem>>, %arg5: memref<32x32xbf16, #tpu.memory_space<vmem>>, %arg6: memref<1x32xf32, #tpu.memory_space<vmem>>, %arg7: memref<1x32xf32, #tpu.memory_space<vmem>>, %arg8: memref<1x32xf32, #tpu.memory_space<vmem>>, %arg9: memref<32x64xbf16, #tpu.memory_space<vmem>>, %arg10: memref<1x64xf32, #tpu.memory_space<vmem>>, %arg11: memref<64x32xbf16, #tpu.memory_space<vmem>>, %arg12: memref<1x32xf32, #tpu.memory_space<vmem>>, %arg13: memref<1x32xf32, #tpu.memory_space<vmem>>, %arg14: memref<1x32xf32, #tpu.memory_space<vmem>>, %arg15: memref<32x32xbf16, #tpu.memory_space<vmem>>, %arg16: memref<1x32xf32, #tpu.memory_space<vmem>>, %arg17: memref<32x128xbf16, #tpu.memory_space<vmem>>, %arg18: memref<1x128xf32, #tpu.memory_space<vmem>>, %arg19: memref<1x1x32xf32, #tpu.memory_space<vmem>>, %arg20: memref<1x1x128xf32, #tpu.memory_space<vmem>>) attributes {dimension_semantics = [#tpu.dimension_semantics<parallel>], iteration_bounds = array<i64: 2>, scalar_prefetch = 0 : i64, scratch_operands = 0 : i64, tpu.core_type = #tpu.core_type<tc>, window_params = [{transform_indices = @transform_0, window_bounds = array<i64: 1, 1, 1>}, {transform_indices = @transform_1, window_bounds = array<i64: 1, 8, 32>}, {pipeline_mode = #tpu.pipeline_mode<synchronous>, transform_indices = @transform_2, window_bounds = array<i64: 32, 96>}, {pipeline_mode = #tpu.pipeline_mode<synchronous>, transform_indices = @transform_3, window_bounds = array<i64: 1, 96>}, {pipeline_mode = #tpu.pipeline_mode<synchronous>, transform_indices = @transform_4, window_bounds = array<i64: 32, 32>}, {pipeline_mode = #tpu.pipeline_mode<synchronous>, transform_indices = @transform_5, window_bounds = array<i64: 1, 32>}, {pipeline_mode = #tpu.pipeline_mode<synchronous>, transform_indices = @transform_6, window_bounds = array<i64: 1, 32>}, {pipeline_mode = #tpu.pipeline_mode<synchronous>, transform_indices = @transform_7, window_bounds = array<i64: 1, 32>}, {pipeline_mode = #tpu.pipeline_mode<synchronous>, transform_indices = @transform_8, window_bounds = array<i64: 32, 64>}, {pipeline_mode = #tpu.pipeline_mode<synchronous>, transform_indices = @transform_9, window_bounds = array<i64: 1, 64>}, {pipeline_mode = #tpu.pipeline_mode<synchronous>, transform_indices = @transform_10, window_bounds = array<i64: 64, 32>}, {pipeline_mode = #tpu.pipeline_mode<synchronous>, transform_indices = @transform_11, window_bounds = array<i64: 1, 32>}, {pipeline_mode = #tpu.pipeline_mode<synchronous>, transform_indices = @transform_12, window_bounds = array<i64: 1, 32>}, {pipeline_mode = #tpu.pipeline_mode<synchronous>, transform_indices = @transform_13, window_bounds = array<i64: 1, 32>}, {pipeline_mode = #tpu.pipeline_mode<synchronous>, transform_indices = @transform_14, window_bounds = array<i64: 32, 32>}, {pipeline_mode = #tpu.pipeline_mode<synchronous>, transform_indices = @transform_15, window_bounds = array<i64: 1, 32>}, {pipeline_mode = #tpu.pipeline_mode<synchronous>, transform_indices = @transform_16, window_bounds = array<i64: 32, 128>}, {pipeline_mode = #tpu.pipeline_mode<synchronous>, transform_indices = @transform_17, window_bounds = array<i64: 1, 128>}, {transform_indices = @transform_18, window_bounds = array<i64: 1, 1, 32>}, {transform_indices = @transform_19, window_bounds = array<i64: 1, 1, 128>}]} {
    %c0 = arith.constant 0 : index
    %c0_0 = arith.constant 0 : index
    %c0_1 = arith.constant 0 : index
    %0 = vector.load %arg2[%c0, %c0_0, %c0_1] : memref<1x8x32xf32, #tpu.memory_space<vmem>>, vector<1x8x32xf32>
    %1 = vector.shape_cast %0 : vector<1x8x32xf32> to vector<8x32xf32>
    %2 = tpu.iota {dimensions = array<i32: 1>} : vector<1x8xi32>
    %c0_2 = arith.constant 0 : index
    %c0_3 = arith.constant 0 : index
    %c0_4 = arith.constant 0 : index
    %3 = vector.load %arg1[%c0_2, %c0_3, %c0_4] : memref<1x1x1xi32, #tpu.memory_space<vmem>>, vector<1x1x1xi32>
    %4 = vector.shape_cast %3 : vector<1x1x1xi32> to vector<1x1xi32>
    %5 = vector.broadcast %4 : vector<1x1xi32> to vector<1x8xi32>
    %6 = arith.cmpi slt, %2, %5 : vector<1x8xi32>
    %cst = arith.constant 0.000000e+00 : f32
    %cst_5 = arith.constant -1.000000e+09 : f32
    %7 = vector.broadcast %cst : f32 to vector<1x8xf32>
    %8 = vector.broadcast %cst_5 : f32 to vector<1x8xf32>
    %9 = arith.select %6, %7, %8 : vector<1x8xi1>, vector<1x8xf32>
    %10 = arith.truncf %1 : vector<8x32xf32> to vector<8x32xbf16>
    %c0_6 = arith.constant 0 : index
    %c0_7 = arith.constant 0 : index
    %11 = vector.load %arg3[%c0_6, %c0_7] : memref<32x96xbf16, #tpu.memory_space<vmem>>, vector<32x96xbf16>
    %cst_8 = arith.constant dense<0.000000e+00> : vector<8x96xf32>
    %12 = tpu.matmul %10, %11, %cst_8 {dimension_numbers = #tpu.dot_dimension_numbers<[1], [0], [0], [1], [0, 0, 1, 1], [], []>} : vector<8x32xbf16>, vector<32x96xbf16>, vector<8x96xf32> -> vector<8x96xf32>
    %c0_9 = arith.constant 0 : index
    %c0_10 = arith.constant 0 : index
    %13 = vector.load %arg4[%c0_9, %c0_10] : memref<1x96xf32, #tpu.memory_space<vmem>>, vector<1x96xf32>
    %14 = vector.broadcast %13 : vector<1x96xf32> to vector<8x96xf32>
    %15 = arith.addf %12, %14 : vector<8x96xf32>
    %cst_11 = arith.constant 8.000000e+00 : f32
    %16 = math.sqrt %cst_11 : f32
    %cst_12 = arith.constant 1.000000e+00 : f32
    %17 = arith.divf %cst_12, %16 : f32
    %18 = vector.extract_strided_slice %15 {offsets = [0, 0], sizes = [8, 32], strides = [1, 1]} : vector<8x96xf32> to vector<8x32xf32>
    %19 = vector.broadcast %17 : f32 to vector<8x32xf32>
    %20 = arith.mulf %18, %19 : vector<8x32xf32>
    %21 = vector.shape_cast %20 : vector<8x32xf32> to vector<8x4x8xf32>
    %22 = vector.extract_strided_slice %15 {offsets = [0, 32], sizes = [8, 32], strides = [1, 1]} : vector<8x96xf32> to vector<8x32xf32>
    %23 = vector.shape_cast %22 : vector<8x32xf32> to vector<8x4x8xf32>
    %24 = vector.extract_strided_slice %15 {offsets = [0, 64], sizes = [8, 32], strides = [1, 1]} : vector<8x96xf32> to vector<8x32xf32>
    %25 = vector.shape_cast %24 : vector<8x32xf32> to vector<8x4x8xf32>
    %26 = arith.truncf %21 : vector<8x4x8xf32> to vector<8x4x8xbf16>
    %27 = arith.truncf %23 : vector<8x4x8xf32> to vector<8x4x8xbf16>
    "tpu.trace_start"() <{level = 10 : i32, message = "qhd,khd->hqk"}> : () -> ()
    %cst_13 = arith.constant dense<0.000000e+00> : vector<4x8x8xf32>
    %28 = tpu.matmul %26, %27, %cst_13 {dimension_numbers = #tpu.dot_dimension_numbers<[2], [2], [0], [0], [0, 1, 0, 0, 1, 0], [1], [1]>} : vector<8x4x8xbf16>, vector<8x4x8xbf16>, vector<4x8x8xf32> -> vector<4x8x8xf32>
    "tpu.trace_stop"() : () -> ()
    %29 = vector.shape_cast %9 : vector<1x8xf32> to vector<1x1x8xf32>
    %30 = vector.broadcast %29 : vector<1x1x8xf32> to vector<4x8x8xf32>
    %31 = arith.addf %28, %30 : vector<4x8x8xf32>
    %cst_14 = arith.constant dense<0xFF800000> : vector<4x8xf32>
    %32 = vector.multi_reduction <maximumf>, %31, %cst_14 [2] : vector<4x8x8xf32> to vector<4x8xf32>
    %33 = vector.shape_cast %32 : vector<4x8xf32> to vector<4x8x1xf32>
    %34 = vector.broadcast %33 : vector<4x8x1xf32> to vector<4x8x8xf32>
    %35 = arith.subf %31, %34 : vector<4x8x8xf32>
    %36 = math.exp %35 : vector<4x8x8xf32>
    %cst_15 = arith.constant dense<0.000000e+00> : vector<4x8xf32>
    %37 = vector.multi_reduction <add>, %36, %cst_15 [2] : vector<4x8x8xf32> to vector<4x8xf32>
    %38 = vector.shape_cast %37 : vector<4x8xf32> to vector<4x8x1xf32>
    %39 = vector.broadcast %38 : vector<4x8x1xf32> to vector<4x8x8xf32>
    %40 = arith.divf %36, %39 : vector<4x8x8xf32>
    %41 = arith.truncf %40 : vector<4x8x8xf32> to vector<4x8x8xbf16>
    %42 = arith.truncf %25 : vector<8x4x8xf32> to vector<8x4x8xbf16>
    "tpu.trace_start"() <{level = 10 : i32, message = "hqk,khd->qhd"}> : () -> ()
    %cst_16 = arith.constant dense<0.000000e+00> : vector<4x8x8xf32>
    %43 = tpu.matmul %42, %41, %cst_16 {dimension_numbers = #tpu.dot_dimension_numbers<[0], [2], [2], [1], [0, 1, 0, 2, 1, 1], [1], [0]>} : vector<8x4x8xbf16>, vector<4x8x8xbf16>, vector<4x8x8xf32> -> vector<4x8x8xf32>
    %44 = tpu.transpose %43, [2, 0, 1] : vector<4x8x8xf32> -> vector<8x4x8xf32>
    "tpu.trace_stop"() : () -> ()
    %45 = vector.shape_cast %44 : vector<8x4x8xf32> to vector<8x32xf32>
    %46 = arith.truncf %45 : vector<8x32xf32> to vector<8x32xbf16>
    %c0_17 = arith.constant 0 : index
    %c0_18 = arith.constant 0 : index
    %47 = vector.load %arg5[%c0_17, %c0_18] : memref<32x32xbf16, #tpu.memory_space<vmem>>, vector<32x32xbf16>
    %cst_19 = arith.constant dense<0.000000e+00> : vector<8x32xf32>
    %48 = tpu.matmul %46, %47, %cst_19 {dimension_numbers = #tpu.dot_dimension_numbers<[1], [0], [0], [1], [0, 0, 1, 1], [], []>} : vector<8x32xbf16>, vector<32x32xbf16>, vector<8x32xf32> -> vector<8x32xf32>
    %c0_20 = arith.constant 0 : index
    %c0_21 = arith.constant 0 : index
    %49 = vector.load %arg6[%c0_20, %c0_21] : memref<1x32xf32, #tpu.memory_space<vmem>>, vector<1x32xf32>
    %50 = vector.broadcast %49 : vector<1x32xf32> to vector<8x32xf32>
    %51 = arith.addf %48, %50 : vector<8x32xf32>
    %52 = arith.addf %1, %51 : vector<8x32xf32>
    %cst_22 = arith.constant dense<0.000000e+00> : vector<8xf32>
    %53 = vector.multi_reduction <add>, %52, %cst_22 [1] : vector<8x32xf32> to vector<8xf32>
    %54 = vector.shape_cast %53 : vector<8xf32> to vector<8x1xf32>
    %cst_23 = arith.constant 3.200000e+01 : f32
    %55 = vector.broadcast %cst_23 : f32 to vector<8x1xf32>
    %56 = arith.divf %54, %55 : vector<8x1xf32>
    %57 = vector.broadcast %56 : vector<8x1xf32> to vector<8x32xf32>
    %58 = arith.subf %52, %57 : vector<8x32xf32>
    %59 = arith.mulf %58, %58 : vector<8x32xf32>
    %cst_24 = arith.constant dense<0.000000e+00> : vector<8xf32>
    %60 = vector.multi_reduction <add>, %59, %cst_24 [1] : vector<8x32xf32> to vector<8xf32>
    %61 = vector.shape_cast %60 : vector<8xf32> to vector<8x1xf32>
    %cst_25 = arith.constant 3.200000e+01 : f32
    %62 = vector.broadcast %cst_25 : f32 to vector<8x1xf32>
    %63 = arith.divf %61, %62 : vector<8x1xf32>
    %64 = vector.broadcast %56 : vector<8x1xf32> to vector<8x32xf32>
    %65 = arith.subf %52, %64 : vector<8x32xf32>
    %cst_26 = arith.constant 9.99999996E-13 : f32
    %66 = vector.broadcast %cst_26 : f32 to vector<8x1xf32>
    %67 = arith.addf %63, %66 : vector<8x1xf32>
    %68 = math.rsqrt %67 : vector<8x1xf32>
    %69 = vector.broadcast %68 : vector<8x1xf32> to vector<8x32xf32>
    %70 = arith.mulf %65, %69 : vector<8x32xf32>
    %c0_27 = arith.constant 0 : index
    %c0_28 = arith.constant 0 : index
    %71 = vector.load %arg7[%c0_27, %c0_28] : memref<1x32xf32, #tpu.memory_space<vmem>>, vector<1x32xf32>
    %72 = vector.broadcast %71 : vector<1x32xf32> to vector<8x32xf32>
    %73 = arith.mulf %70, %72 : vector<8x32xf32>
    %c0_29 = arith.constant 0 : index
    %c0_30 = arith.constant 0 : index
    %74 = vector.load %arg8[%c0_29, %c0_30] : memref<1x32xf32, #tpu.memory_space<vmem>>, vector<1x32xf32>
    %75 = vector.broadcast %74 : vector<1x32xf32> to vector<8x32xf32>
    %76 = arith.addf %73, %75 : vector<8x32xf32>
    %77 = arith.truncf %76 : vector<8x32xf32> to vector<8x32xbf16>
    %c0_31 = arith.constant 0 : index
    %c0_32 = arith.constant 0 : index
    %78 = vector.load %arg9[%c0_31, %c0_32] : memref<32x64xbf16, #tpu.memory_space<vmem>>, vector<32x64xbf16>
    %cst_33 = arith.constant dense<0.000000e+00> : vector<8x64xf32>
    %79 = tpu.matmul %77, %78, %cst_33 {dimension_numbers = #tpu.dot_dimension_numbers<[1], [0], [0], [1], [0, 0, 1, 1], [], []>} : vector<8x32xbf16>, vector<32x64xbf16>, vector<8x64xf32> -> vector<8x64xf32>
    %c0_34 = arith.constant 0 : index
    %c0_35 = arith.constant 0 : index
    %80 = vector.load %arg10[%c0_34, %c0_35] : memref<1x64xf32, #tpu.memory_space<vmem>>, vector<1x64xf32>
    %81 = vector.broadcast %80 : vector<1x64xf32> to vector<8x64xf32>
    %82 = arith.addf %79, %81 : vector<8x64xf32>
    %83 = arith.mulf %82, %82 : vector<8x64xf32>
    %84 = arith.mulf %82, %83 : vector<8x64xf32>
    %cst_36 = arith.constant 4.471500e-02 : f32
    %85 = vector.broadcast %cst_36 : f32 to vector<8x64xf32>
    %86 = arith.mulf %85, %84 : vector<8x64xf32>
    %87 = arith.addf %82, %86 : vector<8x64xf32>
    %cst_37 = arith.constant 0.797884583 : f32
    %88 = vector.broadcast %cst_37 : f32 to vector<8x64xf32>
    %89 = arith.mulf %88, %87 : vector<8x64xf32>
    %90 = math.tanh %89 : vector<8x64xf32>
    %cst_38 = arith.constant 1.000000e+00 : f32
    %91 = vector.broadcast %cst_38 : f32 to vector<8x64xf32>
    %92 = arith.addf %91, %90 : vector<8x64xf32>
    %cst_39 = arith.constant 5.000000e-01 : f32
    %93 = vector.broadcast %cst_39 : f32 to vector<8x64xf32>
    %94 = arith.mulf %93, %92 : vector<8x64xf32>
    %95 = arith.mulf %82, %94 : vector<8x64xf32>
    %96 = arith.truncf %95 : vector<8x64xf32> to vector<8x64xbf16>
    %c0_40 = arith.constant 0 : index
    %c0_41 = arith.constant 0 : index
    %97 = vector.load %arg11[%c0_40, %c0_41] : memref<64x32xbf16, #tpu.memory_space<vmem>>, vector<64x32xbf16>
    %cst_42 = arith.constant dense<0.000000e+00> : vector<8x32xf32>
    %98 = tpu.matmul %96, %97, %cst_42 {dimension_numbers = #tpu.dot_dimension_numbers<[1], [0], [0], [1], [0, 0, 1, 1], [], []>} : vector<8x64xbf16>, vector<64x32xbf16>, vector<8x32xf32> -> vector<8x32xf32>
    %c0_43 = arith.constant 0 : index
    %c0_44 = arith.constant 0 : index
    %99 = vector.load %arg12[%c0_43, %c0_44] : memref<1x32xf32, #tpu.memory_space<vmem>>, vector<1x32xf32>
    %100 = vector.broadcast %99 : vector<1x32xf32> to vector<8x32xf32>
    %101 = arith.addf %98, %100 : vector<8x32xf32>
    %102 = arith.addf %76, %101 : vector<8x32xf32>
    %cst_45 = arith.constant dense<0.000000e+00> : vector<8xf32>
    %103 = vector.multi_reduction <add>, %102, %cst_45 [1] : vector<8x32xf32> to vector<8xf32>
    %104 = vector.shape_cast %103 : vector<8xf32> to vector<8x1xf32>
    %cst_46 = arith.constant 3.200000e+01 : f32
    %105 = vector.broadcast %cst_46 : f32 to vector<8x1xf32>
    %106 = arith.divf %104, %105 : vector<8x1xf32>
    %107 = vector.broadcast %106 : vector<8x1xf32> to vector<8x32xf32>
    %108 = arith.subf %102, %107 : vector<8x32xf32>
    %109 = arith.mulf %108, %108 : vector<8x32xf32>
    %cst_47 = arith.constant dense<0.000000e+00> : vector<8xf32>
    %110 = vector.multi_reduction <add>, %109, %cst_47 [1] : vector<8x32xf32> to vector<8xf32>
    %111 = vector.shape_cast %110 : vector<8xf32> to vector<8x1xf32>
    %cst_48 = arith.constant 3.200000e+01 : f32
    %112 = vector.broadcast %cst_48 : f32 to vector<8x1xf32>
    %113 = arith.divf %111, %112 : vector<8x1xf32>
    %114 = vector.broadcast %106 : vector<8x1xf32> to vector<8x32xf32>
    %115 = arith.subf %102, %114 : vector<8x32xf32>
    %cst_49 = arith.constant 9.99999996E-13 : f32
    %116 = vector.broadcast %cst_49 : f32 to vector<8x1xf32>
    %117 = arith.addf %113, %116 : vector<8x1xf32>
    %118 = math.rsqrt %117 : vector<8x1xf32>
    %119 = vector.broadcast %118 : vector<8x1xf32> to vector<8x32xf32>
    %120 = arith.mulf %115, %119 : vector<8x32xf32>
    %c0_50 = arith.constant 0 : index
    %c0_51 = arith.constant 0 : index
    %121 = vector.load %arg13[%c0_50, %c0_51] : memref<1x32xf32, #tpu.memory_space<vmem>>, vector<1x32xf32>
    %122 = vector.broadcast %121 : vector<1x32xf32> to vector<8x32xf32>
    %123 = arith.mulf %120, %122 : vector<8x32xf32>
    %c0_52 = arith.constant 0 : index
    %c0_53 = arith.constant 0 : index
    %124 = vector.load %arg14[%c0_52, %c0_53] : memref<1x32xf32, #tpu.memory_space<vmem>>, vector<1x32xf32>
    %125 = vector.broadcast %124 : vector<1x32xf32> to vector<8x32xf32>
    %126 = arith.addf %123, %125 : vector<8x32xf32>
    %127 = vector.extract_strided_slice %126 {offsets = [0, 0], sizes = [1, 32], strides = [1, 1]} : vector<8x32xf32> to vector<1x32xf32>
    %128 = arith.truncf %127 : vector<1x32xf32> to vector<1x32xbf16>
    %c0_54 = arith.constant 0 : index
    %c0_55 = arith.constant 0 : index
    %129 = vector.load %arg15[%c0_54, %c0_55] : memref<32x32xbf16, #tpu.memory_space<vmem>>, vector<32x32xbf16>
    %cst_56 = arith.constant dense<0.000000e+00> : vector<1x32xf32>
    %130 = tpu.matmul %128, %129, %cst_56 {dimension_numbers = #tpu.dot_dimension_numbers<[1], [0], [0], [1], [0, 0, 1, 1], [], []>} : vector<1x32xbf16>, vector<32x32xbf16>, vector<1x32xf32> -> vector<1x32xf32>
    %c0_57 = arith.constant 0 : index
    %c0_58 = arith.constant 0 : index
    %131 = vector.load %arg16[%c0_57, %c0_58] : memref<1x32xf32, #tpu.memory_space<vmem>>, vector<1x32xf32>
    %132 = arith.addf %130, %131 : vector<1x32xf32>
    %133 = math.tanh %132 : vector<1x32xf32>
    %c0_59 = arith.constant 0 : index
    %c0_60 = arith.constant 0 : index
    %c0_61 = arith.constant 0 : index
    %134 = vector.load %arg19[%c0_59, %c0_60, %c0_61] : memref<1x1x32xf32, #tpu.memory_space<vmem>>, vector<1x1x32xf32>
    %135 = vector.shape_cast %134 : vector<1x1x32xf32> to vector<1x32xf32>
    %136 = arith.mulf %133, %135 : vector<1x32xf32>
    %137 = arith.truncf %136 : vector<1x32xf32> to vector<1x32xbf16>
    %c0_62 = arith.constant 0 : index
    %c0_63 = arith.constant 0 : index
    %138 = vector.load %arg17[%c0_62, %c0_63] : memref<32x128xbf16, #tpu.memory_space<vmem>>, vector<32x128xbf16>
    %cst_64 = arith.constant dense<0.000000e+00> : vector<1x128xf32>
    %139 = tpu.matmul %137, %138, %cst_64 {dimension_numbers = #tpu.dot_dimension_numbers<[1], [0], [0], [1], [0, 0, 1, 1], [], []>} : vector<1x32xbf16>, vector<32x128xbf16>, vector<1x128xf32> -> vector<1x128xf32>
    %c0_65 = arith.constant 0 : index
    %c0_66 = arith.constant 0 : index
    %140 = vector.load %arg18[%c0_65, %c0_66] : memref<1x128xf32, #tpu.memory_space<vmem>>, vector<1x128xf32>
    %141 = arith.addf %139, %140 : vector<1x128xf32>
    %c0_67 = arith.constant 0 : index
    %c0_68 = arith.constant 0 : index
    %c0_69 = arith.constant 0 : index
    %142 = vector.load %arg20[%c0_67, %c0_68, %c0_69] : memref<1x1x128xf32, #tpu.memory_space<vmem>>, vector<1x1x128xf32>
    %143 = vector.shape_cast %142 : vector<1x1x128xf32> to vector<1x128xf32>
    %144 = vector.shape_cast %141 : vector<1x128xf32> to vector<1x1x128xf32>
    tpu.vector_store %arg20[%c0_67, %c0_68, %c0_69], %144 {strides = array<i32>} : memref<1x1x128xf32, #tpu.memory_space<vmem>>, vector<1x1x128xf32>,
    return
  }
  func.func @transform_0(%arg0: i32) -> (i32, i32, i32) {
    %c0_i32 = arith.constant 0 : i32
    %c0_i32_0 = arith.constant 0 : i32
    %c0_i32_1 = arith.constant 0 : i32
    return %arg0, %c0_i32, %c0_i32_0 : i32, i32, i32
  }
  func.func @transform_1(%arg0: i32) -> (i32, i32, i32) {
    %c0_i32 = arith.constant 0 : i32
    %c0_i32_0 = arith.constant 0 : i32
    %c0_i32_1 = arith.constant 0 : i32
    return %arg0, %c0_i32, %c0_i32_0 : i32, i32, i32
  }
  func.func @transform_2(%arg0: i32) -> (i32, i32) {
    %c0_i32 = arith.constant 0 : i32
    %c0_i32_0 = arith.constant 0 : i32
    %c0_i32_1 = arith.constant 0 : i32
    return %c0_i32, %c0_i32_0 : i32, i32
  }
  func.func @transform_3(%arg0: i32) -> (i32, i32) {
    %c0_i32 = arith.constant 0 : i32
    %c0_i32_0 = arith.constant 0 : i32
    %c0_i32_1 = arith.constant 0 : i32
    return %c0_i32, %c0_i32_0 : i32, i32
  }
  func.func @transform_4(%arg0: i32) -> (i32, i32) {
    %c0_i32 = arith.constant 0 : i32
    %c0_i32_0 = arith.constant 0 : i32
    %c0_i32_1 = arith.constant 0 : i32
    return %c0_i32, %c0_i32_0 : i32, i32
  }
  func.func @transform_5(%arg0: i32) -> (i32, i32) {
    %c0_i32 = arith.constant 0 : i32
    %c0_i32_0 = arith.constant 0 : i32
    %c0_i32_1 = arith.constant 0 : i32
    return %c0_i32, %c0_i32_0 : i32, i32
  }
  func.func @transform_6(%arg0: i32) -> (i32, i32) {
    %c0_i32 = arith.constant 0 : i32
    %c0_i32_0 = arith.constant 0 : i32
    %c0_i32_1 = arith.constant 0 : i32
    return %c0_i32, %c0_i32_0 : i32, i32
  }
  func.func @transform_7(%arg0: i32) -> (i32, i32) {
    %c0_i32 = arith.constant 0 : i32
    %c0_i32_0 = arith.constant 0 : i32
    %c0_i32_1 = arith.constant 0 : i32
    return %c0_i32, %c0_i32_0 : i32, i32
  }
  func.func @transform_8(%arg0: i32) -> (i32, i32) {
    %c0_i32 = arith.constant 0 : i32
    %c0_i32_0 = arith.constant 0 : i32
    %c0_i32_1 = arith.constant 0 : i32
    return %c0_i32, %c0_i32_0 : i32, i32
  }
  func.func @transform_9(%arg0: i32) -> (i32, i32) {
    %c0_i32 = arith.constant 0 : i32
    %c0_i32_0 = arith.constant 0 : i32
    %c0_i32_1 = arith.constant 0 : i32
    return %c0_i32, %c0_i32_0 : i32, i32
  }
  func.func @transform_10(%arg0: i32) -> (i32, i32) {
    %c0_i32 = arith.constant 0 : i32
    %c0_i32_0 = arith.constant 0 : i32
    %c0_i32_1 = arith.constant 0 : i32
    return %c0_i32, %c0_i32_0 : i32, i32
  }
  func.func @transform_11(%arg0: i32) -> (i32, i32) {
    %c0_i32 = arith.constant 0 : i32
    %c0_i32_0 = arith.constant 0 : i32
    %c0_i32_1 = arith.constant 0 : i32
    return %c0_i32, %c0_i32_0 : i32, i32
  }
  func.func @transform_12(%arg0: i32) -> (i32, i32) {
    %c0_i32 = arith.constant 0 : i32
    %c0_i32_0 = arith.constant 0 : i32
    %c0_i32_1 = arith.constant 0 : i32
    return %c0_i32, %c0_i32_0 : i32, i32
  }
  func.func @transform_13(%arg0: i32) -> (i32, i32) {
    %c0_i32 = arith.constant 0 : i32
    %c0_i32_0 = arith.constant 0 : i32
    %c0_i32_1 = arith.constant 0 : i32
    return %c0_i32, %c0_i32_0 : i32, i32
  }
  func.func @transform_14(%arg0: i32) -> (i32, i32) {
    %c0_i32 = arith.constant 0 : i32
    %c0_i32_0 = arith.constant 0 : i32
    %c0_i32_1 = arith.constant 0 : i32
    return %c0_i32, %c0_i32_0 : i32, i32
  }
  func.func @transform_15(%arg0: i32) -> (i32, i32) {
    %c0_i32 = arith.constant 0 : i32
    %c0_i32_0 = arith.constant 0 : i32
    %c0_i32_1 = arith.constant 0 : i32
    return %c0_i32, %c0_i32_0 : i32, i32
  }
  func.func @transform_16(%arg0: i32) -> (i32, i32) {
    %c0_i32 = arith.constant 0 : i32
    %c0_i32_0 = arith.constant 0 : i32
    %c0_i32_1 = arith.constant 0 : i32
    return %c0_i32, %c0_i32_0 : i32, i32
  }
  func.func @transform_17(%arg0: i32) -> (i32, i32) {
    %c0_i32 = arith.constant 0 : i32
    %c0_i32_0 = arith.constant 0 : i32
    %c0_i32_1 = arith.constant 0 : i32
    return %c0_i32, %c0_i32_0 : i32, i32
  }
  func.func @transform_18(%arg0: i32) -> (i32, i32, i32) {
    %c0_i32 = arith.constant 0 : i32
    %c0_i32_0 = arith.constant 0 : i32
    %c0_i32_1 = arith.constant 0 : i32
    return %arg0, %c0_i32, %c0_i32_0 : i32, i32, i32
  }
  func.func @transform_19(%arg0: i32) -> (i32, i32, i32) {
    %c0_i32 = arith.constant 0 : i32
    %c0_i32_0 = arith.constant 0 : i32
    %c0_i32_1 = arith.constant 0 : i32
    return %arg0, %c0_i32, %c0_i32_0 : i32, i32, i32
  }
}

</mosaic_0001>

<llo_original>
// kernel: tpu_custom_call.1
$region0: #{tpu_custom_call.1}
  #allocation0 [shape = 'u32[]', space=smem, size = 0x4, offset = 0x4, fixed_abs, tag = 'smem constant byte address 0x4 - core index']
  #allocation1 [shape = 'u32[144,128]{1,0:T(1,128)}', space=vmem, size = 0x12000, scoped, tag = 'internal scratch']
  %s0 = inlined_call_operand.vmem [shape: s32[2,1,1], index: 0, kind: input, shape index: {}]
  %s1 = inlined_call_operand.vmem [shape: f32[2,8,32], index: 1, kind: input, shape index: {}]
  %s2 = inlined_call_operand.vmem [shape: bf16[32,96], index: 2, kind: input, shape index: {}]
  %s3 = inlined_call_operand.hbm [shape: f32[1,96], index: 3, kind: input, shape index: {}]
  %s4 = inlined_call_operand.vmem [shape: bf16[32,32], index: 4, kind: input, shape index: {}]
  %s5 = inlined_call_operand.hbm [shape: f32[1,32], index: 5, kind: input, shape index: {}]
  %s6 = inlined_call_operand.hbm [shape: f32[1,32], index: 6, kind: input, shape index: {}]
  %s7 = inlined_call_operand.hbm [shape: f32[1,32], index: 7, kind: input, shape index: {}]
  %s8 = inlined_call_operand.vmem [shape: bf16[32,64], index: 8, kind: input, shape index: {}]
  %s9 = inlined_call_operand.hbm [shape: f32[1,64], index: 9, kind: input, shape index: {}]
  %s10 = inlined_call_operand.vmem [shape: bf16[64,32], index: 10, kind: input, shape index: {}]
  %s11 = inlined_call_operand.hbm [shape: f32[1,32], index: 11, kind: input, shape index: {}]
  %s12 = inlined_call_operand.hbm [shape: f32[1,32], index: 12, kind: input, shape index: {}]
  %s13 = inlined_call_operand.hbm [shape: f32[1,32], index: 13, kind: input, shape index: {}]
  %s14 = inlined_call_operand.vmem [shape: bf16[32,32], index: 14, kind: input, shape index: {}]
  %s15 = inlined_call_operand.hbm [shape: f32[1,32], index: 15, kind: input, shape index: {}]
  %s16 = inlined_call_operand.vmem [shape: bf16[32,128], index: 16, kind: input, shape index: {}]
  %s17 = inlined_call_operand.vmem [shape: f32[1,128], index: 17, kind: input, shape index: {}]
  %s18 = inlined_call_operand.vmem [shape: f32[2,1,32], index: 18, kind: input, shape index: {}]
  %s19 = inlined_call_operand.hbm [shape: f32[2,1,128], index: 19, kind: output, shape index: {}]
  %s20 = sld [smem:[#allocation0]]
  $region145: #{tpu_custom_call.1} parent=0
    _
  %s22 = ssub.s32 1, %s20
  %s23 = scalar_select 0, %s22, %s20
  $region1: #{tpu_custom_call.1} parent=0
    #allocation2 [shape = 'u8[512]{0}', space=vmem, size = 0x400, scoped, tag = 'input window, operand 3, single buffered']
    #allocation3 [shape = 's32[2]{0}', space=sflag, size = 0x8, scoped, tag = 'scoped memory for tpu_custom_call.1']
    #allocation4 [shape = 's32[2]{0}', space=sflag, size = 0x8, scoped, tag = 'scoped memory for tpu_custom_call.1']
    #allocation5 [shape = 'u8[512]{0}', space=vmem, size = 0x400, scoped, tag = 'input window, operand 5, single buffered']
    #allocation6 [shape = 's32[1]{0}', space=sflag, size = 0x4, scoped, tag = 'scoped memory for tpu_custom_call.1']
    #allocation7 [shape = 'u8[512]{0}', space=vmem, size = 0x400, scoped, tag = 'input window, operand 6, single buffered']
    #allocation8 [shape = 'u8[512]{0}', space=vmem, size = 0x400, scoped, tag = 'input window, operand 7, single buffered']
    #allocation9 [shape = 's32[1]{0}', space=sflag, size = 0x4, scoped, tag = 'scoped memory for tpu_custom_call.1']
    #allocation10 [shape = 'u8[512]{0}', space=vmem, size = 0x400, scoped, tag = 'input window, operand 9, single buffered']
    #allocation11 [shape = 'u8[512]{0}', space=vmem, size = 0x400, scoped, tag = 'input window, operand 11, single buffered']
    #allocation12 [shape = 's32[1]{0}', space=sflag, size = 0x4, scoped, tag = 'scoped memory for tpu_custom_call.1']
    #allocation13 [shape = 'u8[512]{0}', space=vmem, size = 0x400, scoped, tag = 'input window, operand 12, single buffered']
    #allocation14 [shape = 'u8[512]{0}', space=vmem, size = 0x400, scoped, tag = 'input window, operand 13, single buffered']
    #allocation15 [shape = 's32[1]{0}', space=sflag, size = 0x4, scoped, tag = 'scoped memory for tpu_custom_call.1']
    #allocation16 [shape = 'u8[512]{0}', space=vmem, size = 0x400, scoped, tag = 'input window, operand 15, single buffered']
    #allocation17 [shape = 'u8[1024]{0}', space=vmem, size = 0x400, scoped, tag = 'output window, operand 0']
    %24 = vsyncpa [#allocation3], 0
    %25 = vsyncpa [#allocation6], 0
    %26 = vsyncpa [#allocation9], 0
    %27 = vsyncpa [#allocation12], 0
    %28 = vsyncpa [#allocation15], 0
    %29 = vsyncpa [#allocation4], 0
    %s30 = scalar_lea.sflag [#allocation4], 1
    %31 = vsyncpa %s30, 0
    loop: start=0, step=1, limit=4
    $region2: #{tpu_custom_call.1} parent=1 // loop_pre_header
      _
    $region3: #{tpu_custom_call.1} parent=1 // loop_header
      %s33 = sphi 0, %s37
      %p34 = scmp.ge.s32.totalorder %s33, 4
      %s43 = sphi 0, %s45
      %s46 = sphi 0, %s43
      %s47 = sphi 0, %s46
      %s63 = sphi 0, %s47
      %s69 = sphi 0, %s71
      %s72 = sphi 0, %s69
      %s73 = sphi 0, %s72
      %s89 = sphi 0, %s73
      %s93 = sphi 0, %s93
      %s95 = sphi 0, %s93
      %s96 = sphi 0, %s95
      %s110 = sphi 0, %s96
      %s114 = sphi 0, %s114
      %s116 = sphi 0, %s114
      %s117 = sphi 0, %s116
      %s131 = sphi 0, %s117
      %s135 = sphi 0, %s135
      %s137 = sphi 0, %s135
      %s138 = sphi 0, %s137
      %s152 = sphi 0, %s138
      %s156 = sphi 0, %s156
      %s158 = sphi 0, %s156
      %s159 = sphi 0, %s158
      %s173 = sphi 0, %s159
      %s177 = sphi 0, %s177
      %s179 = sphi 0, %s177
      %s180 = sphi 0, %s179
      %s194 = sphi 0, %s180
      %s198 = sphi 0, %s198
      %s200 = sphi 0, %s198
      %s201 = sphi 0, %s200
      %s215 = sphi 0, %s201
      %s219 = sphi 0, %s219
      %s221 = sphi 0, %s219
      %s222 = sphi 0, %s221
      %s236 = sphi 0, %s222
      %s240 = sphi 0, %s240
      %s242 = sphi 0, %s240
      %s243 = sphi 0, %s242
      %s257 = sphi 0, %s243
      %s261 = sphi 0, %s261
      %s263 = sphi 0, %s261
      %s264 = sphi 0, %s263
      %s278 = sphi 0, %s264
      %s282 = sphi 0, %s282
      %s284 = sphi 0, %s282
      %s285 = sphi 0, %s284
      %s299 = sphi 0, %s285
      %s303 = sphi 0, %s303
      %s305 = sphi 0, %s303
      %s306 = sphi 0, %s305
      %s320 = sphi 0, %s306
      %s324 = sphi 0, %s324
      %s326 = sphi 0, %s324
      %s327 = sphi 0, %s326
      %s341 = sphi 0, %s327
      %s345 = sphi 0, %s345
      %s347 = sphi 0, %s345
      %s348 = sphi 0, %s347
      %s362 = sphi 0, %s348
      %s366 = sphi 0, %s366
      %s368 = sphi 0, %s366
      %s369 = sphi 0, %s368
      %s383 = sphi 0, %s369
      %s387 = sphi 0, %s387
      %s389 = sphi 0, %s387
      %s390 = sphi 0, %s389
      %s404 = sphi 0, %s390
      %s408 = sphi 0, %s408
      %s410 = sphi 0, %s408
      %s411 = sphi 0, %s410
      %s425 = sphi 0, %s411
      %s431 = sphi 0, %s433
      %s434 = sphi 0, %s431
      %s435 = sphi 0, %s434
      %s451 = sphi 0, %s435
      %s457 = sphi 0, %s459
      %s460 = sphi 0, %s457
      %s461 = sphi 0, %s460
      %s477 = sphi 0, %s461
    $region4: #{tpu_custom_call.1} parent=1 // loop_header_branch
      %36 = sbr.rel (%p34) target = $region8
    $region5: #{tpu_custom_call.1} parent=1 // loop_body
      %s38 = ssub.s32 %s33, 1
      %s39 = ssub.s32 %s33, 2
      %s40 = sadd.s32 %s33, 1
      %s41 = ssub.s32 %s33, %s40
      %p42 = scmp.eq.s32.totalorder %s41, 0
      %s44 = sadd.s32 %s43, 1
      %s45 = scalar_select %p42, %s43, %s44
      %p48 = pneg %p42
      %p49 = scmp.eq.s32.totalorder %s33, 1
      %p50 = por %p48, %p49
      %p51 = scmp.ne.s32.totalorder %s43, %s46
      %p52 = scmp.eq.s32.totalorder %s33, 0
      %p53 = por %p51, %p52
      %p54 = scmp.ne.s32.totalorder %s43, %s46
      %p55 = scmp.eq.s32.totalorder %s38, 1
      %p56 = por %p54, %p55
      %p57 = scmp.ne.s32.totalorder %s46, %s47
      %p58 = scmp.eq.s32.totalorder %s38, 0
      %p59 = por %p57, %p58
      %p60 = scmp.ne.s32.totalorder %s46, %s47
      %p61 = scmp.eq.s32.totalorder %s39, 1
      %p62 = por %p60, %p61
      %p64 = scmp.ne.s32.totalorder %s47, %s63
      %p65 = scmp.eq.s32.totalorder %s39, 0
      %p66 = por %p64, %p65
      %s67 = ssub.s32 %s33, %s40
      %p68 = scmp.eq.s32.totalorder %s67, 0
      %s70 = sadd.s32 %s69, 1
      %s71 = scalar_select %p68, %s69, %s70
      %p74 = pneg %p68
      %p75 = scmp.eq.s32.totalorder %s33, 1
      %p76 = por %p74, %p75
      %p77 = scmp.ne.s32.totalorder %s69, %s72
      %p78 = scmp.eq.s32.totalorder %s33, 0
      %p79 = por %p77, %p78
      %p80 = scmp.ne.s32.totalorder %s69, %s72
      %p81 = scmp.eq.s32.totalorder %s38, 1
      %p82 = por %p80, %p81
      %p83 = scmp.ne.s32.totalorder %s72, %s73
      %p84 = scmp.eq.s32.totalorder %s38, 0
      %p85 = por %p83, %p84
      %p86 = scmp.ne.s32.totalorder %s72, %s73
      %p87 = scmp.eq.s32.totalorder %s39, 1
      %p88 = por %p86, %p87
      %p90 = scmp.ne.s32.totalorder %s73, %s89
      %p91 = scmp.eq.s32.totalorder %s39, 0
      %p92 = por %p90, %p91
      %s94 = sadd.s32 %s93, 1
      %p97 = scmp.eq.s32.totalorder %s33, 1
      %p98 = scmp.ne.s32.totalorder %s93, %s95
      %p99 = scmp.eq.s32.totalorder %s33, 0
      %p100 = por %p98, %p99
      %p101 = scmp.ne.s32.totalorder %s93, %s95
      %p102 = scmp.eq.s32.totalorder %s38, 1
      %p103 = por %p101, %p102
      %p104 = scmp.ne.s32.totalorder %s95, %s96
      %p105 = scmp.eq.s32.totalorder %s38, 0
      %p106 = por %p104, %p105
      %p107 = scmp.ne.s32.totalorder %s95, %s96
      %p108 = scmp.eq.s32.totalorder %s39, 1
      %p109 = por %p107, %p108
      %p111 = scmp.ne.s32.totalorder %s96, %s110
      %p112 = scmp.eq.s32.totalorder %s39, 0
      %p113 = por %p111, %p112
      %s115 = sadd.s32 %s114, 1
      %p118 = scmp.eq.s32.totalorder %s33, 1
      %p119 = scmp.ne.s32.totalorder %s114, %s116
      %p120 = scmp.eq.s32.totalorder %s33, 0
      %p121 = por %p119, %p120
      %p122 = scmp.ne.s32.totalorder %s114, %s116
      %p123 = scmp.eq.s32.totalorder %s38, 1
      %p124 = por %p122, %p123
      %p125 = scmp.ne.s32.totalorder %s116, %s117
      %p126 = scmp.eq.s32.totalorder %s38, 0
      %p127 = por %p125, %p126
      %p128 = scmp.ne.s32.totalorder %s116, %s117
      %p129 = scmp.eq.s32.totalorder %s39, 1
      %p130 = por %p128, %p129
      %p132 = scmp.ne.s32.totalorder %s117, %s131
      %p133 = scmp.eq.s32.totalorder %s39, 0
      %p134 = por %p132, %p133
      %s136 = sadd.s32 %s135, 1
      %p139 = scmp.eq.s32.totalorder %s33, 1
      %p140 = scmp.ne.s32.totalorder %s135, %s137
      %p141 = scmp.eq.s32.totalorder %s33, 0
      %p142 = por %p140, %p141
      %p143 = scmp.ne.s32.totalorder %s135, %s137
      %p144 = scmp.eq.s32.totalorder %s38, 1
      %p145 = por %p143, %p144
      %p146 = scmp.ne.s32.totalorder %s137, %s138
      %p147 = scmp.eq.s32.totalorder %s38, 0
      %p148 = por %p146, %p147
      %p149 = scmp.ne.s32.totalorder %s137, %s138
      %p150 = scmp.eq.s32.totalorder %s39, 1
      %p151 = por %p149, %p150
      %p153 = scmp.ne.s32.totalorder %s138, %s152
      %p154 = scmp.eq.s32.totalorder %s39, 0
      %p155 = por %p153, %p154
      %s157 = sadd.s32 %s156, 1
      %p160 = scmp.eq.s32.totalorder %s33, 1
      %p161 = scmp.ne.s32.totalorder %s156, %s158
      %p162 = scmp.eq.s32.totalorder %s33, 0
      %p163 = por %p161, %p162
      %p164 = scmp.ne.s32.totalorder %s156, %s158
      %p165 = scmp.eq.s32.totalorder %s38, 1
      %p166 = por %p164, %p165
      %p167 = scmp.ne.s32.totalorder %s158, %s159
      %p168 = scmp.eq.s32.totalorder %s38, 0
      %p169 = por %p167, %p168
      %p170 = scmp.ne.s32.totalorder %s158, %s159
      %p171 = scmp.eq.s32.totalorder %s39, 1
      %p172 = por %p170, %p171
      %p174 = scmp.ne.s32.totalorder %s159, %s173
      %p175 = scmp.eq.s32.totalorder %s39, 0
      %p176 = por %p174, %p175
      %s178 = sadd.s32 %s177, 1
      %p181 = scmp.eq.s32.totalorder %s33, 1
      %p182 = scmp.ne.s32.totalorder %s177, %s179
      %p183 = scmp.eq.s32.totalorder %s33, 0
      %p184 = por %p182, %p183
      %p185 = scmp.ne.s32.totalorder %s177, %s179
      %p186 = scmp.eq.s32.totalorder %s38, 1
      %p187 = por %p185, %p186
      %p188 = scmp.ne.s32.totalorder %s179, %s180
      %p189 = scmp.eq.s32.totalorder %s38, 0
      %p190 = por %p188, %p189
      %p191 = scmp.ne.s32.totalorder %s179, %s180
      %p192 = scmp.eq.s32.totalorder %s39, 1
      %p193 = por %p191, %p192
      %p195 = scmp.ne.s32.totalorder %s180, %s194
      %p196 = scmp.eq.s32.totalorder %s39, 0
      %p197 = por %p195, %p196
      %s199 = sadd.s32 %s198, 1
      %p202 = scmp.eq.s32.totalorder %s33, 1
      %p203 = scmp.ne.s32.totalorder %s198, %s200
      %p204 = scmp.eq.s32.totalorder %s33, 0
      %p205 = por %p203, %p204
      %p206 = scmp.ne.s32.totalorder %s198, %s200
      %p207 = scmp.eq.s32.totalorder %s38, 1
      %p208 = por %p206, %p207
      %p209 = scmp.ne.s32.totalorder %s200, %s201
      %p210 = scmp.eq.s32.totalorder %s38, 0
      %p211 = por %p209, %p210
      %p212 = scmp.ne.s32.totalorder %s200, %s201
      %p213 = scmp.eq.s32.totalorder %s39, 1
      %p214 = por %p212, %p213
      %p216 = scmp.ne.s32.totalorder %s201, %s215
      %p217 = scmp.eq.s32.totalorder %s39, 0
      %p218 = por %p216, %p217
      %s220 = sadd.s32 %s219, 1
      %p223 = scmp.eq.s32.totalorder %s33, 1
      %p224 = scmp.ne.s32.totalorder %s219, %s221
      %p225 = scmp.eq.s32.totalorder %s33, 0
      %p226 = por %p224, %p225
      %p227 = scmp.ne.s32.totalorder %s219, %s221
      %p228 = scmp.eq.s32.totalorder %s38, 1
      %p229 = por %p227, %p228
      %p230 = scmp.ne.s32.totalorder %s221, %s222
      %p231 = scmp.eq.s32.totalorder %s38, 0
      %p232 = por %p230, %p231
      %p233 = scmp.ne.s32.totalorder %s221, %s222
      %p234 = scmp.eq.s32.totalorder %s39, 1
      %p235 = por %p233, %p234
      %p237 = scmp.ne.s32.totalorder %s222, %s236
      %p238 = scmp.eq.s32.totalorder %s39, 0
      %p239 = por %p237, %p238
      %s241 = sadd.s32 %s240, 1
      %p244 = scmp.eq.s32.totalorder %s33, 1
      %p245 = scmp.ne.s32.totalorder %s240, %s242
      %p246 = scmp.eq.s32.totalorder %s33, 0
      %p247 = por %p245, %p246
      %p248 = scmp.ne.s32.totalorder %s240, %s242
      %p249 = scmp.eq.s32.totalorder %s38, 1
      %p250 = por %p248, %p249
      %p251 = scmp.ne.s32.totalorder %s242, %s243
      %p252 = scmp.eq.s32.totalorder %s38, 0
      %p253 = por %p251, %p252
      %p254 = scmp.ne.s32.totalorder %s242, %s243
      %p255 = scmp.eq.s32.totalorder %s39, 1
      %p256 = por %p254, %p255
      %p258 = scmp.ne.s32.totalorder %s243, %s257
      %p259 = scmp.eq.s32.totalorder %s39, 0
      %p260 = por %p258, %p259
      %s262 = sadd.s32 %s261, 1
      %p265 = scmp.eq.s32.totalorder %s33, 1
      %p266 = scmp.ne.s32.totalorder %s261, %s263
      %p267 = scmp.eq.s32.totalorder %s33, 0
      %p268 = por %p266, %p267
      %p269 = scmp.ne.s32.totalorder %s261, %s263
      %p270 = scmp.eq.s32.totalorder %s38, 1
      %p271 = por %p269, %p270
      %p272 = scmp.ne.s32.totalorder %s263, %s264
      %p273 = scmp.eq.s32.totalorder %s38, 0
      %p274 = por %p272, %p273
      %p275 = scmp.ne.s32.totalorder %s263, %s264
      %p276 = scmp.eq.s32.totalorder %s39, 1
      %p277 = por %p275, %p276
      %p279 = scmp.ne.s32.totalorder %s264, %s278
      %p280 = scmp.eq.s32.totalorder %s39, 0
      %p281 = por %p279, %p280
      %s283 = sadd.s32 %s282, 1
      %p286 = scmp.eq.s32.totalorder %s33, 1
      %p287 = scmp.ne.s32.totalorder %s282, %s284
      %p288 = scmp.eq.s32.totalorder %s33, 0
      %p289 = por %p287, %p288
      %p290 = scmp.ne.s32.totalorder %s282, %s284
      %p291 = scmp.eq.s32.totalorder %s38, 1
      %p292 = por %p290, %p291
      %p293 = scmp.ne.s32.totalorder %s284, %s285
      %p294 = scmp.eq.s32.totalorder %s38, 0
      %p295 = por %p293, %p294
      %p296 = scmp.ne.s32.totalorder %s284, %s285
      %p297 = scmp.eq.s32.totalorder %s39, 1
      %p298 = por %p296, %p297
      %p300 = scmp.ne.s32.totalorder %s285, %s299
      %p301 = scmp.eq.s32.totalorder %s39, 0
      %p302 = por %p300, %p301
      %s304 = sadd.s32 %s303, 1
      %p307 = scmp.eq.s32.totalorder %s33, 1
      %p308 = scmp.ne.s32.totalorder %s303, %s305
      %p309 = scmp.eq.s32.totalorder %s33, 0
      %p310 = por %p308, %p309
      %p311 = scmp.ne.s32.totalorder %s303, %s305
      %p312 = scmp.eq.s32.totalorder %s38, 1
      %p313 = por %p311, %p312
      %p314 = scmp.ne.s32.totalorder %s305, %s306
      %p315 = scmp.eq.s32.totalorder %s38, 0
      %p316 = por %p314, %p315
      %p317 = scmp.ne.s32.totalorder %s305, %s306
      %p318 = scmp.eq.s32.totalorder %s39, 1
      %p319 = por %p317, %p318
      %p321 = scmp.ne.s32.totalorder %s306, %s320
      %p322 = scmp.eq.s32.totalorder %s39, 0
      %p323 = por %p321, %p322
      %s325 = sadd.s32 %s324, 1
      %p328 = scmp.eq.s32.totalorder %s33, 1
      %p329 = scmp.ne.s32.totalorder %s324, %s326
      %p330 = scmp.eq.s32.totalorder %s33, 0
      %p331 = por %p329, %p330
      %p332 = scmp.ne.s32.totalorder %s324, %s326
      %p333 = scmp.eq.s32.totalorder %s38, 1
      %p334 = por %p332, %p333
      %p335 = scmp.ne.s32.totalorder %s326, %s327
      %p336 = scmp.eq.s32.totalorder %s38, 0
      %p337 = por %p335, %p336
      %p338 = scmp.ne.s32.totalorder %s326, %s327
      %p339 = scmp.eq.s32.totalorder %s39, 1
      %p340 = por %p338, %p339
      %p342 = scmp.ne.s32.totalorder %s327, %s341
      %p343 = scmp.eq.s32.totalorder %s39, 0
      %p344 = por %p342, %p343
      %s346 = sadd.s32 %s345, 1
      %p349 = scmp.eq.s32.totalorder %s33, 1
      %p350 = scmp.ne.s32.totalorder %s345, %s347
      %p351 = scmp.eq.s32.totalorder %s33, 0
      %p352 = por %p350, %p351
      %p353 = scmp.ne.s32.totalorder %s345, %s347
      %p354 = scmp.eq.s32.totalorder %s38, 1
      %p355 = por %p353, %p354
      %p356 = scmp.ne.s32.totalorder %s347, %s348
      %p357 = scmp.eq.s32.totalorder %s38, 0
      %p358 = por %p356, %p357
      %p359 = scmp.ne.s32.totalorder %s347, %s348
      %p360 = scmp.eq.s32.totalorder %s39, 1
      %p361 = por %p359, %p360
      %p363 = scmp.ne.s32.totalorder %s348, %s362
      %p364 = scmp.eq.s32.totalorder %s39, 0
      %p365 = por %p363, %p364
      %s367 = sadd.s32 %s366, 1
      %p370 = scmp.eq.s32.totalorder %s33, 1
      %p371 = scmp.ne.s32.totalorder %s366, %s368
      %p372 = scmp.eq.s32.totalorder %s33, 0
      %p373 = por %p371, %p372
      %p374 = scmp.ne.s32.totalorder %s366, %s368
      %p375 = scmp.eq.s32.totalorder %s38, 1
      %p376 = por %p374, %p375
      %p377 = scmp.ne.s32.totalorder %s368, %s369
      %p378 = scmp.eq.s32.totalorder %s38, 0
      %p379 = por %p377, %p378
      %p380 = scmp.ne.s32.totalorder %s368, %s369
      %p381 = scmp.eq.s32.totalorder %s39, 1
      %p382 = por %p380, %p381
      %p384 = scmp.ne.s32.totalorder %s369, %s383
      %p385 = scmp.eq.s32.totalorder %s39, 0
      %p386 = por %p384, %p385
      %s388 = sadd.s32 %s387, 1
      %p391 = scmp.eq.s32.totalorder %s33, 1
      %p392 = scmp.ne.s32.totalorder %s387, %s389
      %p393 = scmp.eq.s32.totalorder %s33, 0
      %p394 = por %p392, %p393
      %p395 = scmp.ne.s32.totalorder %s387, %s389
      %p396 = scmp.eq.s32.totalorder %s38, 1
      %p397 = por %p395, %p396
      %p398 = scmp.ne.s32.totalorder %s389, %s390
      %p399 = scmp.eq.s32.totalorder %s38, 0
      %p400 = por %p398, %p399
      %p401 = scmp.ne.s32.totalorder %s389, %s390
      %p402 = scmp.eq.s32.totalorder %s39, 1
      %p403 = por %p401, %p402
      %p405 = scmp.ne.s32.totalorder %s390, %s404
      %p406 = scmp.eq.s32.totalorder %s39, 0
      %p407 = por %p405, %p406
      %s409 = sadd.s32 %s408, 1
      %p412 = scmp.eq.s32.totalorder %s33, 1
      %p413 = scmp.ne.s32.totalorder %s408, %s410
      %p414 = scmp.eq.s32.totalorder %s33, 0
      %p415 = por %p413, %p414
      %p416 = scmp.ne.s32.totalorder %s408, %s410
      %p417 = scmp.eq.s32.totalorder %s38, 1
      %p418 = por %p416, %p417
      %p419 = scmp.ne.s32.totalorder %s410, %s411
      %p420 = scmp.eq.s32.totalorder %s38, 0
      %p421 = por %p419, %p420
      %p422 = scmp.ne.s32.totalorder %s410, %s411
      %p423 = scmp.eq.s32.totalorder %s39, 1
      %p424 = por %p422, %p423
      %p426 = scmp.ne.s32.totalorder %s411, %s425
      %p427 = scmp.eq.s32.totalorder %s39, 0
      %p428 = por %p426, %p427
      %s429 = ssub.s32 %s33, %s40
      %p430 = scmp.eq.s32.totalorder %s429, 0
      %s432 = sadd.s32 %s431, 1
      %s433 = scalar_select %p430, %s431, %s432
      %p436 = pneg %p430
      %p437 = scmp.eq.s32.totalorder %s33, 1
      %p438 = por %p436, %p437
      %p439 = scmp.ne.s32.totalorder %s431, %s434
      %p440 = scmp.eq.s32.totalorder %s33, 0
      %p441 = por %p439, %p440
      %p442 = scmp.ne.s32.totalorder %s431, %s434
      %p443 = scmp.eq.s32.totalorder %s38, 1
      %p444 = por %p442, %p443
      %p445 = scmp.ne.s32.totalorder %s434, %s435
      %p446 = scmp.eq.s32.totalorder %s38, 0
      %p447 = por %p445, %p446
      %p448 = scmp.ne.s32.totalorder %s434, %s435
      %p449 = scmp.eq.s32.totalorder %s39, 1
      %p450 = por %p448, %p449
      %p452 = scmp.ne.s32.totalorder %s435, %s451
      %p453 = scmp.eq.s32.totalorder %s39, 0
      %p454 = por %p452, %p453
      %s455 = ssub.s32 %s33, %s40
      %p456 = scmp.eq.s32.totalorder %s455, 0
      %s458 = sadd.s32 %s457, 1
      %s459 = scalar_select %p456, %s457, %s458
      %p462 = pneg %p456
      %p463 = scmp.eq.s32.totalorder %s33, 1
      %p464 = por %p462, %p463
      %p465 = scmp.ne.s32.totalorder %s457, %s460
      %p466 = scmp.eq.s32.totalorder %s33, 0
      %p467 = por %p465, %p466
      %p468 = scmp.ne.s32.totalorder %s457, %s460
      %p469 = scmp.eq.s32.totalorder %s38, 1
      %p470 = por %p468, %p469
      %p471 = scmp.ne.s32.totalorder %s460, %s461
      %p472 = scmp.eq.s32.totalorder %s38, 0
      %p473 = por %p471, %p472
      %p474 = scmp.ne.s32.totalorder %s460, %s461
      %p475 = scmp.eq.s32.totalorder %s39, 1
      %p476 = por %p474, %p475
      %p478 = scmp.ne.s32.totalorder %s461, %s477
      %p479 = scmp.eq.s32.totalorder %s39, 0
      %p480 = por %p478, %p479
      %p481 = scmp.le.s32.totalorder 1, %s33
      %p482 = scmp.lt.s32.totalorder %s33, 3
      %p483 = pnand %p481, %p482
      %p484 = pneg %p483
      // Predicated region
      $region9: #{tpu_custom_call.1} parent=5 // pred_check
        _
      $region10: #{tpu_custom_call.1} parent=5 // pred_check_branch
        %486 = sbr.rel (%p483) target = $region12
      $region11: #{tpu_custom_call.1} parent=5 // pred_region
        %s487 = ssub.s32 %s33, 1
        // Predicated region
        $region13: #{tpu_custom_call.1} parent=11 // pred_check
          %p488 = pneg %p106
        $region14: #{tpu_custom_call.1} parent=11 // pred_check_branch
          %490 = sbr.rel (%p488) target = $region16
        $region15: #{tpu_custom_call.1} parent=11 // pred_region
          _
        $region16: #{tpu_custom_call.1} parent=11 // pred_fallthru
          _
        // Predicated region
        $region17: #{tpu_custom_call.1} parent=11 // pred_check
          %p491 = pneg %p127
        $region18: #{tpu_custom_call.1} parent=11 // pred_check_branch
          %493 = sbr.rel (%p491) target = $region20
        $region19: #{tpu_custom_call.1} parent=11 // pred_region
          %s495 = ssub.s32 16, 16
          %496 = vsyncadd [#allocation3], %s495
          %s498 = sshll.u32 [#allocation2], 4
          %s499 = int_to_ptr.vmem [resolvable:$true] %s498
          %501 = dma.hbm_to_vmem [thread:$0]  %s3, 16, %s499, [#allocation3]
        $region20: #{tpu_custom_call.1} parent=11 // pred_fallthru
          _
        // Predicated region
        $region21: #{tpu_custom_call.1} parent=11 // pred_check
          %p502 = pneg %p148
        $region22: #{tpu_custom_call.1} parent=11 // pred_check_branch
          %504 = sbr.rel (%p502) target = $region24
        $region23: #{tpu_custom_call.1} parent=11 // pred_region
          _
        $region24: #{tpu_custom_call.1} parent=11 // pred_fallthru
          _
        // Predicated region
        $region25: #{tpu_custom_call.1} parent=11 // pred_check
          %p505 = pneg %p169
        $region26: #{tpu_custom_call.1} parent=11 // pred_check_branch
          %507 = sbr.rel (%p505) target = $region28
        $region27: #{tpu_custom_call.1} parent=11 // pred_region
          %s509 = ssub.s32 16, 16
          %510 = vsyncadd [#allocation6], %s509
          %s512 = sshll.u32 [#allocation5], 4
          %s513 = int_to_ptr.vmem [resolvable:$true] %s512
          %515 = dma.hbm_to_vmem [thread:$0]  %s5, 16, %s513, [#allocation6]
        $region28: #{tpu_custom_call.1} parent=11 // pred_fallthru
          _
        // Predicated region
        $region29: #{tpu_custom_call.1} parent=11 // pred_check
          %p516 = pneg %p190
        $region30: #{tpu_custom_call.1} parent=11 // pred_check_branch
          %518 = sbr.rel (%p516) target = $region32
        $region31: #{tpu_custom_call.1} parent=11 // pred_region
          %s520 = ssub.s32 16, 16
          %521 = vsyncadd [#allocation6], %s520
          %s523 = sshll.u32 [#allocation7], 4
          %s524 = int_to_ptr.vmem [resolvable:$true] %s523
          %526 = dma.hbm_to_vmem [thread:$0]  %s6, 16, %s524, [#allocation6]
        $region32: #{tpu_custom_call.1} parent=11 // pred_fallthru
          _
        // Predicated region
        $region33: #{tpu_custom_call.1} parent=11 // pred_check
          %p527 = pneg %p211
        $region34: #{tpu_custom_call.1} parent=11 // pred_check_branch
          %529 = sbr.rel (%p527) target = $region36
        $region35: #{tpu_custom_call.1} parent=11 // pred_region
          %s531 = ssub.s32 16, 16
          %532 = vsyncadd [#allocation9], %s531
          %s534 = sshll.u32 [#allocation8], 4
          %s535 = int_to_ptr.vmem [resolvable:$true] %s534
          %537 = dma.hbm_to_vmem [thread:$0]  %s7, 16, %s535, [#allocation9]
        $region36: #{tpu_custom_call.1} parent=11 // pred_fallthru
          _
        // Predicated region
        $region37: #{tpu_custom_call.1} parent=11 // pred_check
          %p538 = pneg %p232
        $region38: #{tpu_custom_call.1} parent=11 // pred_check_branch
          %540 = sbr.rel (%p538) target = $region40
        $region39: #{tpu_custom_call.1} parent=11 // pred_region
          _
        $region40: #{tpu_custom_call.1} parent=11 // pred_fallthru
          _
        // Predicated region
        $region41: #{tpu_custom_call.1} parent=11 // pred_check
          %p541 = pneg %p253
        $region42: #{tpu_custom_call.1} parent=11 // pred_check_branch
          %543 = sbr.rel (%p541) target = $region44
        $region43: #{tpu_custom_call.1} parent=11 // pred_region
          %s545 = ssub.s32 16, 16
          %546 = vsyncadd [#allocation9], %s545
          %s548 = sshll.u32 [#allocation10], 4
          %s549 = int_to_ptr.vmem [resolvable:$true] %s548
          %551 = dma.hbm_to_vmem [thread:$0]  %s9, 16, %s549, [#allocation9]
        $region44: #{tpu_custom_call.1} parent=11 // pred_fallthru
          _
        // Predicated region
        $region45: #{tpu_custom_call.1} parent=11 // pred_check
          %p552 = pneg %p274
        $region46: #{tpu_custom_call.1} parent=11 // pred_check_branch
          %554 = sbr.rel (%p552) target = $region48
        $region47: #{tpu_custom_call.1} parent=11 // pred_region
          _
        $region48: #{tpu_custom_call.1} parent=11 // pred_fallthru
          _
        // Predicated region
        $region49: #{tpu_custom_call.1} parent=11 // pred_check
          %p555 = pneg %p295
        $region50: #{tpu_custom_call.1} parent=11 // pred_check_branch
          %557 = sbr.rel (%p555) target = $region52
        $region51: #{tpu_custom_call.1} parent=11 // pred_region
          %s559 = ssub.s32 16, 16
          %560 = vsyncadd [#allocation12], %s559
          %s562 = sshll.u32 [#allocation11], 4
          %s563 = int_to_ptr.vmem [resolvable:$true] %s562
          %565 = dma.hbm_to_vmem [thread:$0]  %s11, 16, %s563, [#allocation12]
        $region52: #{tpu_custom_call.1} parent=11 // pred_fallthru
          _
        // Predicated region
        $region53: #{tpu_custom_call.1} parent=11 // pred_check
          %p566 = pneg %p316
        $region54: #{tpu_custom_call.1} parent=11 // pred_check_branch
          %568 = sbr.rel (%p566) target = $region56
        $region55: #{tpu_custom_call.1} parent=11 // pred_region
          %s570 = ssub.s32 16, 16
          %571 = vsyncadd [#allocation12], %s570
          %s573 = sshll.u32 [#allocation13], 4
          %s574 = int_to_ptr.vmem [resolvable:$true] %s573
          %576 = dma.hbm_to_vmem [thread:$0]  %s12, 16, %s574, [#allocation12]
        $region56: #{tpu_custom_call.1} parent=11 // pred_fallthru
          _
        // Predicated region
        $region57: #{tpu_custom_call.1} parent=11 // pred_check
          %p577 = pneg %p337
        $region58: #{tpu_custom_call.1} parent=11 // pred_check_branch
          %579 = sbr.rel (%p577) target = $region60
        $region59: #{tpu_custom_call.1} parent=11 // pred_region
          %s581 = ssub.s32 16, 16
          %582 = vsyncadd [#allocation15], %s581
          %s584 = sshll.u32 [#allocation14], 4
          %s585 = int_to_ptr.vmem [resolvable:$true] %s584
          %587 = dma.hbm_to_vmem [thread:$0]  %s13, 16, %s585, [#allocation15]
        $region60: #{tpu_custom_call.1} parent=11 // pred_fallthru
          _
        // Predicated region
        $region61: #{tpu_custom_call.1} parent=11 // pred_check
          %p588 = pneg %p358
        $region62: #{tpu_custom_call.1} parent=11 // pred_check_branch
          %590 = sbr.rel (%p588) target = $region64
        $region63: #{tpu_custom_call.1} parent=11 // pred_region
          _
        $region64: #{tpu_custom_call.1} parent=11 // pred_fallthru
          _
        // Predicated region
        $region65: #{tpu_custom_call.1} parent=11 // pred_check
          %p591 = pneg %p379
        $region66: #{tpu_custom_call.1} parent=11 // pred_check_branch
          %593 = sbr.rel (%p591) target = $region68
        $region67: #{tpu_custom_call.1} parent=11 // pred_region
          %s595 = ssub.s32 16, 16
          %596 = vsyncadd [#allocation15], %s595
          %s598 = sshll.u32 [#allocation16], 4
          %s599 = int_to_ptr.vmem [resolvable:$true] %s598
          %601 = dma.hbm_to_vmem [thread:$0]  %s15, 16, %s599, [#allocation15]
        $region68: #{tpu_custom_call.1} parent=11 // pred_fallthru
          _
        // Predicated region
        $region69: #{tpu_custom_call.1} parent=11 // pred_check
          %p602 = pneg %p400
        $region70: #{tpu_custom_call.1} parent=11 // pred_check_branch
          %604 = sbr.rel (%p602) target = $region72
        $region71: #{tpu_custom_call.1} parent=11 // pred_region
          _
        $region72: #{tpu_custom_call.1} parent=11 // pred_fallthru
          _
        // Predicated region
        $region73: #{tpu_custom_call.1} parent=11 // pred_check
          %p605 = pneg %p421
        $region74: #{tpu_custom_call.1} parent=11 // pred_check_branch
          %607 = sbr.rel (%p605) target = $region76
        $region75: #{tpu_custom_call.1} parent=11 // pred_region
          _
        $region76: #{tpu_custom_call.1} parent=11 // pred_fallthru
          _
      $region12: #{tpu_custom_call.1} parent=5 // pred_fallthru
        _
      %p608 = scmp.lt.s32.totalorder %s33, 2
      // Predicated region
      $region77: #{tpu_custom_call.1} parent=5 // pred_check
        %p609 = pneg %p608
      $region78: #{tpu_custom_call.1} parent=5 // pred_check_branch
        %611 = sbr.rel (%p609) target = $region80
      $region79: #{tpu_custom_call.1} parent=5 // pred_region
        // Predicated region
        $region81: #{tpu_custom_call.1} parent=79 // pred_check
          %p612 = pneg %p53
        $region82: #{tpu_custom_call.1} parent=79 // pred_check_branch
          %614 = sbr.rel (%p612) target = $region84
        $region83: #{tpu_custom_call.1} parent=79 // pred_region
          %p615 = scmp.lt.s32.totalorder %s33, 1
          %s616 = scalar_select %p615, %s33, 1
          %s617 = scalar_lea.vmem %s0, %s616
        $region84: #{tpu_custom_call.1} parent=79 // pred_fallthru
          _
        // Predicated region
        $region85: #{tpu_custom_call.1} parent=79 // pred_check
          %p618 = pneg %p79
        $region86: #{tpu_custom_call.1} parent=79 // pred_check_branch
          %620 = sbr.rel (%p618) target = $region88
        $region87: #{tpu_custom_call.1} parent=79 // pred_region
          %p621 = scmp.lt.s32.totalorder %s33, 1
          %s622 = scalar_select %p621, %s33, 1
          %s623 = smul.addr %s622, 8
          %s624 = scalar_lea.vmem %s1, %s623
        $region88: #{tpu_custom_call.1} parent=79 // pred_fallthru
          _
        // Predicated region
        $region89: #{tpu_custom_call.1} parent=79 // pred_check
          %p625 = pneg %p441
        $region90: #{tpu_custom_call.1} parent=79 // pred_check_branch
          %627 = sbr.rel (%p625) target = $region92
        $region91: #{tpu_custom_call.1} parent=79 // pred_region
          %p628 = scmp.lt.s32.totalorder %s33, 1
          %s629 = scalar_select %p628, %s33, 1
          %s630 = scalar_lea.vmem %s18, %s629
        $region92: #{tpu_custom_call.1} parent=79 // pred_fallthru
          _
      $region80: #{tpu_custom_call.1} parent=5 // pred_fallthru
        _
      %p631 = scmp.le.s32.totalorder 1, %s33
      %p632 = scmp.lt.s32.totalorder %s33, 3
      %p633 = pnand %p631, %p632
      %p634 = pneg %p633
      // Predicated region
      $region93: #{tpu_custom_call.1} parent=5 // pred_check
        _
      $region94: #{tpu_custom_call.1} parent=5 // pred_check_branch
        %636 = sbr.rel (%p633) target = $region96
      $region95: #{tpu_custom_call.1} parent=5 // pred_region
        %s637 = ssub.s32 %s33, 1
        // Predicated region
        $region97: #{tpu_custom_call.1} parent=95 // pred_check
          %p638 = pneg %p127
        $region98: #{tpu_custom_call.1} parent=95 // pred_check_branch
          %640 = sbr.rel (%p638) target = $region100
        $region99: #{tpu_custom_call.1} parent=95 // pred_region
          %641 = dma.done [#allocation3], 16
        $region100: #{tpu_custom_call.1} parent=95 // pred_fallthru
          _
        // Predicated region
        $region101: #{tpu_custom_call.1} parent=95 // pred_check
          %p642 = pneg %p169
        $region102: #{tpu_custom_call.1} parent=95 // pred_check_branch
          %644 = sbr.rel (%p642) target = $region104
        $region103: #{tpu_custom_call.1} parent=95 // pred_region
          %645 = dma.done [#allocation6], 16
        $region104: #{tpu_custom_call.1} parent=95 // pred_fallthru
          _
        // Predicated region
        $region105: #{tpu_custom_call.1} parent=95 // pred_check
          %p646 = pneg %p190
        $region106: #{tpu_custom_call.1} parent=95 // pred_check_branch
          %648 = sbr.rel (%p646) target = $region108
        $region107: #{tpu_custom_call.1} parent=95 // pred_region
          %649 = dma.done [#allocation6], 16
        $region108: #{tpu_custom_call.1} parent=95 // pred_fallthru
          _
        // Predicated region
        $region109: #{tpu_custom_call.1} parent=95 // pred_check
          %p650 = pneg %p211
        $region110: #{tpu_custom_call.1} parent=95 // pred_check_branch
          %652 = sbr.rel (%p650) target = $region112
        $region111: #{tpu_custom_call.1} parent=95 // pred_region
          %653 = dma.done [#allocation9], 16
        $region112: #{tpu_custom_call.1} parent=95 // pred_fallthru
          _
        // Predicated region
        $region113: #{tpu_custom_call.1} parent=95 // pred_check
          %p654 = pneg %p253
        $region114: #{tpu_custom_call.1} parent=95 // pred_check_branch
          %656 = sbr.rel (%p654) target = $region116
        $region115: #{tpu_custom_call.1} parent=95 // pred_region
          %657 = dma.done [#allocation9], 16
        $region116: #{tpu_custom_call.1} parent=95 // pred_fallthru
          _
        // Predicated region
        $region117: #{tpu_custom_call.1} parent=95 // pred_check
          %p658 = pneg %p295
        $region118: #{tpu_custom_call.1} parent=95 // pred_check_branch
          %660 = sbr.rel (%p658) target = $region120
        $region119: #{tpu_custom_call.1} parent=95 // pred_region
          %661 = dma.done [#allocation12], 16
        $region120: #{tpu_custom_call.1} parent=95 // pred_fallthru
          _
        // Predicated region
        $region121: #{tpu_custom_call.1} parent=95 // pred_check
          %p662 = pneg %p316
        $region122: #{tpu_custom_call.1} parent=95 // pred_check_branch
          %664 = sbr.rel (%p662) target = $region124
        $region123: #{tpu_custom_call.1} parent=95 // pred_region
          %665 = dma.done [#allocation12], 16
        $region124: #{tpu_custom_call.1} parent=95 // pred_fallthru
          _
        // Predicated region
        $region125: #{tpu_custom_call.1} parent=95 // pred_check
          %p666 = pneg %p337
        $region126: #{tpu_custom_call.1} parent=95 // pred_check_branch
          %668 = sbr.rel (%p666) target = $region128
        $region127: #{tpu_custom_call.1} parent=95 // pred_region
          %669 = dma.done [#allocation15], 16
        $region128: #{tpu_custom_call.1} parent=95 // pred_fallthru
          _
        // Predicated region
        $region129: #{tpu_custom_call.1} parent=95 // pred_check
          %p670 = pneg %p379
        $region130: #{tpu_custom_call.1} parent=95 // pred_check_branch
          %672 = sbr.rel (%p670) target = $region132
        $region131: #{tpu_custom_call.1} parent=95 // pred_region
          %673 = dma.done [#allocation15], 16
        $region132: #{tpu_custom_call.1} parent=95 // pred_fallthru
          _
        %p674 = scmp.lt.s32.totalorder %s38, 1
        %s675 = scalar_select %p674, %s38, 1
        %s676 = scalar_lea.vmem %s0, %s675
        %p677 = pneg %p59
        %p678 = pneg %p56
        %p679 = scmp.lt.s32.totalorder %s38, 1
        %s680 = scalar_select %p679, %s38, 1
        %s681 = smul.addr %s680, 8
        %s682 = scalar_lea.vmem %s1, %s681
        %p683 = pneg %p85
        %p684 = pneg %p82
        %p685 = pneg %p106
        %p686 = pneg %p103
        %p687 = pneg %p127
        %p688 = pneg %p124
        %p689 = pneg %p148
        %p690 = pneg %p145
        %p691 = pneg %p169
        %p692 = pneg %p166
        %p693 = pneg %p190
        %p694 = pneg %p187
        %p695 = pneg %p211
        %p696 = pneg %p208
        %p697 = pneg %p232
        %p698 = pneg %p229
        %p699 = pneg %p253
        %p700 = pneg %p250
        %p701 = pneg %p274
        %p702 = pneg %p271
        %p703 = pneg %p295
        %p704 = pneg %p292
        %p705 = pneg %p316
        %p706 = pneg %p313
        %p707 = pneg %p337
        %p708 = pneg %p334
        %p709 = pneg %p358
        %p710 = pneg %p355
        %p711 = pneg %p379
        %p712 = pneg %p376
        %p713 = pneg %p400
        %p714 = pneg %p397
        %p715 = pneg %p421
        %p716 = pneg %p418
        %p717 = scmp.lt.s32.totalorder %s38, 1
        %s718 = scalar_select %p717, %s38, 1
        %s719 = scalar_lea.vmem %s18, %s718
        %p720 = pneg %p447
        %p721 = pneg %p444
        %p722 = pneg %p473
        %p723 = pneg %p470
        %s724 = sand.u32 %s460, 1
        %s725 = scalar_lea.sflag [#allocation4], %s724
        %s726 = sand.u32 %s460, 1
        %s727 = scalar_lea.vmem [#allocation17], %s726
        %p728 = scmp.lt.s32.totalorder %s38, 1
        %s729 = scalar_select %p728, %s38, 1
        %s730 = scalar_lea.vmem %s0, %s729
        %p731 = scmp.lt.s32.totalorder %s38, 1
        %s732 = scalar_select %p731, %s38, 1
        %s733 = smul.addr %s732, 8
        %s734 = scalar_lea.vmem %s1, %s733
        %p735 = scmp.lt.s32.totalorder %s38, 1
        %s736 = scalar_select %p735, %s38, 1
        %s737 = scalar_lea.vmem %s18, %s736
        %v739 = vld [vmem:[%s734] sm:$0xff]
        %v740 = vlaneseq
        %v741 = vand.u32 %v740, 127
        %v742 = vld [vmem:[%s730] sm:$0x1]
        %743 = vset.pattern.permute.xlu0 0
        %744 = vperm.xlu0 %743, %v742
        %v745 = vpop.permute.xlu0 %744
        %v746 = vlaneseq
        %v747 = vshrl.u32 %v746, 7
        %v748 = vsub.s32 0, %v747
        %v749 = vrot.slane %v745, %v748
        %vm750 = vcmp.lt.s32.totalorder %v741, %v749
        %v751 = vsel %vm750, 0.0, -1e+09
        %v752 = vpack.c.bf16 %v739, %v739
        %v753 = vld [vmem:[%s2] sm:$0xf]
        %v754 = vld [vmem:[%s2 + $0x4] sm:$0xf]
        %v755 = vld [vmem:[%s2 + $0x8] sm:$0xf]
        %v756 = vld [vmem:[%s2 + $0xc] sm:$0xf]
        %v757 = vld [vmem:[#allocation2] sm:$0x1]
        %v759 = vlaneseq
        %v760 = vshrl.u32 %v759, 7
        %v761 = vsub.s32 0, %v760
        %v762 = vrot.slane %v757, %v761
        %v768 = vunpack.c.l.b16 %v753
        %v769 = vunpack.c.l.b16 %v754
        %v770 = vunpack.c.l.b16 %v755
        %v771 = vunpack.c.l.b16 %v756
        %v772 = vpack.c.b16 %v769, %v768
        %v773 = vpack.c.b16 %v771, %v770
        %vm776 = vcmask 261120
        %v778 = vsel %vm776, %v752, 0
        %780 = vmatprep.subr.bf16.mxu0 0
        %781 = vmatpush1.bf16.msra.mxu0 %v772
        %782 = vmatprep.subr.bf16.mxu0 0
        %783 = vmatpush1.bf16.msra.mxu0 %v773
        %784 = vmatprep.subr.bf16.mxu0 0
        %785 = vmatpush1.bf16.msra.mxu0 0
        %786 = vmatprep.subr.bf16.mxu0 0
        %787 = vmatpush1.bf16.msra.mxu0 0
        %788 = vmatprep.subr.bf16.mxu0 0
        %789 = vmatpush1.bf16.msra.mxu0 0
        %790 = vmatprep.subr.bf16.mxu0 0
        %791 = vmatpush1.bf16.msra.mxu0 0
        %792 = vmatprep.subr.bf16.mxu0 0
        %793 = vmatpush1.bf16.msra.mxu0 0
        %794 = vmatprep.subr.bf16.mxu0 0
        %795 = vmatpush1.bf16.msra.mxu0 0
        %796 = vmatprep.subr.bf16.mxu0 0
        %797 = vmatpush1.bf16.msra.mxu0 0
        %798 = vmatprep.subr.bf16.mxu0 0
        %799 = vmatpush1.bf16.msra.mxu0 0
        %800 = vmatprep.subr.bf16.mxu0 0
        %801 = vmatpush1.bf16.msra.mxu0 0
        %802 = vmatprep.subr.bf16.mxu0 0
        %803 = vmatpush1.bf16.msra.mxu0 0
        %804 = vmatprep.subr.bf16.mxu0 0
        %805 = vmatpush1.bf16.msra.mxu0 0
        %806 = vmatprep.subr.bf16.mxu0 0
        %807 = vmatpush1.bf16.msra.mxu0 0
        %808 = vmatprep.subr.bf16.mxu0 0
        %809 = vmatpush1.bf16.msra.mxu0 0
        %810 = vmatprep.subr.bf16.mxu0 0
        %811 = vmatpush1.bf16.msra.mxu0 0
        %812 = vmatprep.mubr.bf16.mxu0 0
        %813 = vmatmul.mubr.bf16.gmra.mrb[0].mxu0 %v778
        %v814 = vpop.f32.mrb[0].mxu0
        %v815 = vadd.f32 %v762, %v814
        %v816 = vpop.f32.mrb[0].mxu0
        %v817 = vpop.f32.mrb[0].mxu0
        %v818 = vpop.f32.mrb[0].mxu0
        %819 = vdwg.mxu0
        %v820 = vmul.f32 %v815, 0.35355338
        %822 = vrot.lane.b32.xlu0 %v820, 120
        %v823 = vpop.permute.xlu0 %822
        %825 = vrot.lane.b32.xlu0 %v820, 112
        %v826 = vpop.permute.xlu0 %825
        %828 = vrot.lane.b32.xlu0 %v820, 104
        %v829 = vpop.permute.xlu0 %828
        %v831 = vcombine.low %v820, %v826
        %v832 = vcombine.high %v820, %v826
        %v834 = vunpack.c.l.s4 1983009808
        %v835 = vunpack.c.0.s8 %v834
        %v836 = vlaneseq
        %v837 = vshrl.u32 %v836, 7
        %v838 = vsub.s32 %v835, %v837
        %v839 = vrot.slane %v831, %v838
        %v841 = vunpack.c.l.s4 1983009808
        %v842 = vunpack.c.0.s8 %v841
        %v843 = vlaneseq
        %v844 = vshrl.u32 %v843, 7
        %v845 = vsub.s32 %v842, %v844
        %v846 = vrot.slane %v832, %v845
        %v847 = vcombine.low %v823, %v829
        %v848 = vcombine.high %v823, %v829
        %v850 = vunpack.c.l.s4 1983009808
        %v851 = vunpack.c.0.s8 %v850
        %v852 = vlaneseq
        %v853 = vshrl.u32 %v852, 7
        %v854 = vsub.s32 %v851, %v853
        %v855 = vrot.slane %v847, %v854
        %v857 = vunpack.c.l.s4 1983009808
        %v858 = vunpack.c.0.s8 %v857
        %v859 = vlaneseq
        %v860 = vshrl.u32 %v859, 7
        %v861 = vsub.s32 %v858, %v860
        %v862 = vrot.slane %v848, %v861
        %v863 = vcombine.low %v839, %v855
        %v864 = vcombine.high %v839, %v855
        %v866 = vunpack.c.l.s4 1934713408
        %v867 = vunpack.c.0.s8 %v866
        %v868 = vlaneseq
        %v869 = vshrl.u32 %v868, 7
        %v870 = vsub.s32 %v867, %v869
        %v871 = vrot.slane %v863, %v870
        %v873 = vunpack.c.l.s4 1934713408
        %v874 = vunpack.c.0.s8 %v873
        %v875 = vlaneseq
        %v876 = vshrl.u32 %v875, 7
        %v877 = vsub.s32 %v874, %v876
        %v878 = vrot.slane %v864, %v877
        %v879 = vcombine.low %v846, %v862
        %v880 = vcombine.high %v846, %v862
        %v882 = vunpack.c.l.s4 1934713408
        %v883 = vunpack.c.0.s8 %v882
        %v884 = vlaneseq
        %v885 = vshrl.u32 %v884, 7
        %v886 = vsub.s32 %v883, %v885
        %v887 = vrot.slane %v879, %v886
        %v889 = vunpack.c.l.s4 1934713408
        %v890 = vunpack.c.0.s8 %v889
        %v891 = vlaneseq
        %v892 = vshrl.u32 %v891, 7
        %v893 = vsub.s32 %v890, %v892
        %v894 = vrot.slane %v880, %v893
        %v895 = vcombine.high %v871, 0.0
        %v896 = vcombine.high %v878, 0.0
        %v897 = vcombine.high %v887, 0.0
        %v898 = vcombine.high %v894, 0.0
        %900 = vrot.lane.b32.xlu0 %v815, 120
        %v901 = vpop.permute.xlu0 %900
        %902 = vrot.lane.b32.xlu0 %v815, 112
        %v903 = vpop.permute.xlu0 %902
        %904 = vrot.lane.b32.xlu0 %v815, 104
        %v905 = vpop.permute.xlu0 %904
        %906 = vrot.lane.b32.xlu0 %v815, 96
        %v907 = vpop.permute.xlu0 %906
        %908 = vrot.lane.b32.xlu0 %v901, 96
        %v909 = vpop.permute.xlu0 %908
        %910 = vrot.lane.b32.xlu0 %v903, 96
        %v911 = vpop.permute.xlu0 %910
        %912 = vrot.lane.b32.xlu0 %v905, 96
        %v913 = vpop.permute.xlu0 %912
        %v918 = vcombine.low %v907, %v911
        %v919 = vcombine.high %v907, %v911
        %v921 = vunpack.c.l.s4 1983009808
        %v922 = vunpack.c.0.s8 %v921
        %v923 = vlaneseq
        %v924 = vshrl.u32 %v923, 7
        %v925 = vsub.s32 %v922, %v924
        %v926 = vrot.slane %v918, %v925
        %v928 = vunpack.c.l.s4 1983009808
        %v929 = vunpack.c.0.s8 %v928
        %v930 = vlaneseq
        %v931 = vshrl.u32 %v930, 7
        %v932 = vsub.s32 %v929, %v931
        %v933 = vrot.slane %v919, %v932
        %v934 = vcombine.low %v909, %v913
        %v935 = vcombine.high %v909, %v913
        %v937 = vunpack.c.l.s4 1983009808
        %v938 = vunpack.c.0.s8 %v937
        %v939 = vlaneseq
        %v940 = vshrl.u32 %v939, 7
        %v941 = vsub.s32 %v938, %v940
        %v942 = vrot.slane %v934, %v941
        %v944 = vunpack.c.l.s4 1983009808
        %v945 = vunpack.c.0.s8 %v944
        %v946 = vlaneseq
        %v947 = vshrl.u32 %v946, 7
        %v948 = vsub.s32 %v945, %v947
        %v949 = vrot.slane %v935, %v948
        %v950 = vcombine.low %v926, %v942
        %v951 = vcombine.high %v926, %v942
        %v953 = vunpack.c.l.s4 1934713408
        %v954 = vunpack.c.0.s8 %v953
        %v955 = vlaneseq
        %v956 = vshrl.u32 %v955, 7
        %v957 = vsub.s32 %v954, %v956
        %v958 = vrot.slane %v950, %v957
        %v960 = vunpack.c.l.s4 1934713408
        %v961 = vunpack.c.0.s8 %v960
        %v962 = vlaneseq
        %v963 = vshrl.u32 %v962, 7
        %v964 = vsub.s32 %v961, %v963
        %v965 = vrot.slane %v951, %v964
        %v966 = vcombine.low %v933, %v949
        %v967 = vcombine.high %v933, %v949
        %v969 = vunpack.c.l.s4 1934713408
        %v970 = vunpack.c.0.s8 %v969
        %v971 = vlaneseq
        %v972 = vshrl.u32 %v971, 7
        %v973 = vsub.s32 %v970, %v972
        %v974 = vrot.slane %v966, %v973
        %v976 = vunpack.c.l.s4 1934713408
        %v977 = vunpack.c.0.s8 %v976
        %v978 = vlaneseq
        %v979 = vshrl.u32 %v978, 7
        %v980 = vsub.s32 %v977, %v979
        %v981 = vrot.slane %v967, %v980
        %v982 = vcombine.high %v958, 0.0
        %v983 = vcombine.high %v965, 0.0
        %v984 = vcombine.high %v974, 0.0
        %v985 = vcombine.high %v981, 0.0
        %986 = vrot.lane.b32.xlu0 %v815, 64
        %v987 = vpop.permute.xlu0 %986
        %988 = vrot.lane.b32.xlu0 %v901, 64
        %v989 = vpop.permute.xlu0 %988
        %990 = vrot.lane.b32.xlu0 %v903, 64
        %v991 = vpop.permute.xlu0 %990
        %992 = vrot.lane.b32.xlu0 %v905, 64
        %v993 = vpop.permute.xlu0 %992
        %v998 = vcombine.low %v987, %v991
        %v999 = vcombine.high %v987, %v991
        %v1001 = vunpack.c.l.s4 1983009808
        %v1002 = vunpack.c.0.s8 %v1001
        %v1003 = vlaneseq
        %v1004 = vshrl.u32 %v1003, 7
        %v1005 = vsub.s32 %v1002, %v1004
        %v1006 = vrot.slane %v998, %v1005
        %v1008 = vunpack.c.l.s4 1983009808
        %v1009 = vunpack.c.0.s8 %v1008
        %v1010 = vlaneseq
        %v1011 = vshrl.u32 %v1010, 7
        %v1012 = vsub.s32 %v1009, %v1011
        %v1013 = vrot.slane %v999, %v1012
        %v1014 = vcombine.low %v989, %v993
        %v1015 = vcombine.high %v989, %v993
        %v1017 = vunpack.c.l.s4 1983009808
        %v1018 = vunpack.c.0.s8 %v1017
        %v1019 = vlaneseq
        %v1020 = vshrl.u32 %v1019, 7
        %v1021 = vsub.s32 %v1018, %v1020
        %v1022 = vrot.slane %v1014, %v1021
        %v1024 = vunpack.c.l.s4 1983009808
        %v1025 = vunpack.c.0.s8 %v1024
        %v1026 = vlaneseq
        %v1027 = vshrl.u32 %v1026, 7
        %v1028 = vsub.s32 %v1025, %v1027
        %v1029 = vrot.slane %v1015, %v1028
        %v1030 = vcombine.low %v1006, %v1022
        %v1031 = vcombine.high %v1006, %v1022
        %v1033 = vunpack.c.l.s4 1934713408
        %v1034 = vunpack.c.0.s8 %v1033
        %v1035 = vlaneseq
        %v1036 = vshrl.u32 %v1035, 7
        %v1037 = vsub.s32 %v1034, %v1036
        %v1038 = vrot.slane %v1030, %v1037
        %v1040 = vunpack.c.l.s4 1934713408
        %v1041 = vunpack.c.0.s8 %v1040
        %v1042 = vlaneseq
        %v1043 = vshrl.u32 %v1042, 7
        %v1044 = vsub.s32 %v1041, %v1043
        %v1045 = vrot.slane %v1031, %v1044
        %v1046 = vcombine.low %v1013, %v1029
        %v1047 = vcombine.high %v1013, %v1029
        %v1049 = vunpack.c.l.s4 1934713408
        %v1050 = vunpack.c.0.s8 %v1049
        %v1051 = vlaneseq
        %v1052 = vshrl.u32 %v1051, 7
        %v1053 = vsub.s32 %v1050, %v1052
        %v1054 = vrot.slane %v1046, %v1053
        %v1056 = vunpack.c.l.s4 1934713408
        %v1057 = vunpack.c.0.s8 %v1056
        %v1058 = vlaneseq
        %v1059 = vshrl.u32 %v1058, 7
        %v1060 = vsub.s32 %v1057, %v1059
        %v1061 = vrot.slane %v1047, %v1060
        %v1062 = vcombine.high %v1038, 0.0
        %v1063 = vcombine.high %v1045, 0.0
        %v1064 = vcombine.high %v1054, 0.0
        %v1065 = vcombine.high %v1061, 0.0
        %v1066 = vpack.c.bf16 %v871, %v871
        %v1067 = vpack.c.bf16 %v895, %v895
        %v1068 = vpack.c.bf16 %v878, %v878
        %v1069 = vpack.c.bf16 %v896, %v896
        %v1070 = vpack.c.bf16 %v887, %v887
        %v1071 = vpack.c.bf16 %v897, %v897
        %v1072 = vpack.c.bf16 %v894, %v894
        %v1073 = vpack.c.bf16 %v898, %v898
        %v1074 = vpack.c.bf16 %v958, %v958
        %v1075 = vpack.c.bf16 %v982, %v982
        %v1076 = vpack.c.bf16 %v965, %v965
        %v1077 = vpack.c.bf16 %v983, %v983
        %v1078 = vpack.c.bf16 %v974, %v974
        %v1079 = vpack.c.bf16 %v984, %v984
        %v1080 = vpack.c.bf16 %v981, %v981
        %v1081 = vpack.c.bf16 %v985, %v985
        %v1082 = vcombine.low %v1066, %v1070
        %v1084 = vunpack.c.l.s4 1983009808
        %v1085 = vunpack.c.0.s8 %v1084
        %v1086 = vlaneseq
        %v1087 = vshrl.u32 %v1086, 7
        %v1088 = vsub.s32 %v1085, %v1087
        %v1089 = vrot.slane %v1082, %v1088
        %v1090 = vcombine.low %v1068, %v1072
        %v1092 = vunpack.c.l.s4 1983009808
        %v1093 = vunpack.c.0.s8 %v1092
        %v1094 = vlaneseq
        %v1095 = vshrl.u32 %v1094, 7
        %v1096 = vsub.s32 %v1093, %v1095
        %v1097 = vrot.slane %v1090, %v1096
        %v1098 = vcombine.low %v1089, %v1097
        %v1100 = vunpack.c.l.s4 1934713408
        %v1101 = vunpack.c.0.s8 %v1100
        %v1102 = vlaneseq
        %v1103 = vshrl.u32 %v1102, 7
        %v1104 = vsub.s32 %v1101, %v1103
        %v1105 = vrot.slane %v1098, %v1104
        %v1106 = vcombine.high %v1105, 0
        %v1107 = vcombine.low %v1067, %v1071
        %v1109 = vunpack.c.l.s4 1983009808
        %v1110 = vunpack.c.0.s8 %v1109
        %v1111 = vlaneseq
        %v1112 = vshrl.u32 %v1111, 7
        %v1113 = vsub.s32 %v1110, %v1112
        %v1114 = vrot.slane %v1107, %v1113
        %v1115 = vcombine.low %v1069, %v1073
        %v1117 = vunpack.c.l.s4 1983009808
        %v1118 = vunpack.c.0.s8 %v1117
        %v1119 = vlaneseq
        %v1120 = vshrl.u32 %v1119, 7
        %v1121 = vsub.s32 %v1118, %v1120
        %v1122 = vrot.slane %v1115, %v1121
        %v1123 = vcombine.low %v1114, %v1122
        %v1125 = vunpack.c.l.s4 1934713408
        %v1126 = vunpack.c.0.s8 %v1125
        %v1127 = vlaneseq
        %v1128 = vshrl.u32 %v1127, 7
        %v1129 = vsub.s32 %v1126, %v1128
        %v1130 = vrot.slane %v1123, %v1129
        %v1131 = vcombine.high %v1130, 0
        %v1134 = vpack.i.b16 %v1130, %v1105
        %v1135 = vshrl.u32 %v1105, 16
        %v1136 = vshrl.u32 %v1130, 16
        %v1137 = vpack.i.b16 %v1136, %v1135
        %v1140 = vpack.i.b16 %v1131, %v1106
        %v1141 = vshrl.u32 %v1106, 16
        %v1142 = vshrl.u32 %v1131, 16
        %v1143 = vpack.i.b16 %v1142, %v1141
        %1144 = vxpose.xlu0.c.b16.start [1/8] %v1074, 128
        %1145 = vxpose.xlu0.c.b16.cont [2/8] 0, 128
        %1146 = vxpose.xlu0.c.b16.cont [3/8] 0, 128
        %1147 = vxpose.xlu0.c.b16.cont [4/8] 0, 128
        %1148 = vxpose.xlu0.c.b16.cont [5/8] 0, 128
        %1149 = vxpose.xlu0.c.b16.cont [6/8] 0, 128
        %1150 = vxpose.xlu0.c.b16.cont [7/8] 0, 128
        %1151 = vxpose.xlu0.c.b16.end [8/8] 0, 128
        %v1152 = vpop.trf.xlu0
        %v1153 = vpop.trf.xlu0
        %v1154 = vpop.trf.xlu0
        %v1155 = vpop.trf.xlu0
        %v1156 = vpop.trf.xlu0
        %v1157 = vpop.trf.xlu0
        %v1158 = vpop.trf.xlu0
        %v1159 = vpop.trf.xlu0
        %1160 = vxpose.xlu0.c.b16.start [1/8] %v1075, 128
        %1161 = vxpose.xlu0.c.b16.cont [2/8] 0, 128
        %1162 = vxpose.xlu0.c.b16.cont [3/8] 0, 128
        %1163 = vxpose.xlu0.c.b16.cont [4/8] 0, 128
        %1164 = vxpose.xlu0.c.b16.cont [5/8] 0, 128
        %1165 = vxpose.xlu0.c.b16.cont [6/8] 0, 128
        %1166 = vxpose.xlu0.c.b16.cont [7/8] 0, 128
        %1167 = vxpose.xlu0.c.b16.end [8/8] 0, 128
        %v1168 = vpop.trf.xlu0
        %v1169 = vpop.trf.xlu0
        %v1170 = vpop.trf.xlu0
        %v1171 = vpop.trf.xlu0
        %v1172 = vpop.trf.xlu0
        %v1173 = vpop.trf.xlu0
        %v1174 = vpop.trf.xlu0
        %v1175 = vpop.trf.xlu0
        %1176 = vxpose.xlu0.c.b16.start [1/8] %v1076, 128
        %1177 = vxpose.xlu0.c.b16.cont [2/8] 0, 128
        %1178 = vxpose.xlu0.c.b16.cont [3/8] 0, 128
        %1179 = vxpose.xlu0.c.b16.cont [4/8] 0, 128
        %1180 = vxpose.xlu0.c.b16.cont [5/8] 0, 128
        %1181 = vxpose.xlu0.c.b16.cont [6/8] 0, 128
        %1182 = vxpose.xlu0.c.b16.cont [7/8] 0, 128
        %1183 = vxpose.xlu0.c.b16.end [8/8] 0, 128
        %v1184 = vpop.trf.xlu0
        %v1185 = vpop.trf.xlu0
        %v1186 = vpop.trf.xlu0
        %v1187 = vpop.trf.xlu0
        %v1188 = vpop.trf.xlu0
        %v1189 = vpop.trf.xlu0
        %v1190 = vpop.trf.xlu0
        %v1191 = vpop.trf.xlu0
        %1192 = vxpose.xlu0.c.b16.start [1/8] %v1077, 128
        %1193 = vxpose.xlu0.c.b16.cont [2/8] 0, 128
        %1194 = vxpose.xlu0.c.b16.cont [3/8] 0, 128
        %1195 = vxpose.xlu0.c.b16.cont [4/8] 0, 128
        %1196 = vxpose.xlu0.c.b16.cont [5/8] 0, 128
        %1197 = vxpose.xlu0.c.b16.cont [6/8] 0, 128
        %1198 = vxpose.xlu0.c.b16.cont [7/8] 0, 128
        %1199 = vxpose.xlu0.c.b16.end [8/8] 0, 128
        %v1200 = vpop.trf.xlu0
        %v1201 = vpop.trf.xlu0
        %v1202 = vpop.trf.xlu0
        %v1203 = vpop.trf.xlu0
        %v1204 = vpop.trf.xlu0
        %v1205 = vpop.trf.xlu0
        %v1206 = vpop.trf.xlu0
        %v1207 = vpop.trf.xlu0
        %1208 = vxpose.xlu0.c.b16.start [1/8] %v1078, 128
        %1209 = vxpose.xlu0.c.b16.cont [2/8] 0, 128
        %1210 = vxpose.xlu0.c.b16.cont [3/8] 0, 128
        %1211 = vxpose.xlu0.c.b16.cont [4/8] 0, 128
        %1212 = vxpose.xlu0.c.b16.cont [5/8] 0, 128
        %1213 = vxpose.xlu0.c.b16.cont [6/8] 0, 128
        %1214 = vxpose.xlu0.c.b16.cont [7/8] 0, 128
        %1215 = vxpose.xlu0.c.b16.end [8/8] 0, 128
        %v1216 = vpop.trf.xlu0
        %v1217 = vpop.trf.xlu0
        %v1218 = vpop.trf.xlu0
        %v1219 = vpop.trf.xlu0
        %v1220 = vpop.trf.xlu0
        %v1221 = vpop.trf.xlu0
        %v1222 = vpop.trf.xlu0
        %v1223 = vpop.trf.xlu0
        %1224 = vxpose.xlu0.c.b16.start [1/8] %v1079, 128
        %1225 = vxpose.xlu0.c.b16.cont [2/8] 0, 128
        %1226 = vxpose.xlu0.c.b16.cont [3/8] 0, 128
        %1227 = vxpose.xlu0.c.b16.cont [4/8] 0, 128
        %1228 = vxpose.xlu0.c.b16.cont [5/8] 0, 128
        %1229 = vxpose.xlu0.c.b16.cont [6/8] 0, 128
        %1230 = vxpose.xlu0.c.b16.cont [7/8] 0, 128
        %1231 = vxpose.xlu0.c.b16.end [8/8] 0, 128
        %v1232 = vpop.trf.xlu0
        %v1233 = vpop.trf.xlu0
        %v1234 = vpop.trf.xlu0
        %v1235 = vpop.trf.xlu0
        %v1236 = vpop.trf.xlu0
        %v1237 = vpop.trf.xlu0
        %v1238 = vpop.trf.xlu0
        %v1239 = vpop.trf.xlu0
        %1240 = vxpose.xlu0.c.b16.start [1/8] %v1080, 128
        %1241 = vxpose.xlu0.c.b16.cont [2/8] 0, 128
        %1242 = vxpose.xlu0.c.b16.cont [3/8] 0, 128
        %1243 = vxpose.xlu0.c.b16.cont [4/8] 0, 128
        %1244 = vxpose.xlu0.c.b16.cont [5/8] 0, 128
        %1245 = vxpose.xlu0.c.b16.cont [6/8] 0, 128
        %1246 = vxpose.xlu0.c.b16.cont [7/8] 0, 128
        %1247 = vxpose.xlu0.c.b16.end [8/8] 0, 128
        %v1248 = vpop.trf.xlu0
        %v1249 = vpop.trf.xlu0
        %v1250 = vpop.trf.xlu0
        %v1251 = vpop.trf.xlu0
        %v1252 = vpop.trf.xlu0
        %v1253 = vpop.trf.xlu0
        %v1254 = vpop.trf.xlu0
        %v1255 = vpop.trf.xlu0
        %1256 = vxpose.xlu0.c.b16.start [1/8] %v1081, 128
        %1257 = vxpose.xlu0.c.b16.cont [2/8] 0, 128
        %1258 = vxpose.xlu0.c.b16.cont [3/8] 0, 128
        %1259 = vxpose.xlu0.c.b16.cont [4/8] 0, 128
        %1260 = vxpose.xlu0.c.b16.cont [5/8] 0, 128
        %1261 = vxpose.xlu0.c.b16.cont [6/8] 0, 128
        %1262 = vxpose.xlu0.c.b16.cont [7/8] 0, 128
        %1263 = vxpose.xlu0.c.b16.end [8/8] 0, 128
        %v1264 = vpop.trf.xlu0
        %v1265 = vpop.trf.xlu0
        %v1266 = vpop.trf.xlu0
        %v1267 = vpop.trf.xlu0
        %v1268 = vpop.trf.xlu0
        %v1269 = vpop.trf.xlu0
        %v1270 = vpop.trf.xlu0
        %v1271 = vpop.trf.xlu0
        %v1272 = vcombine.low %v1152, %v1216
        %v1274 = vunpack.c.l.s4 1983009808
        %v1275 = vunpack.c.0.s8 %v1274
        %v1276 = vlaneseq
        %v1277 = vshrl.u32 %v1276, 7
        %v1278 = vsub.s32 %v1275, %v1277
        %v1279 = vrot.slane %v1272, %v1278
        %v1280 = vcombine.low %v1184, %v1248
        %v1282 = vunpack.c.l.s4 1983009808
        %v1283 = vunpack.c.0.s8 %v1282
        %v1284 = vlaneseq
        %v1285 = vshrl.u32 %v1284, 7
        %v1286 = vsub.s32 %v1283, %v1285
        %v1287 = vrot.slane %v1280, %v1286
        %v1288 = vcombine.low %v1279, %v1287
        %v1289 = vcombine.high %v1279, %v1287
        %v1291 = vunpack.c.l.s4 1934713408
        %v1292 = vunpack.c.0.s8 %v1291
        %v1293 = vlaneseq
        %v1294 = vshrl.u32 %v1293, 7
        %v1295 = vsub.s32 %v1292, %v1294
        %v1296 = vrot.slane %v1288, %v1295
        %v1298 = vunpack.c.l.s4 1934713408
        %v1299 = vunpack.c.0.s8 %v1298
        %v1300 = vlaneseq
        %v1301 = vshrl.u32 %v1300, 7
        %v1302 = vsub.s32 %v1299, %v1301
        %v1303 = vrot.slane %v1289, %v1302
        %v1304 = vcombine.high %v1296, 0
        %v1305 = vcombine.high %v1303, 0
        %v1306 = vcombine.low %v1168, %v1232
        %v1308 = vunpack.c.l.s4 1983009808
        %v1309 = vunpack.c.0.s8 %v1308
        %v1310 = vlaneseq
        %v1311 = vshrl.u32 %v1310, 7
        %v1312 = vsub.s32 %v1309, %v1311
        %v1313 = vrot.slane %v1306, %v1312
        %v1314 = vcombine.low %v1200, %v1264
        %v1316 = vunpack.c.l.s4 1983009808
        %v1317 = vunpack.c.0.s8 %v1316
        %v1318 = vlaneseq
        %v1319 = vshrl.u32 %v1318, 7
        %v1320 = vsub.s32 %v1317, %v1319
        %v1321 = vrot.slane %v1314, %v1320
        %v1322 = vcombine.low %v1313, %v1321
        %v1323 = vcombine.high %v1313, %v1321
        %v1325 = vunpack.c.l.s4 1934713408
        %v1326 = vunpack.c.0.s8 %v1325
        %v1327 = vlaneseq
        %v1328 = vshrl.u32 %v1327, 7
        %v1329 = vsub.s32 %v1326, %v1328
        %v1330 = vrot.slane %v1322, %v1329
        %v1332 = vunpack.c.l.s4 1934713408
        %v1333 = vunpack.c.0.s8 %v1332
        %v1334 = vlaneseq
        %v1335 = vshrl.u32 %v1334, 7
        %v1336 = vsub.s32 %v1333, %v1335
        %v1337 = vrot.slane %v1323, %v1336
        %v1338 = vcombine.high %v1330, 0
        %v1339 = vcombine.high %v1337, 0
        %v1342 = vpack.i.b16 %v1330, %v1296
        %v1344 = vshrl.u32 %v1296, 16
        %v1345 = vshrl.u32 %v1330, 16
        %v1346 = vpack.i.b16 %v1345, %v1344
        %v1350 = vpack.i.b16 %v1338, %v1304
        %v1352 = vshrl.u32 %v1304, 16
        %v1353 = vshrl.u32 %v1338, 16
        %v1354 = vpack.i.b16 %v1353, %v1352
        %v1358 = vpack.i.b16 %v1337, %v1303
        %v1360 = vshrl.u32 %v1303, 16
        %v1361 = vshrl.u32 %v1337, 16
        %v1362 = vpack.i.b16 %v1361, %v1360
        %v1366 = vpack.i.b16 %v1339, %v1305
        %v1368 = vshrl.u32 %v1305, 16
        %v1369 = vshrl.u32 %v1339, 16
        %v1370 = vpack.i.b16 %v1369, %v1368
        %1372 = vxpose.xlu0.c.b16.start [1/8] %v1342, 128
        %1373 = vxpose.xlu0.c.b16.cont [2/8] 0, 128
        %1374 = vxpose.xlu0.c.b16.cont [3/8] 0, 128
        %1375 = vxpose.xlu0.c.b16.cont [4/8] 0, 128
        %1376 = vxpose.xlu0.c.b16.cont [5/8] 0, 128
        %1377 = vxpose.xlu0.c.b16.cont [6/8] 0, 128
        %1378 = vxpose.xlu0.c.b16.cont [7/8] 0, 128
        %1379 = vxpose.xlu0.c.b16.end [8/8] 0, 128
        %v1380 = vpop.trf.xlu0
        %v1381 = vpop.trf.xlu0
        %v1382 = vpop.trf.xlu0
        %v1383 = vpop.trf.xlu0
        %v1384 = vpop.trf.xlu0
        %v1385 = vpop.trf.xlu0
        %v1386 = vpop.trf.xlu0
        %v1387 = vpop.trf.xlu0
        %1388 = vxpose.xlu0.c.b16.start [1/8] %v1346, 128
        %1389 = vxpose.xlu0.c.b16.cont [2/8] 0, 128
        %1390 = vxpose.xlu0.c.b16.cont [3/8] 0, 128
        %1391 = vxpose.xlu0.c.b16.cont [4/8] 0, 128
        %1392 = vxpose.xlu0.c.b16.cont [5/8] 0, 128
        %1393 = vxpose.xlu0.c.b16.cont [6/8] 0, 128
        %1394 = vxpose.xlu0.c.b16.cont [7/8] 0, 128
        %1395 = vxpose.xlu0.c.b16.end [8/8] 0, 128
        %v1396 = vpop.trf.xlu0
        %v1397 = vpop.trf.xlu0
        %v1398 = vpop.trf.xlu0
        %v1399 = vpop.trf.xlu0
        %v1400 = vpop.trf.xlu0
        %v1401 = vpop.trf.xlu0
        %v1402 = vpop.trf.xlu0
        %v1403 = vpop.trf.xlu0
        %1404 = vxpose.xlu0.c.b16.start [1/8] %v1350, 128
        %1405 = vxpose.xlu0.c.b16.cont [2/8] 0, 128
        %1406 = vxpose.xlu0.c.b16.cont [3/8] 0, 128
        %1407 = vxpose.xlu0.c.b16.cont [4/8] 0, 128
        %1408 = vxpose.xlu0.c.b16.cont [5/8] 0, 128
        %1409 = vxpose.xlu0.c.b16.cont [6/8] 0, 128
        %1410 = vxpose.xlu0.c.b16.cont [7/8] 0, 128
        %1411 = vxpose.xlu0.c.b16.end [8/8] 0, 128
        %v1412 = vpop.trf.xlu0
        %v1413 = vpop.trf.xlu0
        %v1414 = vpop.trf.xlu0
        %v1415 = vpop.trf.xlu0
        %v1416 = vpop.trf.xlu0
        %v1417 = vpop.trf.xlu0
        %v1418 = vpop.trf.xlu0
        %v1419 = vpop.trf.xlu0
        %1420 = vxpose.xlu0.c.b16.start [1/8] %v1354, 128
        %1421 = vxpose.xlu0.c.b16.cont [2/8] 0, 128
        %1422 = vxpose.xlu0.c.b16.cont [3/8] 0, 128
        %1423 = vxpose.xlu0.c.b16.cont [4/8] 0, 128
        %1424 = vxpose.xlu0.c.b16.cont [5/8] 0, 128
        %1425 = vxpose.xlu0.c.b16.cont [6/8] 0, 128
        %1426 = vxpose.xlu0.c.b16.cont [7/8] 0, 128
        %1427 = vxpose.xlu0.c.b16.end [8/8] 0, 128
        %v1428 = vpop.trf.xlu0
        %v1429 = vpop.trf.xlu0
        %v1430 = vpop.trf.xlu0
        %v1431 = vpop.trf.xlu0
        %v1432 = vpop.trf.xlu0
        %v1433 = vpop.trf.xlu0
        %v1434 = vpop.trf.xlu0
        %v1435 = vpop.trf.xlu0
        %1436 = vxpose.xlu0.c.b16.start [1/8] %v1358, 128
        %1437 = vxpose.xlu0.c.b16.cont [2/8] 0, 128
        %1438 = vxpose.xlu0.c.b16.cont [3/8] 0, 128
        %1439 = vxpose.xlu0.c.b16.cont [4/8] 0, 128
        %1440 = vxpose.xlu0.c.b16.cont [5/8] 0, 128
        %1441 = vxpose.xlu0.c.b16.cont [6/8] 0, 128
        %1442 = vxpose.xlu0.c.b16.cont [7/8] 0, 128
        %1443 = vxpose.xlu0.c.b16.end [8/8] 0, 128
        %v1444 = vpop.trf.xlu0
        %v1445 = vpop.trf.xlu0
        %v1446 = vpop.trf.xlu0
        %v1447 = vpop.trf.xlu0
        %v1448 = vpop.trf.xlu0
        %v1449 = vpop.trf.xlu0
        %v1450 = vpop.trf.xlu0
        %v1451 = vpop.trf.xlu0
        %1452 = vxpose.xlu0.c.b16.start [1/8] %v1362, 128
        %1453 = vxpose.xlu0.c.b16.cont [2/8] 0, 128
        %1454 = vxpose.xlu0.c.b16.cont [3/8] 0, 128
        %1455 = vxpose.xlu0.c.b16.cont [4/8] 0, 128
        %1456 = vxpose.xlu0.c.b16.cont [5/8] 0, 128
        %1457 = vxpose.xlu0.c.b16.cont [6/8] 0, 128
        %1458 = vxpose.xlu0.c.b16.cont [7/8] 0, 128
        %1459 = vxpose.xlu0.c.b16.end [8/8] 0, 128
        %v1460 = vpop.trf.xlu0
        %v1461 = vpop.trf.xlu0
        %v1462 = vpop.trf.xlu0
        %v1463 = vpop.trf.xlu0
        %v1464 = vpop.trf.xlu0
        %v1465 = vpop.trf.xlu0
        %v1466 = vpop.trf.xlu0
        %v1467 = vpop.trf.xlu0
        %1468 = vxpose.xlu0.c.b16.start [1/8] %v1366, 128
        %1469 = vxpose.xlu0.c.b16.cont [2/8] 0, 128
        %1470 = vxpose.xlu0.c.b16.cont [3/8] 0, 128
        %1471 = vxpose.xlu0.c.b16.cont [4/8] 0, 128
        %1472 = vxpose.xlu0.c.b16.cont [5/8] 0, 128
        %1473 = vxpose.xlu0.c.b16.cont [6/8] 0, 128
        %1474 = vxpose.xlu0.c.b16.cont [7/8] 0, 128
        %1475 = vxpose.xlu0.c.b16.end [8/8] 0, 128
        %v1476 = vpop.trf.xlu0
        %v1477 = vpop.trf.xlu0
        %v1478 = vpop.trf.xlu0
        %v1479 = vpop.trf.xlu0
        %v1480 = vpop.trf.xlu0
        %v1481 = vpop.trf.xlu0
        %v1482 = vpop.trf.xlu0
        %v1483 = vpop.trf.xlu0
        %1484 = vxpose.xlu0.c.b16.start [1/8] %v1370, 128
        %1485 = vxpose.xlu0.c.b16.cont [2/8] 0, 128
        %1486 = vxpose.xlu0.c.b16.cont [3/8] 0, 128
        %1487 = vxpose.xlu0.c.b16.cont [4/8] 0, 128
        %1488 = vxpose.xlu0.c.b16.cont [5/8] 0, 128
        %1489 = vxpose.xlu0.c.b16.cont [6/8] 0, 128
        %1490 = vxpose.xlu0.c.b16.cont [7/8] 0, 128
        %1491 = vxpose.xlu0.c.b16.end [8/8] 0, 128
        %v1492 = vpop.trf.xlu0
        %v1493 = vpop.trf.xlu0
        %v1494 = vpop.trf.xlu0
        %v1495 = vpop.trf.xlu0
        %v1496 = vpop.trf.xlu0
        %v1497 = vpop.trf.xlu0
        %v1498 = vpop.trf.xlu0
        %v1499 = vpop.trf.xlu0
        %v1500 = vcombine.low %v1380, %v1444
        %v1502 = vunpack.c.l.s4 1983009808
        %v1503 = vunpack.c.0.s8 %v1502
        %v1504 = vlaneseq
        %v1505 = vshrl.u32 %v1504, 7
        %v1506 = vsub.s32 %v1503, %v1505
        %v1507 = vrot.slane %v1500, %v1506
        %v1508 = vcombine.low %v1412, %v1476
        %v1510 = vunpack.c.l.s4 1983009808
        %v1511 = vunpack.c.0.s8 %v1510
        %v1512 = vlaneseq
        %v1513 = vshrl.u32 %v1512, 7
        %v1514 = vsub.s32 %v1511, %v1513
        %v1515 = vrot.slane %v1508, %v1514
        %v1516 = vcombine.low %v1507, %v1515
        %v1518 = vunpack.c.l.s4 1934713408
        %v1519 = vunpack.c.0.s8 %v1518
        %v1520 = vlaneseq
        %v1521 = vshrl.u32 %v1520, 7
        %v1522 = vsub.s32 %v1519, %v1521
        %v1523 = vrot.slane %v1516, %v1522
        %v1524 = vcombine.high %v1523, 0
        %v1525 = vcombine.low %v1396, %v1460
        %v1527 = vunpack.c.l.s4 1983009808
        %v1528 = vunpack.c.0.s8 %v1527
        %v1529 = vlaneseq
        %v1530 = vshrl.u32 %v1529, 7
        %v1531 = vsub.s32 %v1528, %v1530
        %v1532 = vrot.slane %v1525, %v1531
        %v1533 = vcombine.low %v1428, %v1492
        %v1535 = vunpack.c.l.s4 1983009808
        %v1536 = vunpack.c.0.s8 %v1535
        %v1537 = vlaneseq
        %v1538 = vshrl.u32 %v1537, 7
        %v1539 = vsub.s32 %v1536, %v1538
        %v1540 = vrot.slane %v1533, %v1539
        %v1541 = vcombine.low %v1532, %v1540
        %v1543 = vunpack.c.l.s4 1934713408
        %v1544 = vunpack.c.0.s8 %v1543
        %v1545 = vlaneseq
        %v1546 = vshrl.u32 %v1545, 7
        %v1547 = vsub.s32 %v1544, %v1546
        %v1548 = vrot.slane %v1541, %v1547
        %v1549 = vcombine.high %v1548, 0
        %v1552 = vpack.i.b16 %v1548, %v1523
        %v1553 = vshrl.u32 %v1523, 16
        %v1554 = vshrl.u32 %v1548, 16
        %v1555 = vpack.i.b16 %v1554, %v1553
        %v1558 = vpack.i.b16 %v1549, %v1524
        %v1559 = vshrl.u32 %v1524, 16
        %v1560 = vshrl.u32 %v1549, 16
        %v1561 = vpack.i.b16 %v1560, %v1559
        %vm1562 = vcmask 64512
        %v1564 = vsel %vm1562, %v1134, 0
        %vm1566 = vcmask 1043456
        %v1568 = vsel %vm1566, %v1552, 0
        %1570 = vmatprep.subr.bf16.mxu0 0
        %1571 = vmatpush1.bf16.msra.mxu0 %v1568
        %1572 = vmatprep.subr.bf16.mxu0 0
        %1573 = vmatpush1.bf16.msra.mxu0 0
        %1574 = vmatprep.subr.bf16.mxu0 0
        %1575 = vmatpush1.bf16.msra.mxu0 0
        %1576 = vmatprep.subr.bf16.mxu0 0
        %1577 = vmatpush1.bf16.msra.mxu0 0
        %1578 = vmatprep.subr.bf16.mxu0 0
        %1579 = vmatpush1.bf16.msra.mxu0 0
        %1580 = vmatprep.subr.bf16.mxu0 0
        %1581 = vmatpush1.bf16.msra.mxu0 0
        %1582 = vmatprep.subr.bf16.mxu0 0
        %1583 = vmatpush1.bf16.msra.mxu0 0
        %1584 = vmatprep.subr.bf16.mxu0 0
        %1585 = vmatpush1.bf16.msra.mxu0 0
        %1586 = vmatprep.subr.bf16.mxu0 0
        %1587 = vmatpush1.bf16.msra.mxu0 0
        %1588 = vmatprep.subr.bf16.mxu0 0
        %1589 = vmatpush1.bf16.msra.mxu0 0
        %1590 = vmatprep.subr.bf16.mxu0 0
        %1591 = vmatpush1.bf16.msra.mxu0 0
        %1592 = vmatprep.subr.bf16.mxu0 0
        %1593 = vmatpush1.bf16.msra.mxu0 0
        %1594 = vmatprep.subr.bf16.mxu0 0
        %1595 = vmatpush1.bf16.msra.mxu0 0
        %1596 = vmatprep.subr.bf16.mxu0 0
        %1597 = vmatpush1.bf16.msra.mxu0 0
        %1598 = vmatprep.subr.bf16.mxu0 0
        %1599 = vmatpush1.bf16.msra.mxu0 0
        %1600 = vmatprep.subr.bf16.mxu0 0
        %1601 = vmatpush1.bf16.msra.mxu0 0
        %1602 = vmatprep.mubr.bf16.mxu0 0
        %1603 = vmatmul.mubr.bf16.gmra.mrb[0].mxu0 %v1564
        %v1604 = vpop.f32.mrb[0].mxu0
        %v1605 = vadd.f32 %v751, %v1604
        %v1606 = vpop.f32.mrb[0].mxu0
        %v1607 = vpop.f32.mrb[0].mxu0
        %v1608 = vpop.f32.mrb[0].mxu0
        %1609 = vdwg.mxu0
        %v1611 = vsel %vm1562, %v1137, 0
        %v1614 = vsel %vm1566, %v1555, 0
        %1616 = vmatprep.subr.bf16.mxu0 0
        %1617 = vmatpush1.bf16.msra.mxu0 %v1614
        %1618 = vmatprep.subr.bf16.mxu0 0
        %1619 = vmatpush1.bf16.msra.mxu0 0
        %1620 = vmatprep.subr.bf16.mxu0 0
        %1621 = vmatpush1.bf16.msra.mxu0 0
        %1622 = vmatprep.subr.bf16.mxu0 0
        %1623 = vmatpush1.bf16.msra.mxu0 0
        %1624 = vmatprep.subr.bf16.mxu0 0
        %1625 = vmatpush1.bf16.msra.mxu0 0
        %1626 = vmatprep.subr.bf16.mxu0 0
        %1627 = vmatpush1.bf16.msra.mxu0 0
        %1628 = vmatprep.subr.bf16.mxu0 0
        %1629 = vmatpush1.bf16.msra.mxu0 0
        %1630 = vmatprep.subr.bf16.mxu0 0
        %1631 = vmatpush1.bf16.msra.mxu0 0
        %1632 = vmatprep.subr.bf16.mxu0 0
        %1633 = vmatpush1.bf16.msra.mxu0 0
        %1634 = vmatprep.subr.bf16.mxu0 0
        %1635 = vmatpush1.bf16.msra.mxu0 0
        %1636 = vmatprep.subr.bf16.mxu0 0
        %1637 = vmatpush1.bf16.msra.mxu0 0
        %1638 = vmatprep.subr.bf16.mxu0 0
        %1639 = vmatpush1.bf16.msra.mxu0 0
        %1640 = vmatprep.subr.bf16.mxu0 0
        %1641 = vmatpush1.bf16.msra.mxu0 0
        %1642 = vmatprep.subr.bf16.mxu0 0
        %1643 = vmatpush1.bf16.msra.mxu0 0
        %1644 = vmatprep.subr.bf16.mxu0 0
        %1645 = vmatpush1.bf16.msra.mxu0 0
        %1646 = vmatprep.subr.bf16.mxu0 0
        %1647 = vmatpush1.bf16.msra.mxu0 0
        %1648 = vmatprep.mubr.bf16.mxu0 0
        %1649 = vmatmul.mubr.bf16.gmra.mrb[0].mxu0 %v1611
        %v1650 = vpop.f32.mrb[0].mxu0
        %v1651 = vadd.f32 %v751, %v1650
        %v1652 = vpop.f32.mrb[0].mxu0
        %v1653 = vpop.f32.mrb[0].mxu0
        %v1654 = vpop.f32.mrb[0].mxu0
        %1655 = vdwg.mxu0
        %v1657 = vsel %vm1562, %v1140, 0
        %v1660 = vsel %vm1566, %v1558, 0
        %1662 = vmatprep.subr.bf16.mxu0 0
        %1663 = vmatpush1.bf16.msra.mxu0 %v1660
        %1664 = vmatprep.subr.bf16.mxu0 0
        %1665 = vmatpush1.bf16.msra.mxu0 0
        %1666 = vmatprep.subr.bf16.mxu0 0
        %1667 = vmatpush1.bf16.msra.mxu0 0
        %1668 = vmatprep.subr.bf16.mxu0 0
        %1669 = vmatpush1.bf16.msra.mxu0 0
        %1670 = vmatprep.subr.bf16.mxu0 0
        %1671 = vmatpush1.bf16.msra.mxu0 0
        %1672 = vmatprep.subr.bf16.mxu0 0
        %1673 = vmatpush1.bf16.msra.mxu0 0
        %1674 = vmatprep.subr.bf16.mxu0 0
        %1675 = vmatpush1.bf16.msra.mxu0 0
        %1676 = vmatprep.subr.bf16.mxu0 0
        %1677 = vmatpush1.bf16.msra.mxu0 0
        %1678 = vmatprep.subr.bf16.mxu0 0
        %1679 = vmatpush1.bf16.msra.mxu0 0
        %1680 = vmatprep.subr.bf16.mxu0 0
        %1681 = vmatpush1.bf16.msra.mxu0 0
        %1682 = vmatprep.subr.bf16.mxu0 0
        %1683 = vmatpush1.bf16.msra.mxu0 0
        %1684 = vmatprep.subr.bf16.mxu0 0
        %1685 = vmatpush1.bf16.msra.mxu0 0
        %1686 = vmatprep.subr.bf16.mxu0 0
        %1687 = vmatpush1.bf16.msra.mxu0 0
        %1688 = vmatprep.subr.bf16.mxu0 0
        %1689 = vmatpush1.bf16.msra.mxu0 0
        %1690 = vmatprep.subr.bf16.mxu0 0
        %1691 = vmatpush1.bf16.msra.mxu0 0
        %1692 = vmatprep.subr.bf16.mxu0 0
        %1693 = vmatpush1.bf16.msra.mxu0 0
        %1694 = vmatprep.mubr.bf16.mxu0 0
        %1695 = vmatmul.mubr.bf16.gmra.mrb[0].mxu0 %v1657
        %v1696 = vpop.f32.mrb[0].mxu0
        %v1697 = vadd.f32 %v751, %v1696
        %v1698 = vpop.f32.mrb[0].mxu0
        %v1699 = vpop.f32.mrb[0].mxu0
        %v1700 = vpop.f32.mrb[0].mxu0
        %1701 = vdwg.mxu0
        %v1703 = vsel %vm1562, %v1143, 0
        %v1706 = vsel %vm1566, %v1561, 0
        %1708 = vmatprep.subr.bf16.mxu0 0
        %1709 = vmatpush1.bf16.msra.mxu0 %v1706
        %1710 = vmatprep.subr.bf16.mxu0 0
        %1711 = vmatpush1.bf16.msra.mxu0 0
        %1712 = vmatprep.subr.bf16.mxu0 0
        %1713 = vmatpush1.bf16.msra.mxu0 0
        %1714 = vmatprep.subr.bf16.mxu0 0
        %1715 = vmatpush1.bf16.msra.mxu0 0
        %1716 = vmatprep.subr.bf16.mxu0 0
        %1717 = vmatpush1.bf16.msra.mxu0 0
        %1718 = vmatprep.subr.bf16.mxu0 0
        %1719 = vmatpush1.bf16.msra.mxu0 0
        %1720 = vmatprep.subr.bf16.mxu0 0
        %1721 = vmatpush1.bf16.msra.mxu0 0
        %1722 = vmatprep.subr.bf16.mxu0 0
        %1723 = vmatpush1.bf16.msra.mxu0 0
        %1724 = vmatprep.subr.bf16.mxu0 0
        %1725 = vmatpush1.bf16.msra.mxu0 0
        %1726 = vmatprep.subr.bf16.mxu0 0
        %1727 = vmatpush1.bf16.msra.mxu0 0
        %1728 = vmatprep.subr.bf16.mxu0 0
        %1729 = vmatpush1.bf16.msra.mxu0 0
        %1730 = vmatprep.subr.bf16.mxu0 0
        %1731 = vmatpush1.bf16.msra.mxu0 0
        %1732 = vmatprep.subr.bf16.mxu0 0
        %1733 = vmatpush1.bf16.msra.mxu0 0
        %1734 = vmatprep.subr.bf16.mxu0 0
        %1735 = vmatpush1.bf16.msra.mxu0 0
        %1736 = vmatprep.subr.bf16.mxu0 0
        %1737 = vmatpush1.bf16.msra.mxu0 0
        %1738 = vmatprep.subr.bf16.mxu0 0
        %1739 = vmatpush1.bf16.msra.mxu0 0
        %1740 = vmatprep.mubr.bf16.mxu0 0
        %1741 = vmatmul.mubr.bf16.gmra.mrb[0].mxu0 %v1703
        %v1742 = vpop.f32.mrb[0].mxu0
        %v1743 = vadd.f32 %v751, %v1742
        %v1744 = vpop.f32.mrb[0].mxu0
        %v1745 = vpop.f32.mrb[0].mxu0
        %v1746 = vpop.f32.mrb[0].mxu0
        %1747 = vdwg.mxu0
        %v1748 = vsel %vm1562, %v1605, -inf
        %1749 = vmax.xlane.f32.xlu0 %v1748
        %v1750 = vpop.xlane.xlu0 %1749
        %v1751 = vsel %vm1562, %v1651, -inf
        %1752 = vmax.xlane.f32.xlu0 %v1751
        %v1753 = vpop.xlane.xlu0 %1752
        %v1754 = vsel %vm1562, %v1697, -inf
        %1755 = vmax.xlane.f32.xlu0 %v1754
        %v1756 = vpop.xlane.xlu0 %1755
        %v1757 = vsel %vm1562, %v1743, -inf
        %1758 = vmax.xlane.f32.xlu0 %v1757
        %v1759 = vpop.xlane.xlu0 %1758
        %v1760 = vsub.f32 %v1605, %v1750
        %v1761 = vsub.f32 %v1651, %v1753
        %v1762 = vsub.f32 %v1697, %v1756
        %v1763 = vsub.f32 %v1743, %v1759
        %v1764 = vmul.f32 %v1760, 1.442695
        %v1765 = vpow.pop %v1764
        %v1766 = vmul.f32 %v1761, 1.442695
        %v1767 = vpow.pop %v1766
        %v1768 = vmul.f32 %v1762, 1.442695
        %v1769 = vpow.pop %v1768
        %v1770 = vmul.f32 %v1763, 1.442695
        %v1771 = vpow.pop %v1770
        %v1772 = vsel %vm1562, %v1765, 0.0
        %1773 = vadd.xlane.f32.xlu0 %v1772
        %v1774 = vpop.xlane.xlu0 %1773
        %v1775 = vsel %vm1562, %v1767, 0.0
        %1776 = vadd.xlane.f32.xlu0 %v1775
        %v1777 = vpop.xlane.xlu0 %1776
        %v1778 = vsel %vm1562, %v1769, 0.0
        %1779 = vadd.xlane.f32.xlu0 %v1778
        %v1780 = vpop.xlane.xlu0 %1779
        %v1781 = vsel %vm1562, %v1771, 0.0
        %1782 = vadd.xlane.f32.xlu0 %v1781
        %v1783 = vpop.xlane.xlu0 %1782
        %v1784 = vrcp.pop %v1774
        %v1785 = vmul.f32 %v1765, %v1784
        %v1786 = vrcp.pop %v1777
        %v1787 = vmul.f32 %v1767, %v1786
        %v1788 = vrcp.pop %v1780
        %v1789 = vmul.f32 %v1769, %v1788
        %v1790 = vrcp.pop %v1783
        %v1791 = vmul.f32 %v1771, %v1790
        %v1792 = vpack.c.bf16 %v1785, %v1785
        %v1793 = vpack.c.bf16 %v1787, %v1787
        %v1794 = vpack.c.bf16 %v1789, %v1789
        %v1795 = vpack.c.bf16 %v1791, %v1791
        %v1796 = vpack.c.bf16 %v1038, %v1038
        %v1797 = vpack.c.bf16 %v1062, %v1062
        %v1798 = vpack.c.bf16 %v1045, %v1045
        %v1799 = vpack.c.bf16 %v1063, %v1063
        %v1800 = vpack.c.bf16 %v1054, %v1054
        %v1801 = vpack.c.bf16 %v1064, %v1064
        %v1802 = vpack.c.bf16 %v1061, %v1061
        %v1803 = vpack.c.bf16 %v1065, %v1065
        %1804 = vxpose.xlu0.c.b16.start [1/8] %v1796, 128
        %1805 = vxpose.xlu0.c.b16.cont [2/8] 0, 128
        %1806 = vxpose.xlu0.c.b16.cont [3/8] 0, 128
        %1807 = vxpose.xlu0.c.b16.cont [4/8] 0, 128
        %1808 = vxpose.xlu0.c.b16.cont [5/8] 0, 128
        %1809 = vxpose.xlu0.c.b16.cont [6/8] 0, 128
        %1810 = vxpose.xlu0.c.b16.cont [7/8] 0, 128
        %1811 = vxpose.xlu0.c.b16.end [8/8] 0, 128
        %v1812 = vpop.trf.xlu0
        %v1813 = vpop.trf.xlu0
        %v1814 = vpop.trf.xlu0
        %v1815 = vpop.trf.xlu0
        %v1816 = vpop.trf.xlu0
        %v1817 = vpop.trf.xlu0
        %v1818 = vpop.trf.xlu0
        %v1819 = vpop.trf.xlu0
        %1820 = vxpose.xlu0.c.b16.start [1/8] %v1797, 128
        %1821 = vxpose.xlu0.c.b16.cont [2/8] 0, 128
        %1822 = vxpose.xlu0.c.b16.cont [3/8] 0, 128
        %1823 = vxpose.xlu0.c.b16.cont [4/8] 0, 128
        %1824 = vxpose.xlu0.c.b16.cont [5/8] 0, 128
        %1825 = vxpose.xlu0.c.b16.cont [6/8] 0, 128
        %1826 = vxpose.xlu0.c.b16.cont [7/8] 0, 128
        %1827 = vxpose.xlu0.c.b16.end [8/8] 0, 128
        %v1828 = vpop.trf.xlu0
        %v1829 = vpop.trf.xlu0
        %v1830 = vpop.trf.xlu0
        %v1831 = vpop.trf.xlu0
        %v1832 = vpop.trf.xlu0
        %v1833 = vpop.trf.xlu0
        %v1834 = vpop.trf.xlu0
        %v1835 = vpop.trf.xlu0
        %1836 = vxpose.xlu0.c.b16.start [1/8] %v1798, 128
        %1837 = vxpose.xlu0.c.b16.cont [2/8] 0, 128
        %1838 = vxpose.xlu0.c.b16.cont [3/8] 0, 128
        %1839 = vxpose.xlu0.c.b16.cont [4/8] 0, 128
        %1840 = vxpose.xlu0.c.b16.cont [5/8] 0, 128
        %1841 = vxpose.xlu0.c.b16.cont [6/8] 0, 128
        %1842 = vxpose.xlu0.c.b16.cont [7/8] 0, 128
        %1843 = vxpose.xlu0.c.b16.end [8/8] 0, 128
        %v1844 = vpop.trf.xlu0
        %v1845 = vpop.trf.xlu0
        %v1846 = vpop.trf.xlu0
        %v1847 = vpop.trf.xlu0
        %v1848 = vpop.trf.xlu0
        %v1849 = vpop.trf.xlu0
        %v1850 = vpop.trf.xlu0
        %v1851 = vpop.trf.xlu0
        %1852 = vxpose.xlu0.c.b16.start [1/8] %v1799, 128
        %1853 = vxpose.xlu0.c.b16.cont [2/8] 0, 128
        %1854 = vxpose.xlu0.c.b16.cont [3/8] 0, 128
        %1855 = vxpose.xlu0.c.b16.cont [4/8] 0, 128
        %1856 = vxpose.xlu0.c.b16.cont [5/8] 0, 128
        %1857 = vxpose.xlu0.c.b16.cont [6/8] 0, 128
        %1858 = vxpose.xlu0.c.b16.cont [7/8] 0, 128
        %1859 = vxpose.xlu0.c.b16.end [8/8] 0, 128
        %v1860 = vpop.trf.xlu0
        %v1861 = vpop.trf.xlu0
        %v1862 = vpop.trf.xlu0
        %v1863 = vpop.trf.xlu0
        %v1864 = vpop.trf.xlu0
        %v1865 = vpop.trf.xlu0
        %v1866 = vpop.trf.xlu0
        %v1867 = vpop.trf.xlu0
        %1868 = vxpose.xlu0.c.b16.start [1/8] %v1800, 128
        %1869 = vxpose.xlu0.c.b16.cont [2/8] 0, 128
        %1870 = vxpose.xlu0.c.b16.cont [3/8] 0, 128
        %1871 = vxpose.xlu0.c.b16.cont [4/8] 0, 128
        %1872 = vxpose.xlu0.c.b16.cont [5/8] 0, 128
        %1873 = vxpose.xlu0.c.b16.cont [6/8] 0, 128
        %1874 = vxpose.xlu0.c.b16.cont [7/8] 0, 128
        %1875 = vxpose.xlu0.c.b16.end [8/8] 0, 128
        %v1876 = vpop.trf.xlu0
        %v1877 = vpop.trf.xlu0
        %v1878 = vpop.trf.xlu0
        %v1879 = vpop.trf.xlu0
        %v1880 = vpop.trf.xlu0
        %v1881 = vpop.trf.xlu0
        %v1882 = vpop.trf.xlu0
        %v1883 = vpop.trf.xlu0
        %1884 = vxpose.xlu0.c.b16.start [1/8] %v1801, 128
        %1885 = vxpose.xlu0.c.b16.cont [2/8] 0, 128
        %1886 = vxpose.xlu0.c.b16.cont [3/8] 0, 128
        %1887 = vxpose.xlu0.c.b16.cont [4/8] 0, 128
        %1888 = vxpose.xlu0.c.b16.cont [5/8] 0, 128
        %1889 = vxpose.xlu0.c.b16.cont [6/8] 0, 128
        %1890 = vxpose.xlu0.c.b16.cont [7/8] 0, 128
        %1891 = vxpose.xlu0.c.b16.end [8/8] 0, 128
        %v1892 = vpop.trf.xlu0
        %v1893 = vpop.trf.xlu0
        %v1894 = vpop.trf.xlu0
        %v1895 = vpop.trf.xlu0
        %v1896 = vpop.trf.xlu0
        %v1897 = vpop.trf.xlu0
        %v1898 = vpop.trf.xlu0
        %v1899 = vpop.trf.xlu0
        %1900 = vxpose.xlu0.c.b16.start [1/8] %v1802, 128
        %1901 = vxpose.xlu0.c.b16.cont [2/8] 0, 128
        %1902 = vxpose.xlu0.c.b16.cont [3/8] 0, 128
        %1903 = vxpose.xlu0.c.b16.cont [4/8] 0, 128
        %1904 = vxpose.xlu0.c.b16.cont [5/8] 0, 128
        %1905 = vxpose.xlu0.c.b16.cont [6/8] 0, 128
        %1906 = vxpose.xlu0.c.b16.cont [7/8] 0, 128
        %1907 = vxpose.xlu0.c.b16.end [8/8] 0, 128
        %v1908 = vpop.trf.xlu0
        %v1909 = vpop.trf.xlu0
        %v1910 = vpop.trf.xlu0
        %v1911 = vpop.trf.xlu0
        %v1912 = vpop.trf.xlu0
        %v1913 = vpop.trf.xlu0
        %v1914 = vpop.trf.xlu0
        %v1915 = vpop.trf.xlu0
        %1916 = vxpose.xlu0.c.b16.start [1/8] %v1803, 128
        %1917 = vxpose.xlu0.c.b16.cont [2/8] 0, 128
        %1918 = vxpose.xlu0.c.b16.cont [3/8] 0, 128
        %1919 = vxpose.xlu0.c.b16.cont [4/8] 0, 128
        %1920 = vxpose.xlu0.c.b16.cont [5/8] 0, 128
        %1921 = vxpose.xlu0.c.b16.cont [6/8] 0, 128
        %1922 = vxpose.xlu0.c.b16.cont [7/8] 0, 128
        %1923 = vxpose.xlu0.c.b16.end [8/8] 0, 128
        %v1924 = vpop.trf.xlu0
        %v1925 = vpop.trf.xlu0
        %v1926 = vpop.trf.xlu0
        %v1927 = vpop.trf.xlu0
        %v1928 = vpop.trf.xlu0
        %v1929 = vpop.trf.xlu0
        %v1930 = vpop.trf.xlu0
        %v1931 = vpop.trf.xlu0
        %v1932 = vcombine.low %v1812, %v1876
        %v1934 = vunpack.c.l.s4 1983009808
        %v1935 = vunpack.c.0.s8 %v1934
        %v1936 = vlaneseq
        %v1937 = vshrl.u32 %v1936, 7
        %v1938 = vsub.s32 %v1935, %v1937
        %v1939 = vrot.slane %v1932, %v1938
        %v1940 = vcombine.low %v1844, %v1908
        %v1942 = vunpack.c.l.s4 1983009808
        %v1943 = vunpack.c.0.s8 %v1942
        %v1944 = vlaneseq
        %v1945 = vshrl.u32 %v1944, 7
        %v1946 = vsub.s32 %v1943, %v1945
        %v1947 = vrot.slane %v1940, %v1946
        %v1948 = vcombine.low %v1939, %v1947
        %v1949 = vcombine.high %v1939, %v1947
        %v1951 = vunpack.c.l.s4 1934713408
        %v1952 = vunpack.c.0.s8 %v1951
        %v1953 = vlaneseq
        %v1954 = vshrl.u32 %v1953, 7
        %v1955 = vsub.s32 %v1952, %v1954
        %v1956 = vrot.slane %v1948, %v1955
        %v1958 = vunpack.c.l.s4 1934713408
        %v1959 = vunpack.c.0.s8 %v1958
        %v1960 = vlaneseq
        %v1961 = vshrl.u32 %v1960, 7
        %v1962 = vsub.s32 %v1959, %v1961
        %v1963 = vrot.slane %v1949, %v1962
        %v1964 = vcombine.high %v1956, 0
        %v1965 = vcombine.high %v1963, 0
        %v1966 = vcombine.low %v1828, %v1892
        %v1968 = vunpack.c.l.s4 1983009808
        %v1969 = vunpack.c.0.s8 %v1968
        %v1970 = vlaneseq
        %v1971 = vshrl.u32 %v1970, 7
        %v1972 = vsub.s32 %v1969, %v1971
        %v1973 = vrot.slane %v1966, %v1972
        %v1974 = vcombine.low %v1860, %v1924
        %v1976 = vunpack.c.l.s4 1983009808
        %v1977 = vunpack.c.0.s8 %v1976
        %v1978 = vlaneseq
        %v1979 = vshrl.u32 %v1978, 7
        %v1980 = vsub.s32 %v1977, %v1979
        %v1981 = vrot.slane %v1974, %v1980
        %v1982 = vcombine.low %v1973, %v1981
        %v1983 = vcombine.high %v1973, %v1981
        %v1985 = vunpack.c.l.s4 1934713408
        %v1986 = vunpack.c.0.s8 %v1985
        %v1987 = vlaneseq
        %v1988 = vshrl.u32 %v1987, 7
        %v1989 = vsub.s32 %v1986, %v1988
        %v1990 = vrot.slane %v1982, %v1989
        %v1992 = vunpack.c.l.s4 1934713408
        %v1993 = vunpack.c.0.s8 %v1992
        %v1994 = vlaneseq
        %v1995 = vshrl.u32 %v1994, 7
        %v1996 = vsub.s32 %v1993, %v1995
        %v1997 = vrot.slane %v1983, %v1996
        %v1998 = vcombine.high %v1990, 0
        %v1999 = vcombine.high %v1997, 0
        %v2002 = vpack.i.b16 %v1990, %v1956
        %v2004 = vshrl.u32 %v1956, 16
        %v2005 = vshrl.u32 %v1990, 16
        %v2006 = vpack.i.b16 %v2005, %v2004
        %v2010 = vpack.i.b16 %v1998, %v1964
        %v2012 = vshrl.u32 %v1964, 16
        %v2013 = vshrl.u32 %v1998, 16
        %v2014 = vpack.i.b16 %v2013, %v2012
        %v2018 = vpack.i.b16 %v1997, %v1963
        %v2020 = vshrl.u32 %v1963, 16
        %v2021 = vshrl.u32 %v1997, 16
        %v2022 = vpack.i.b16 %v2021, %v2020
        %v2026 = vpack.i.b16 %v1999, %v1965
        %v2028 = vshrl.u32 %v1965, 16
        %v2029 = vshrl.u32 %v1999, 16
        %v2030 = vpack.i.b16 %v2029, %v2028
        %2032 = vxpose.xlu0.c.b16.start [1/8] %v2002, 128
        %2033 = vxpose.xlu0.c.b16.cont [2/8] 0, 128
        %2034 = vxpose.xlu0.c.b16.cont [3/8] 0, 128
        %2035 = vxpose.xlu0.c.b16.cont [4/8] 0, 128
        %2036 = vxpose.xlu0.c.b16.cont [5/8] 0, 128
        %2037 = vxpose.xlu0.c.b16.cont [6/8] 0, 128
        %2038 = vxpose.xlu0.c.b16.cont [7/8] 0, 128
        %2039 = vxpose.xlu0.c.b16.end [8/8] 0, 128
        %v2040 = vpop.trf.xlu0
        %v2041 = vpop.trf.xlu0
        %v2042 = vpop.trf.xlu0
        %v2043 = vpop.trf.xlu0
        %v2044 = vpop.trf.xlu0
        %v2045 = vpop.trf.xlu0
        %v2046 = vpop.trf.xlu0
        %v2047 = vpop.trf.xlu0
        %2048 = vxpose.xlu0.c.b16.start [1/8] %v2006, 128
        %2049 = vxpose.xlu0.c.b16.cont [2/8] 0, 128
        %2050 = vxpose.xlu0.c.b16.cont [3/8] 0, 128
        %2051 = vxpose.xlu0.c.b16.cont [4/8] 0, 128
        %2052 = vxpose.xlu0.c.b16.cont [5/8] 0, 128
        %2053 = vxpose.xlu0.c.b16.cont [6/8] 0, 128
        %2054 = vxpose.xlu0.c.b16.cont [7/8] 0, 128
        %2055 = vxpose.xlu0.c.b16.end [8/8] 0, 128
        %v2056 = vpop.trf.xlu0
        %v2057 = vpop.trf.xlu0
        %v2058 = vpop.trf.xlu0
        %v2059 = vpop.trf.xlu0
        %v2060 = vpop.trf.xlu0
        %v2061 = vpop.trf.xlu0
        %v2062 = vpop.trf.xlu0
        %v2063 = vpop.trf.xlu0
        %2064 = vxpose.xlu0.c.b16.start [1/8] %v2010, 128
        %2065 = vxpose.xlu0.c.b16.cont [2/8] 0, 128
        %2066 = vxpose.xlu0.c.b16.cont [3/8] 0, 128
        %2067 = vxpose.xlu0.c.b16.cont [4/8] 0, 128
        %2068 = vxpose.xlu0.c.b16.cont [5/8] 0, 128
        %2069 = vxpose.xlu0.c.b16.cont [6/8] 0, 128
        %2070 = vxpose.xlu0.c.b16.cont [7/8] 0, 128
        %2071 = vxpose.xlu0.c.b16.end [8/8] 0, 128
        %v2072 = vpop.trf.xlu0
        %v2073 = vpop.trf.xlu0
        %v2074 = vpop.trf.xlu0
        %v2075 = vpop.trf.xlu0
        %v2076 = vpop.trf.xlu0
        %v2077 = vpop.trf.xlu0
        %v2078 = vpop.trf.xlu0
        %v2079 = vpop.trf.xlu0
        %2080 = vxpose.xlu0.c.b16.start [1/8] %v2014, 128
        %2081 = vxpose.xlu0.c.b16.cont [2/8] 0, 128
        %2082 = vxpose.xlu0.c.b16.cont [3/8] 0, 128
        %2083 = vxpose.xlu0.c.b16.cont [4/8] 0, 128
        %2084 = vxpose.xlu0.c.b16.cont [5/8] 0, 128
        %2085 = vxpose.xlu0.c.b16.cont [6/8] 0, 128
        %2086 = vxpose.xlu0.c.b16.cont [7/8] 0, 128
        %2087 = vxpose.xlu0.c.b16.end [8/8] 0, 128
        %v2088 = vpop.trf.xlu0
        %v2089 = vpop.trf.xlu0
        %v2090 = vpop.trf.xlu0
        %v2091 = vpop.trf.xlu0
        %v2092 = vpop.trf.xlu0
        %v2093 = vpop.trf.xlu0
        %v2094 = vpop.trf.xlu0
        %v2095 = vpop.trf.xlu0
        %2096 = vxpose.xlu0.c.b16.start [1/8] %v2018, 128
        %2097 = vxpose.xlu0.c.b16.cont [2/8] 0, 128
        %2098 = vxpose.xlu0.c.b16.cont [3/8] 0, 128
        %2099 = vxpose.xlu0.c.b16.cont [4/8] 0, 128
        %2100 = vxpose.xlu0.c.b16.cont [5/8] 0, 128
        %2101 = vxpose.xlu0.c.b16.cont [6/8] 0, 128
        %2102 = vxpose.xlu0.c.b16.cont [7/8] 0, 128
        %2103 = vxpose.xlu0.c.b16.end [8/8] 0, 128
        %v2104 = vpop.trf.xlu0
        %v2105 = vpop.trf.xlu0
        %v2106 = vpop.trf.xlu0
        %v2107 = vpop.trf.xlu0
        %v2108 = vpop.trf.xlu0
        %v2109 = vpop.trf.xlu0
        %v2110 = vpop.trf.xlu0
        %v2111 = vpop.trf.xlu0
        %2112 = vxpose.xlu0.c.b16.start [1/8] %v2022, 128
        %2113 = vxpose.xlu0.c.b16.cont [2/8] 0, 128
        %2114 = vxpose.xlu0.c.b16.cont [3/8] 0, 128
        %2115 = vxpose.xlu0.c.b16.cont [4/8] 0, 128
        %2116 = vxpose.xlu0.c.b16.cont [5/8] 0, 128
        %2117 = vxpose.xlu0.c.b16.cont [6/8] 0, 128
        %2118 = vxpose.xlu0.c.b16.cont [7/8] 0, 128
        %2119 = vxpose.xlu0.c.b16.end [8/8] 0, 128
        %v2120 = vpop.trf.xlu0
        %v2121 = vpop.trf.xlu0
        %v2122 = vpop.trf.xlu0
        %v2123 = vpop.trf.xlu0
        %v2124 = vpop.trf.xlu0
        %v2125 = vpop.trf.xlu0
        %v2126 = vpop.trf.xlu0
        %v2127 = vpop.trf.xlu0
        %2128 = vxpose.xlu0.c.b16.start [1/8] %v2026, 128
        %2129 = vxpose.xlu0.c.b16.cont [2/8] 0, 128
        %2130 = vxpose.xlu0.c.b16.cont [3/8] 0, 128
        %2131 = vxpose.xlu0.c.b16.cont [4/8] 0, 128
        %2132 = vxpose.xlu0.c.b16.cont [5/8] 0, 128
        %2133 = vxpose.xlu0.c.b16.cont [6/8] 0, 128
        %2134 = vxpose.xlu0.c.b16.cont [7/8] 0, 128
        %2135 = vxpose.xlu0.c.b16.end [8/8] 0, 128
        %v2136 = vpop.trf.xlu0
        %v2137 = vpop.trf.xlu0
        %v2138 = vpop.trf.xlu0
        %v2139 = vpop.trf.xlu0
        %v2140 = vpop.trf.xlu0
        %v2141 = vpop.trf.xlu0
        %v2142 = vpop.trf.xlu0
        %v2143 = vpop.trf.xlu0
        %2144 = vxpose.xlu0.c.b16.start [1/8] %v2030, 128
        %2145 = vxpose.xlu0.c.b16.cont [2/8] 0, 128
        %2146 = vxpose.xlu0.c.b16.cont [3/8] 0, 128
        %2147 = vxpose.xlu0.c.b16.cont [4/8] 0, 128
        %2148 = vxpose.xlu0.c.b16.cont [5/8] 0, 128
        %2149 = vxpose.xlu0.c.b16.cont [6/8] 0, 128
        %2150 = vxpose.xlu0.c.b16.cont [7/8] 0, 128
        %2151 = vxpose.xlu0.c.b16.end [8/8] 0, 128
        %v2152 = vpop.trf.xlu0
        %v2153 = vpop.trf.xlu0
        %v2154 = vpop.trf.xlu0
        %v2155 = vpop.trf.xlu0
        %v2156 = vpop.trf.xlu0
        %v2157 = vpop.trf.xlu0
        %v2158 = vpop.trf.xlu0
        %v2159 = vpop.trf.xlu0
        %v2160 = vcombine.low %v2040, %v2104
        %v2162 = vunpack.c.l.s4 1983009808
        %v2163 = vunpack.c.0.s8 %v2162
        %v2164 = vlaneseq
        %v2165 = vshrl.u32 %v2164, 7
        %v2166 = vsub.s32 %v2163, %v2165
        %v2167 = vrot.slane %v2160, %v2166
        %v2168 = vcombine.low %v2072, %v2136
        %v2170 = vunpack.c.l.s4 1983009808
        %v2171 = vunpack.c.0.s8 %v2170
        %v2172 = vlaneseq
        %v2173 = vshrl.u32 %v2172, 7
        %v2174 = vsub.s32 %v2171, %v2173
        %v2175 = vrot.slane %v2168, %v2174
        %v2176 = vcombine.low %v2167, %v2175
        %v2178 = vunpack.c.l.s4 1934713408
        %v2179 = vunpack.c.0.s8 %v2178
        %v2180 = vlaneseq
        %v2181 = vshrl.u32 %v2180, 7
        %v2182 = vsub.s32 %v2179, %v2181
        %v2183 = vrot.slane %v2176, %v2182
        %v2184 = vcombine.high %v2183, 0
        %v2185 = vcombine.low %v2056, %v2120
        %v2187 = vunpack.c.l.s4 1983009808
        %v2188 = vunpack.c.0.s8 %v2187
        %v2189 = vlaneseq
        %v2190 = vshrl.u32 %v2189, 7
        %v2191 = vsub.s32 %v2188, %v2190
        %v2192 = vrot.slane %v2185, %v2191
        %v2193 = vcombine.low %v2088, %v2152
        %v2195 = vunpack.c.l.s4 1983009808
        %v2196 = vunpack.c.0.s8 %v2195
        %v2197 = vlaneseq
        %v2198 = vshrl.u32 %v2197, 7
        %v2199 = vsub.s32 %v2196, %v2198
        %v2200 = vrot.slane %v2193, %v2199
        %v2201 = vcombine.low %v2192, %v2200
        %v2203 = vunpack.c.l.s4 1934713408
        %v2204 = vunpack.c.0.s8 %v2203
        %v2205 = vlaneseq
        %v2206 = vshrl.u32 %v2205, 7
        %v2207 = vsub.s32 %v2204, %v2206
        %v2208 = vrot.slane %v2201, %v2207
        %v2209 = vcombine.high %v2208, 0
        %v2212 = vpack.i.b16 %v2208, %v2183
        %v2213 = vshrl.u32 %v2183, 16
        %v2214 = vshrl.u32 %v2208, 16
        %v2215 = vpack.i.b16 %v2214, %v2213
        %v2218 = vpack.i.b16 %v2209, %v2184
        %v2219 = vshrl.u32 %v2184, 16
        %v2220 = vshrl.u32 %v2209, 16
        %v2221 = vpack.i.b16 %v2220, %v2219
        %v2223 = vsel %vm1562, %v2212, 0
        %v2226 = vsel %vm1562, %v1792, 0
        %2228 = vmatprep.subr.bf16.mxu0 0
        %2229 = vmatpush1.bf16.xpose.msra.mxu0 %v2226
        %2230 = vmatprep.subr.bf16.mxu0 0
        %2231 = vmatpush1.bf16.xpose.msra.mxu0 0
        %2232 = vmatprep.subr.bf16.mxu0 0
        %2233 = vmatpush1.bf16.xpose.msra.mxu0 0
        %2234 = vmatprep.subr.bf16.mxu0 0
        %2235 = vmatpush1.bf16.xpose.msra.mxu0 0
        %2236 = vmatprep.subr.bf16.mxu0 0
        %2237 = vmatpush1.bf16.xpose.msra.mxu0 0
        %2238 = vmatprep.subr.bf16.mxu0 0
        %2239 = vmatpush1.bf16.xpose.msra.mxu0 0
        %2240 = vmatprep.subr.bf16.mxu0 0
        %2241 = vmatpush1.bf16.xpose.msra.mxu0 0
        %2242 = vmatprep.subr.bf16.mxu0 0
        %2243 = vmatpush1.bf16.xpose.msra.mxu0 0
        %2244 = vmatprep.subr.bf16.mxu0 0
        %2245 = vmatpush1.bf16.xpose.msra.mxu0 0
        %2246 = vmatprep.subr.bf16.mxu0 0
        %2247 = vmatpush1.bf16.xpose.msra.mxu0 0
        %2248 = vmatprep.subr.bf16.mxu0 0
        %2249 = vmatpush1.bf16.xpose.msra.mxu0 0
        %2250 = vmatprep.subr.bf16.mxu0 0
        %2251 = vmatpush1.bf16.xpose.msra.mxu0 0
        %2252 = vmatprep.subr.bf16.mxu0 0
        %2253 = vmatpush1.bf16.xpose.msra.mxu0 0
        %2254 = vmatprep.subr.bf16.mxu0 0
        %2255 = vmatpush1.bf16.xpose.msra.mxu0 0
        %2256 = vmatprep.subr.bf16.mxu0 0
        %2257 = vmatpush1.bf16.xpose.msra.mxu0 0
        %2258 = vmatprep.subr.bf16.mxu0 0
        %2259 = vmatpush1.bf16.xpose.msra.mxu0 0
        %2260 = vmatprep.mubr.bf16.mxu0 0
        %2261 = vmatmul.mubr.bf16.gmra.mrb[0].mxu0 %v2223
        %v2262 = vpop.f32.mrb[0].mxu0
        %v2263 = vadd.f32 0.0, %v2262
        %v2264 = vpop.f32.mrb[0].mxu0
        %v2265 = vpop.f32.mrb[0].mxu0
        %v2266 = vpop.f32.mrb[0].mxu0
        %2267 = vdwg.mxu0
        %v2269 = vsel %vm1562, %v2215, 0
        %v2272 = vsel %vm1562, %v1793, 0
        %2274 = vmatprep.subr.bf16.mxu0 0
        %2275 = vmatpush1.bf16.xpose.msra.mxu0 %v2272
        %2276 = vmatprep.subr.bf16.mxu0 0
        %2277 = vmatpush1.bf16.xpose.msra.mxu0 0
        %2278 = vmatprep.subr.bf16.mxu0 0
        %2279 = vmatpush1.bf16.xpose.msra.mxu0 0
        %2280 = vmatprep.subr.bf16.mxu0 0
        %2281 = vmatpush1.bf16.xpose.msra.mxu0 0
        %2282 = vmatprep.subr.bf16.mxu0 0
        %2283 = vmatpush1.bf16.xpose.msra.mxu0 0
        %2284 = vmatprep.subr.bf16.mxu0 0
        %2285 = vmatpush1.bf16.xpose.msra.mxu0 0
        %2286 = vmatprep.subr.bf16.mxu0 0
        %2287 = vmatpush1.bf16.xpose.msra.mxu0 0
        %2288 = vmatprep.subr.bf16.mxu0 0
        %2289 = vmatpush1.bf16.xpose.msra.mxu0 0
        %2290 = vmatprep.subr.bf16.mxu0 0
        %2291 = vmatpush1.bf16.xpose.msra.mxu0 0
        %2292 = vmatprep.subr.bf16.mxu0 0
        %2293 = vmatpush1.bf16.xpose.msra.mxu0 0
        %2294 = vmatprep.subr.bf16.mxu0 0
        %2295 = vmatpush1.bf16.xpose.msra.mxu0 0
        %2296 = vmatprep.subr.bf16.mxu0 0
        %2297 = vmatpush1.bf16.xpose.msra.mxu0 0
        %2298 = vmatprep.subr.bf16.mxu0 0
        %2299 = vmatpush1.bf16.xpose.msra.mxu0 0
        %2300 = vmatprep.subr.bf16.mxu0 0
        %2301 = vmatpush1.bf16.xpose.msra.mxu0 0
        %2302 = vmatprep.subr.bf16.mxu0 0
        %2303 = vmatpush1.bf16.xpose.msra.mxu0 0
        %2304 = vmatprep.subr.bf16.mxu0 0
        %2305 = vmatpush1.bf16.xpose.msra.mxu0 0
        %2306 = vmatprep.mubr.bf16.mxu0 0
        %2307 = vmatmul.mubr.bf16.gmra.mrb[0].mxu0 %v2269
        %v2308 = vpop.f32.mrb[0].mxu0
        %v2309 = vadd.f32 0.0, %v2308
        %v2310 = vpop.f32.mrb[0].mxu0
        %v2311 = vpop.f32.mrb[0].mxu0
        %v2312 = vpop.f32.mrb[0].mxu0
        %2313 = vdwg.mxu0
        %v2315 = vsel %vm1562, %v2218, 0
        %v2318 = vsel %vm1562, %v1794, 0
        %2320 = vmatprep.subr.bf16.mxu0 0
        %2321 = vmatpush1.bf16.xpose.msra.mxu0 %v2318
        %2322 = vmatprep.subr.bf16.mxu0 0
        %2323 = vmatpush1.bf16.xpose.msra.mxu0 0
        %2324 = vmatprep.subr.bf16.mxu0 0
        %2325 = vmatpush1.bf16.xpose.msra.mxu0 0
        %2326 = vmatprep.subr.bf16.mxu0 0
        %2327 = vmatpush1.bf16.xpose.msra.mxu0 0
        %2328 = vmatprep.subr.bf16.mxu0 0
        %2329 = vmatpush1.bf16.xpose.msra.mxu0 0
        %2330 = vmatprep.subr.bf16.mxu0 0
        %2331 = vmatpush1.bf16.xpose.msra.mxu0 0
        %2332 = vmatprep.subr.bf16.mxu0 0
        %2333 = vmatpush1.bf16.xpose.msra.mxu0 0
        %2334 = vmatprep.subr.bf16.mxu0 0
        %2335 = vmatpush1.bf16.xpose.msra.mxu0 0
        %2336 = vmatprep.subr.bf16.mxu0 0
        %2337 = vmatpush1.bf16.xpose.msra.mxu0 0
        %2338 = vmatprep.subr.bf16.mxu0 0
        %2339 = vmatpush1.bf16.xpose.msra.mxu0 0
        %2340 = vmatprep.subr.bf16.mxu0 0
        %2341 = vmatpush1.bf16.xpose.msra.mxu0 0
        %2342 = vmatprep.subr.bf16.mxu0 0
        %2343 = vmatpush1.bf16.xpose.msra.mxu0 0
        %2344 = vmatprep.subr.bf16.mxu0 0
        %2345 = vmatpush1.bf16.xpose.msra.mxu0 0
        %2346 = vmatprep.subr.bf16.mxu0 0
        %2347 = vmatpush1.bf16.xpose.msra.mxu0 0
        %2348 = vmatprep.subr.bf16.mxu0 0
        %2349 = vmatpush1.bf16.xpose.msra.mxu0 0
        %2350 = vmatprep.subr.bf16.mxu0 0
        %2351 = vmatpush1.bf16.xpose.msra.mxu0 0
        %2352 = vmatprep.mubr.bf16.mxu0 0
        %2353 = vmatmul.mubr.bf16.gmra.mrb[0].mxu0 %v2315
        %v2354 = vpop.f32.mrb[0].mxu0
        %v2355 = vadd.f32 0.0, %v2354
        %v2356 = vpop.f32.mrb[0].mxu0
        %v2357 = vpop.f32.mrb[0].mxu0
        %v2358 = vpop.f32.mrb[0].mxu0
        %2359 = vdwg.mxu0
        %v2361 = vsel %vm1562, %v2221, 0
        %v2364 = vsel %vm1562, %v1795, 0
        %2366 = vmatprep.subr.bf16.mxu0 0
        %2367 = vmatpush1.bf16.xpose.msra.mxu0 %v2364
        %2368 = vmatprep.subr.bf16.mxu0 0
        %2369 = vmatpush1.bf16.xpose.msra.mxu0 0
        %2370 = vmatprep.subr.bf16.mxu0 0
        %2371 = vmatpush1.bf16.xpose.msra.mxu0 0
        %2372 = vmatprep.subr.bf16.mxu0 0
        %2373 = vmatpush1.bf16.xpose.msra.mxu0 0
        %2374 = vmatprep.subr.bf16.mxu0 0
        %2375 = vmatpush1.bf16.xpose.msra.mxu0 0
        %2376 = vmatprep.subr.bf16.mxu0 0
        %2377 = vmatpush1.bf16.xpose.msra.mxu0 0
        %2378 = vmatprep.subr.bf16.mxu0 0
        %2379 = vmatpush1.bf16.xpose.msra.mxu0 0
        %2380 = vmatprep.subr.bf16.mxu0 0
        %2381 = vmatpush1.bf16.xpose.msra.mxu0 0
        %2382 = vmatprep.subr.bf16.mxu0 0
        %2383 = vmatpush1.bf16.xpose.msra.mxu0 0
        %2384 = vmatprep.subr.bf16.mxu0 0
        %2385 = vmatpush1.bf16.xpose.msra.mxu0 0
        %2386 = vmatprep.subr.bf16.mxu0 0
        %2387 = vmatpush1.bf16.xpose.msra.mxu0 0
        %2388 = vmatprep.subr.bf16.mxu0 0
        %2389 = vmatpush1.bf16.xpose.msra.mxu0 0
        %2390 = vmatprep.subr.bf16.mxu0 0
        %2391 = vmatpush1.bf16.xpose.msra.mxu0 0
        %2392 = vmatprep.subr.bf16.mxu0 0
        %2393 = vmatpush1.bf16.xpose.msra.mxu0 0
        %2394 = vmatprep.subr.bf16.mxu0 0
        %2395 = vmatpush1.bf16.xpose.msra.mxu0 0
        %2396 = vmatprep.subr.bf16.mxu0 0
        %2397 = vmatpush1.bf16.xpose.msra.mxu0 0
        %2398 = vmatprep.mubr.bf16.mxu0 0
        %2399 = vmatmul.mubr.bf16.gmra.mrb[0].mxu0 %v2361
        %v2400 = vpop.f32.mrb[0].mxu0
        %v2401 = vadd.f32 0.0, %v2400
        %v2402 = vpop.f32.mrb[0].mxu0
        %v2403 = vpop.f32.mrb[0].mxu0
        %v2404 = vpop.f32.mrb[0].mxu0
        %2405 = vdwg.mxu0
        %2406 = vxpose.xlu0.b32.start [1/16] %v2263, 128
        %2407 = vxpose.xlu0.b32.cont [2/16] 0.0, 128
        %2408 = vxpose.xlu0.b32.cont [3/16] 0.0, 128
        %2409 = vxpose.xlu0.b32.cont [4/16] 0.0, 128
        %2410 = vxpose.xlu0.b32.cont [5/16] 0.0, 128
        %2411 = vxpose.xlu0.b32.cont [6/16] 0.0, 128
        %2412 = vxpose.xlu0.b32.cont [7/16] 0.0, 128
        %2413 = vxpose.xlu0.b32.cont [8/16] 0.0, 128
        %2414 = vxpose.xlu0.b32.cont [9/16] 0.0, 128
        %2415 = vxpose.xlu0.b32.cont [10/16] 0.0, 128
        %2416 = vxpose.xlu0.b32.cont [11/16] 0.0, 128
        %2417 = vxpose.xlu0.b32.cont [12/16] 0.0, 128
        %2418 = vxpose.xlu0.b32.cont [13/16] 0.0, 128
        %2419 = vxpose.xlu0.b32.cont [14/16] 0.0, 128
        %2420 = vxpose.xlu0.b32.cont [15/16] 0.0, 128
        %2421 = vxpose.xlu0.b32.end [16/16] 0.0, 128
        %v2422 = vpop.trf.xlu0
        %v2423 = vpop.trf.xlu0
        %v2424 = vpop.trf.xlu0
        %v2425 = vpop.trf.xlu0
        %v2426 = vpop.trf.xlu0
        %v2427 = vpop.trf.xlu0
        %v2428 = vpop.trf.xlu0
        %v2429 = vpop.trf.xlu0
        %v2430 = vpop.trf.xlu0
        %v2431 = vpop.trf.xlu0
        %v2432 = vpop.trf.xlu0
        %v2433 = vpop.trf.xlu0
        %v2434 = vpop.trf.xlu0
        %v2435 = vpop.trf.xlu0
        %v2436 = vpop.trf.xlu0
        %v2437 = vpop.trf.xlu0
        %2438 = vxpose.xlu0.b32.start [1/16] %v2309, 128
        %2439 = vxpose.xlu0.b32.cont [2/16] 0.0, 128
        %2440 = vxpose.xlu0.b32.cont [3/16] 0.0, 128
        %2441 = vxpose.xlu0.b32.cont [4/16] 0.0, 128
        %2442 = vxpose.xlu0.b32.cont [5/16] 0.0, 128
        %2443 = vxpose.xlu0.b32.cont [6/16] 0.0, 128
        %2444 = vxpose.xlu0.b32.cont [7/16] 0.0, 128
        %2445 = vxpose.xlu0.b32.cont [8/16] 0.0, 128
        %2446 = vxpose.xlu0.b32.cont [9/16] 0.0, 128
        %2447 = vxpose.xlu0.b32.cont [10/16] 0.0, 128
        %2448 = vxpose.xlu0.b32.cont [11/16] 0.0, 128
        %2449 = vxpose.xlu0.b32.cont [12/16] 0.0, 128
        %2450 = vxpose.xlu0.b32.cont [13/16] 0.0, 128
        %2451 = vxpose.xlu0.b32.cont [14/16] 0.0, 128
        %2452 = vxpose.xlu0.b32.cont [15/16] 0.0, 128
        %2453 = vxpose.xlu0.b32.end [16/16] 0.0, 128
        %v2454 = vpop.trf.xlu0
        %v2455 = vpop.trf.xlu0
        %v2456 = vpop.trf.xlu0
        %v2457 = vpop.trf.xlu0
        %v2458 = vpop.trf.xlu0
        %v2459 = vpop.trf.xlu0
        %v2460 = vpop.trf.xlu0
        %v2461 = vpop.trf.xlu0
        %v2462 = vpop.trf.xlu0
        %v2463 = vpop.trf.xlu0
        %v2464 = vpop.trf.xlu0
        %v2465 = vpop.trf.xlu0
        %v2466 = vpop.trf.xlu0
        %v2467 = vpop.trf.xlu0
        %v2468 = vpop.trf.xlu0
        %v2469 = vpop.trf.xlu0
        %2470 = vxpose.xlu0.b32.start [1/16] %v2355, 128
        %2471 = vxpose.xlu0.b32.cont [2/16] 0.0, 128
        %2472 = vxpose.xlu0.b32.cont [3/16] 0.0, 128
        %2473 = vxpose.xlu0.b32.cont [4/16] 0.0, 128
        %2474 = vxpose.xlu0.b32.cont [5/16] 0.0, 128
        %2475 = vxpose.xlu0.b32.cont [6/16] 0.0, 128
        %2476 = vxpose.xlu0.b32.cont [7/16] 0.0, 128
        %2477 = vxpose.xlu0.b32.cont [8/16] 0.0, 128
        %2478 = vxpose.xlu0.b32.cont [9/16] 0.0, 128
        %2479 = vxpose.xlu0.b32.cont [10/16] 0.0, 128
        %2480 = vxpose.xlu0.b32.cont [11/16] 0.0, 128
        %2481 = vxpose.xlu0.b32.cont [12/16] 0.0, 128
        %2482 = vxpose.xlu0.b32.cont [13/16] 0.0, 128
        %2483 = vxpose.xlu0.b32.cont [14/16] 0.0, 128
        %2484 = vxpose.xlu0.b32.cont [15/16] 0.0, 128
        %2485 = vxpose.xlu0.b32.end [16/16] 0.0, 128
        %v2486 = vpop.trf.xlu0
        %v2487 = vpop.trf.xlu0
        %v2488 = vpop.trf.xlu0
        %v2489 = vpop.trf.xlu0
        %v2490 = vpop.trf.xlu0
        %v2491 = vpop.trf.xlu0
        %v2492 = vpop.trf.xlu0
        %v2493 = vpop.trf.xlu0
        %v2494 = vpop.trf.xlu0
        %v2495 = vpop.trf.xlu0
        %v2496 = vpop.trf.xlu0
        %v2497 = vpop.trf.xlu0
        %v2498 = vpop.trf.xlu0
        %v2499 = vpop.trf.xlu0
        %v2500 = vpop.trf.xlu0
        %v2501 = vpop.trf.xlu0
        %2502 = vxpose.xlu0.b32.start [1/16] %v2401, 128
        %2503 = vxpose.xlu0.b32.cont [2/16] 0.0, 128
        %2504 = vxpose.xlu0.b32.cont [3/16] 0.0, 128
        %2505 = vxpose.xlu0.b32.cont [4/16] 0.0, 128
        %2506 = vxpose.xlu0.b32.cont [5/16] 0.0, 128
        %2507 = vxpose.xlu0.b32.cont [6/16] 0.0, 128
        %2508 = vxpose.xlu0.b32.cont [7/16] 0.0, 128
        %2509 = vxpose.xlu0.b32.cont [8/16] 0.0, 128
        %2510 = vxpose.xlu0.b32.cont [9/16] 0.0, 128
        %2511 = vxpose.xlu0.b32.cont [10/16] 0.0, 128
        %2512 = vxpose.xlu0.b32.cont [11/16] 0.0, 128
        %2513 = vxpose.xlu0.b32.cont [12/16] 0.0, 128
        %2514 = vxpose.xlu0.b32.cont [13/16] 0.0, 128
        %2515 = vxpose.xlu0.b32.cont [14/16] 0.0, 128
        %2516 = vxpose.xlu0.b32.cont [15/16] 0.0, 128
        %2517 = vxpose.xlu0.b32.end [16/16] 0.0, 128
        %v2518 = vpop.trf.xlu0
        %v2519 = vpop.trf.xlu0
        %v2520 = vpop.trf.xlu0
        %v2521 = vpop.trf.xlu0
        %v2522 = vpop.trf.xlu0
        %v2523 = vpop.trf.xlu0
        %v2524 = vpop.trf.xlu0
        %v2525 = vpop.trf.xlu0
        %v2526 = vpop.trf.xlu0
        %v2527 = vpop.trf.xlu0
        %v2528 = vpop.trf.xlu0
        %v2529 = vpop.trf.xlu0
        %v2530 = vpop.trf.xlu0
        %v2531 = vpop.trf.xlu0
        %v2532 = vpop.trf.xlu0
        %v2533 = vpop.trf.xlu0
        %v2534 = vcombine.low %v2422, %v2486
        %v2535 = vcombine.high %v2422, %v2486
        %v2537 = vunpack.c.l.s4 1983009808
        %v2538 = vunpack.c.0.s8 %v2537
        %v2539 = vlaneseq
        %v2540 = vshrl.u32 %v2539, 7
        %v2541 = vsub.s32 %v2538, %v2540
        %v2542 = vrot.slane %v2534, %v2541
        %v2544 = vunpack.c.l.s4 1983009808
        %v2545 = vunpack.c.0.s8 %v2544
        %v2546 = vlaneseq
        %v2547 = vshrl.u32 %v2546, 7
        %v2548 = vsub.s32 %v2545, %v2547
        %v2549 = vrot.slane %v2535, %v2548
        %v2550 = vcombine.low %v2454, %v2518
        %v2551 = vcombine.high %v2454, %v2518
        %v2553 = vunpack.c.l.s4 1983009808
        %v2554 = vunpack.c.0.s8 %v2553
        %v2555 = vlaneseq
        %v2556 = vshrl.u32 %v2555, 7
        %v2557 = vsub.s32 %v2554, %v2556
        %v2558 = vrot.slane %v2550, %v2557
        %v2560 = vunpack.c.l.s4 1983009808
        %v2561 = vunpack.c.0.s8 %v2560
        %v2562 = vlaneseq
        %v2563 = vshrl.u32 %v2562, 7
        %v2564 = vsub.s32 %v2561, %v2563
        %v2565 = vrot.slane %v2551, %v2564
        %v2566 = vcombine.low %v2542, %v2558
        %v2567 = vcombine.high %v2542, %v2558
        %v2569 = vunpack.c.l.s4 1934713408
        %v2570 = vunpack.c.0.s8 %v2569
        %v2571 = vlaneseq
        %v2572 = vshrl.u32 %v2571, 7
        %v2573 = vsub.s32 %v2570, %v2572
        %v2574 = vrot.slane %v2566, %v2573
        %v2576 = vunpack.c.l.s4 1934713408
        %v2577 = vunpack.c.0.s8 %v2576
        %v2578 = vlaneseq
        %v2579 = vshrl.u32 %v2578, 7
        %v2580 = vsub.s32 %v2577, %v2579
        %v2581 = vrot.slane %v2567, %v2580
        %v2582 = vcombine.low %v2549, %v2565
        %v2583 = vcombine.high %v2549, %v2565
        %v2585 = vunpack.c.l.s4 1934713408
        %v2586 = vunpack.c.0.s8 %v2585
        %v2587 = vlaneseq
        %v2588 = vshrl.u32 %v2587, 7
        %v2589 = vsub.s32 %v2586, %v2588
        %v2590 = vrot.slane %v2582, %v2589
        %v2592 = vunpack.c.l.s4 1934713408
        %v2593 = vunpack.c.0.s8 %v2592
        %v2594 = vlaneseq
        %v2595 = vshrl.u32 %v2594, 7
        %v2596 = vsub.s32 %v2593, %v2595
        %v2597 = vrot.slane %v2583, %v2596
        %v2598 = vcombine.high %v2574, 0.0
        %v2599 = vcombine.high %v2581, 0.0
        %v2600 = vcombine.high %v2590, 0.0
        %v2601 = vcombine.high %v2597, 0.0
        %v2602 = vcombine.low %v2574, %v2581
        %v2604 = vunpack.c.l.s4 1983009808
        %v2605 = vunpack.c.0.s8 %v2604
        %v2606 = vlaneseq
        %v2607 = vshrl.u32 %v2606, 7
        %v2608 = vsub.s32 %v2605, %v2607
        %v2609 = vrot.slane %v2602, %v2608
        %v2610 = vcombine.low %v2598, %v2599
        %v2612 = vunpack.c.l.s4 1983009808
        %v2613 = vunpack.c.0.s8 %v2612
        %v2614 = vlaneseq
        %v2615 = vshrl.u32 %v2614, 7
        %v2616 = vsub.s32 %v2613, %v2615
        %v2617 = vrot.slane %v2610, %v2616
        %v2618 = vcombine.low %v2590, %v2597
        %v2620 = vunpack.c.l.s4 1983009808
        %v2621 = vunpack.c.0.s8 %v2620
        %v2622 = vlaneseq
        %v2623 = vshrl.u32 %v2622, 7
        %v2624 = vsub.s32 %v2621, %v2623
        %v2625 = vrot.slane %v2618, %v2624
        %v2626 = vcombine.low %v2600, %v2601
        %v2628 = vunpack.c.l.s4 1983009808
        %v2629 = vunpack.c.0.s8 %v2628
        %v2630 = vlaneseq
        %v2631 = vshrl.u32 %v2630, 7
        %v2632 = vsub.s32 %v2629, %v2631
        %v2633 = vrot.slane %v2626, %v2632
        %v2634 = vcombine.low %v2609, %v2617
        %v2635 = vcombine.high %v2609, %v2617
        %v2637 = vunpack.c.l.s4 1934713408
        %v2638 = vunpack.c.0.s8 %v2637
        %v2639 = vlaneseq
        %v2640 = vshrl.u32 %v2639, 7
        %v2641 = vsub.s32 %v2638, %v2640
        %v2642 = vrot.slane %v2634, %v2641
        %v2644 = vunpack.c.l.s4 1934713408
        %v2645 = vunpack.c.0.s8 %v2644
        %v2646 = vlaneseq
        %v2647 = vshrl.u32 %v2646, 7
        %v2648 = vsub.s32 %v2645, %v2647
        %v2649 = vrot.slane %v2635, %v2648
        %v2650 = vcombine.low %v2625, %v2633
        %v2651 = vcombine.high %v2625, %v2633
        %v2653 = vunpack.c.l.s4 1934713408
        %v2654 = vunpack.c.0.s8 %v2653
        %v2655 = vlaneseq
        %v2656 = vshrl.u32 %v2655, 7
        %v2657 = vsub.s32 %v2654, %v2656
        %v2658 = vrot.slane %v2650, %v2657
        %v2660 = vunpack.c.l.s4 1934713408
        %v2661 = vunpack.c.0.s8 %v2660
        %v2662 = vlaneseq
        %v2663 = vshrl.u32 %v2662, 7
        %v2664 = vsub.s32 %v2661, %v2663
        %v2665 = vrot.slane %v2651, %v2664
        %v2666 = vcombine.low %v2642, %v2658
        %v2667 = vcombine.high %v2642, %v2658
        %v2668 = vcombine.low %v2649, %v2665
        %v2669 = vcombine.high %v2649, %v2665
        %2671 = vrot.lane.b32.xlu0 %v2667, 8
        %v2672 = vpop.permute.xlu0 %2671
        %2675 = vrot.lane.b32.xlu0 %v2668, 16
        %v2676 = vpop.permute.xlu0 %2675
        %2679 = vrot.lane.b32.xlu0 %v2669, 24
        %v2680 = vpop.permute.xlu0 %2679
        %v2682 = vsel %vm1562, %v2666, %v2672
        %vm2683 = vcmask 130048
        %v2684 = vsel %vm2683, %v2682, %v2676
        %vm2685 = vcmask 195584
        %v2686 = vsel %vm2685, %v2684, %v2680
        %v2687 = vpack.c.bf16 %v2686, %v2686
        %v2688 = vld [vmem:[%s4] sm:$0xf]
        %v2689 = vld [vmem:[%s4 + $0x4] sm:$0xf]
        %v2690 = vld [vmem:[%s4 + $0x8] sm:$0xf]
        %v2691 = vld [vmem:[%s4 + $0xc] sm:$0xf]
        %v2692 = vld [vmem:[#allocation5] sm:$0x1]
        %v2694 = vlaneseq
        %v2695 = vshrl.u32 %v2694, 7
        %v2696 = vsub.s32 0, %v2695
        %v2697 = vrot.slane %v2692, %v2696
        %v2703 = vunpack.c.l.b16 %v2688
        %v2704 = vunpack.c.l.b16 %v2689
        %v2705 = vunpack.c.l.b16 %v2690
        %v2706 = vunpack.c.l.b16 %v2691
        %v2707 = vpack.c.b16 %v2704, %v2703
        %v2708 = vpack.c.b16 %v2706, %v2705
        %v2712 = vsel %vm776, %v2687, 0
        %2714 = vmatprep.subr.bf16.mxu0 0
        %2715 = vmatpush1.bf16.msra.mxu0 %v2707
        %2716 = vmatprep.subr.bf16.mxu0 0
        %2717 = vmatpush1.bf16.msra.mxu0 %v2708
        %2718 = vmatprep.subr.bf16.mxu0 0
        %2719 = vmatpush1.bf16.msra.mxu0 0
        %2720 = vmatprep.subr.bf16.mxu0 0
        %2721 = vmatpush1.bf16.msra.mxu0 0
        %2722 = vmatprep.subr.bf16.mxu0 0
        %2723 = vmatpush1.bf16.msra.mxu0 0
        %2724 = vmatprep.subr.bf16.mxu0 0
        %2725 = vmatpush1.bf16.msra.mxu0 0
        %2726 = vmatprep.subr.bf16.mxu0 0
        %2727 = vmatpush1.bf16.msra.mxu0 0
        %2728 = vmatprep.subr.bf16.mxu0 0
        %2729 = vmatpush1.bf16.msra.mxu0 0
        %2730 = vmatprep.subr.bf16.mxu0 0
        %2731 = vmatpush1.bf16.msra.mxu0 0
        %2732 = vmatprep.subr.bf16.mxu0 0
        %2733 = vmatpush1.bf16.msra.mxu0 0
        %2734 = vmatprep.subr.bf16.mxu0 0
        %2735 = vmatpush1.bf16.msra.mxu0 0
        %2736 = vmatprep.subr.bf16.mxu0 0
        %2737 = vmatpush1.bf16.msra.mxu0 0
        %2738 = vmatprep.subr.bf16.mxu0 0
        %2739 = vmatpush1.bf16.msra.mxu0 0
        %2740 = vmatprep.subr.bf16.mxu0 0
        %2741 = vmatpush1.bf16.msra.mxu0 0
        %2742 = vmatprep.subr.bf16.mxu0 0
        %2743 = vmatpush1.bf16.msra.mxu0 0
        %2744 = vmatprep.subr.bf16.mxu0 0
        %2745 = vmatpush1.bf16.msra.mxu0 0
        %2746 = vmatprep.mubr.bf16.mxu0 0
        %2747 = vmatmul.mubr.bf16.gmra.mrb[0].mxu0 %v2712
        %v2748 = vpop.f32.mrb[0].mxu0
        %v2749 = vadd.f32 %v2697, %v2748
        %v2750 = vpop.f32.mrb[0].mxu0
        %v2751 = vpop.f32.mrb[0].mxu0
        %v2752 = vpop.f32.mrb[0].mxu0
        %2753 = vdwg.mxu0
        %v2754 = vadd.f32 %v739, %v2749
        %v2755 = vsel %vm776, %v2754, 0.0
        %2756 = vadd.xlane.f32.xlu0 %v2755
        %v2757 = vpop.xlane.xlu0 %2756
        %v2758 = vrcp.pop 32.0
        %v2759 = vmul.f32 %v2757, %v2758
        %v2760 = vsub.f32 %v2754, %v2759
        %v2761 = vmul.f32 %v2760, %v2760
        %v2762 = vsel %vm776, %v2761, 0.0
        %2763 = vadd.xlane.f32.xlu0 %v2762
        %v2764 = vpop.xlane.xlu0 %2763
        %v2765 = vmul.f32 %v2764, %v2758
        %v2766 = vadd.f32 %v2765, 1e-12
        %v2767 = vrsqrt.pop %v2766
        %v2768 = vmul.f32 %v2760, %v2767
        %v2769 = vld [vmem:[#allocation7] sm:$0x1]
        %v2771 = vlaneseq
        %v2772 = vshrl.u32 %v2771, 7
        %v2773 = vsub.s32 0, %v2772
        %v2774 = vrot.slane %v2769, %v2773
        %v2776 = vmul.f32 %v2768, %v2774
        %v2777 = vld [vmem:[#allocation8] sm:$0x1]
        %v2779 = vlaneseq
        %v2780 = vshrl.u32 %v2779, 7
        %v2781 = vsub.s32 0, %v2780
        %v2782 = vrot.slane %v2777, %v2781
        %v2784 = vadd.f32 %v2776, %v2782
        %v2785 = vpack.c.bf16 %v2784, %v2784
        %v2786 = vld [vmem:[%s8] sm:$0xf]
        %v2787 = vld [vmem:[%s8 + $0x4] sm:$0xf]
        %v2788 = vld [vmem:[%s8 + $0x8] sm:$0xf]
        %v2789 = vld [vmem:[%s8 + $0xc] sm:$0xf]
        %v2790 = vld [vmem:[#allocation10] sm:$0x1]
        %v2792 = vlaneseq
        %v2793 = vshrl.u32 %v2792, 7
        %v2794 = vsub.s32 0, %v2793
        %v2795 = vrot.slane %v2790, %v2794
        %v2801 = vunpack.c.l.b16 %v2786
        %v2802 = vunpack.c.l.b16 %v2787
        %v2803 = vunpack.c.l.b16 %v2788
        %v2804 = vunpack.c.l.b16 %v2789
        %v2805 = vpack.c.b16 %v2802, %v2801
        %v2806 = vpack.c.b16 %v2804, %v2803
        %v2810 = vsel %vm776, %v2785, 0
        %2812 = vmatprep.subr.bf16.mxu0 0
        %2813 = vmatpush1.bf16.msra.mxu0 %v2805
        %2814 = vmatprep.subr.bf16.mxu0 0
        %2815 = vmatpush1.bf16.msra.mxu0 %v2806
        %2816 = vmatprep.subr.bf16.mxu0 0
        %2817 = vmatpush1.bf16.msra.mxu0 0
        %2818 = vmatprep.subr.bf16.mxu0 0
        %2819 = vmatpush1.bf16.msra.mxu0 0
        %2820 = vmatprep.subr.bf16.mxu0 0
        %2821 = vmatpush1.bf16.msra.mxu0 0
        %2822 = vmatprep.subr.bf16.mxu0 0
        %2823 = vmatpush1.bf16.msra.mxu0 0
        %2824 = vmatprep.subr.bf16.mxu0 0
        %2825 = vmatpush1.bf16.msra.mxu0 0
        %2826 = vmatprep.subr.bf16.mxu0 0
        %2827 = vmatpush1.bf16.msra.mxu0 0
        %2828 = vmatprep.subr.bf16.mxu0 0
        %2829 = vmatpush1.bf16.msra.mxu0 0
        %2830 = vmatprep.subr.bf16.mxu0 0
        %2831 = vmatpush1.bf16.msra.mxu0 0
        %2832 = vmatprep.subr.bf16.mxu0 0
        %2833 = vmatpush1.bf16.msra.mxu0 0
        %2834 = vmatprep.subr.bf16.mxu0 0
        %2835 = vmatpush1.bf16.msra.mxu0 0
        %2836 = vmatprep.subr.bf16.mxu0 0
        %2837 = vmatpush1.bf16.msra.mxu0 0
        %2838 = vmatprep.subr.bf16.mxu0 0
        %2839 = vmatpush1.bf16.msra.mxu0 0
        %2840 = vmatprep.subr.bf16.mxu0 0
        %2841 = vmatpush1.bf16.msra.mxu0 0
        %2842 = vmatprep.subr.bf16.mxu0 0
        %2843 = vmatpush1.bf16.msra.mxu0 0
        %2844 = vmatprep.mubr.bf16.mxu0 0
        %2845 = vmatmul.mubr.bf16.gmra.mrb[0].mxu0 %v2810
        %v2846 = vpop.f32.mrb[0].mxu0
        %v2847 = vadd.f32 %v2795, %v2846
        %v2848 = vpop.f32.mrb[0].mxu0
        %v2849 = vpop.f32.mrb[0].mxu0
        %v2850 = vpop.f32.mrb[0].mxu0
        %2851 = vdwg.mxu0
        %v2852 = vmul.f32 %v2847, %v2847
        %v2853 = vmul.f32 %v2847, %v2852
        %v2854 = vmul.f32 %v2853, 0.044715
        %v2855 = vadd.f32 %v2847, %v2854
        %v2856 = vmul.f32 %v2855, 0.7978846
        %v2857 = vtanh.pop %v2856
        %v2858 = vadd.f32 %v2857, 1.0
        %v2859 = vmul.f32 %v2858, 0.5
        %v2860 = vmul.f32 %v2847, %v2859
        %v2861 = vpack.c.bf16 %v2860, %v2860
        %v2862 = vld [vmem:[%s10] sm:$0xf]
        %v2863 = vld [vmem:[%s10 + $0x4] sm:$0xf]
        %v2864 = vld [vmem:[%s10 + $0x8] sm:$0xf]
        %v2865 = vld [vmem:[%s10 + $0xc] sm:$0xf]
        %v2866 = vld [vmem:[%s10 + $0x10] sm:$0xf]
        %v2867 = vld [vmem:[%s10 + $0x14] sm:$0xf]
        %v2868 = vld [vmem:[%s10 + $0x18] sm:$0xf]
        %v2869 = vld [vmem:[%s10 + $0x1c] sm:$0xf]
        %v2870 = vld [vmem:[#allocation11] sm:$0x1]
        %v2872 = vlaneseq
        %v2873 = vshrl.u32 %v2872, 7
        %v2874 = vsub.s32 0, %v2873
        %v2875 = vrot.slane %v2870, %v2874
        %v2885 = vunpack.c.l.b16 %v2862
        %v2886 = vunpack.c.l.b16 %v2863
        %v2887 = vunpack.c.l.b16 %v2864
        %v2888 = vunpack.c.l.b16 %v2865
        %v2889 = vunpack.c.l.b16 %v2866
        %v2890 = vunpack.c.l.b16 %v2867
        %v2891 = vunpack.c.l.b16 %v2868
        %v2892 = vunpack.c.l.b16 %v2869
        %v2893 = vpack.c.b16 %v2886, %v2885
        %v2894 = vpack.c.b16 %v2888, %v2887
        %v2895 = vpack.c.b16 %v2890, %v2889
        %v2896 = vpack.c.b16 %v2892, %v2891
        %vm2901 = vcmask 523264
        %v2903 = vsel %vm2901, %v2861, 0
        %2905 = vmatprep.subr.bf16.mxu0 0
        %2906 = vmatpush1.bf16.msra.mxu0 %v2893
        %2907 = vmatprep.subr.bf16.mxu0 0
        %2908 = vmatpush1.bf16.msra.mxu0 %v2894
        %2909 = vmatprep.subr.bf16.mxu0 0
        %2910 = vmatpush1.bf16.msra.mxu0 %v2895
        %2911 = vmatprep.subr.bf16.mxu0 0
        %2912 = vmatpush1.bf16.msra.mxu0 %v2896
        %2913 = vmatprep.subr.bf16.mxu0 0
        %2914 = vmatpush1.bf16.msra.mxu0 0
        %2915 = vmatprep.subr.bf16.mxu0 0
        %2916 = vmatpush1.bf16.msra.mxu0 0
        %2917 = vmatprep.subr.bf16.mxu0 0
        %2918 = vmatpush1.bf16.msra.mxu0 0
        %2919 = vmatprep.subr.bf16.mxu0 0
        %2920 = vmatpush1.bf16.msra.mxu0 0
        %2921 = vmatprep.subr.bf16.mxu0 0
        %2922 = vmatpush1.bf16.msra.mxu0 0
        %2923 = vmatprep.subr.bf16.mxu0 0
        %2924 = vmatpush1.bf16.msra.mxu0 0
        %2925 = vmatprep.subr.bf16.mxu0 0
        %2926 = vmatpush1.bf16.msra.mxu0 0
        %2927 = vmatprep.subr.bf16.mxu0 0
        %2928 = vmatpush1.bf16.msra.mxu0 0
        %2929 = vmatprep.subr.bf16.mxu0 0
        %2930 = vmatpush1.bf16.msra.mxu0 0
        %2931 = vmatprep.subr.bf16.mxu0 0
        %2932 = vmatpush1.bf16.msra.mxu0 0
        %2933 = vmatprep.subr.bf16.mxu0 0
        %2934 = vmatpush1.bf16.msra.mxu0 0
        %2935 = vmatprep.subr.bf16.mxu0 0
        %2936 = vmatpush1.bf16.msra.mxu0 0
        %2937 = vmatprep.mubr.bf16.mxu0 0
        %2938 = vmatmul.mubr.bf16.gmra.mrb[0].mxu0 %v2903
        %v2939 = vpop.f32.mrb[0].mxu0
        %v2940 = vadd.f32 %v2875, %v2939
        %v2941 = vpop.f32.mrb[0].mxu0
        %v2942 = vpop.f32.mrb[0].mxu0
        %v2943 = vpop.f32.mrb[0].mxu0
        %2944 = vdwg.mxu0
        %v2945 = vadd.f32 %v2784, %v2940
        %v2946 = vsel %vm776, %v2945, 0.0
        %2947 = vadd.xlane.f32.xlu0 %v2946
        %v2948 = vpop.xlane.xlu0 %2947
        %v2949 = vmul.f32 %v2948, %v2758
        %v2950 = vsub.f32 %v2945, %v2949
        %v2951 = vmul.f32 %v2950, %v2950
        %v2952 = vsel %vm776, %v2951, 0.0
        %2953 = vadd.xlane.f32.xlu0 %v2952
        %v2954 = vpop.xlane.xlu0 %2953
        %v2955 = vmul.f32 %v2954, %v2758
        %v2956 = vadd.f32 %v2955, 1e-12
        %v2957 = vrsqrt.pop %v2956
        %v2958 = vmul.f32 %v2950, %v2957
        %v2959 = vld [vmem:[#allocation13] sm:$0x1]
        %v2961 = vlaneseq
        %v2962 = vshrl.u32 %v2961, 7
        %v2963 = vsub.s32 0, %v2962
        %v2964 = vrot.slane %v2959, %v2963
        %v2966 = vmul.f32 %v2958, %v2964
        %v2967 = vld [vmem:[#allocation14] sm:$0x1]
        %v2969 = vlaneseq
        %v2970 = vshrl.u32 %v2969, 7
        %v2971 = vsub.s32 0, %v2970
        %v2972 = vrot.slane %v2967, %v2971
        %v2974 = vadd.f32 %v2966, %v2972
        %v2975 = vpack.c.bf16 %v2974, %v2974
        %v2976 = vld [vmem:[%s14] sm:$0xf]
        %v2977 = vld [vmem:[%s14 + $0x4] sm:$0xf]
        %v2978 = vld [vmem:[%s14 + $0x8] sm:$0xf]
        %v2979 = vld [vmem:[%s14 + $0xc] sm:$0xf]
        %v2980 = vld [vmem:[#allocation16] sm:$0x1]
        %v2985 = vunpack.c.l.b16 %v2976
        %v2986 = vunpack.c.l.b16 %v2977
        %v2987 = vunpack.c.l.b16 %v2978
        %v2988 = vunpack.c.l.b16 %v2979
        %v2989 = vpack.c.b16 %v2986, %v2985
        %v2990 = vpack.c.b16 %v2988, %v2987
        %v2994 = vsel %vm776, %v2975, 0
        %2996 = vmatprep.subr.bf16.mxu0 0
        %2997 = vmatpush1.bf16.msra.mxu0 %v2989
        %2998 = vmatprep.subr.bf16.mxu0 0
        %2999 = vmatpush1.bf16.msra.mxu0 %v2990
        %3000 = vmatprep.subr.bf16.mxu0 0
        %3001 = vmatpush1.bf16.msra.mxu0 0
        %3002 = vmatprep.subr.bf16.mxu0 0
        %3003 = vmatpush1.bf16.msra.mxu0 0
        %3004 = vmatprep.subr.bf16.mxu0 0
        %3005 = vmatpush1.bf16.msra.mxu0 0
        %3006 = vmatprep.subr.bf16.mxu0 0
        %3007 = vmatpush1.bf16.msra.mxu0 0
        %3008 = vmatprep.subr.bf16.mxu0 0
        %3009 = vmatpush1.bf16.msra.mxu0 0
        %3010 = vmatprep.subr.bf16.mxu0 0
        %3011 = vmatpush1.bf16.msra.mxu0 0
        %3012 = vmatprep.subr.bf16.mxu0 0
        %3013 = vmatpush1.bf16.msra.mxu0 0
        %3014 = vmatprep.subr.bf16.mxu0 0
        %3015 = vmatpush1.bf16.msra.mxu0 0
        %3016 = vmatprep.subr.bf16.mxu0 0
        %3017 = vmatpush1.bf16.msra.mxu0 0
        %3018 = vmatprep.subr.bf16.mxu0 0
        %3019 = vmatpush1.bf16.msra.mxu0 0
        %3020 = vmatprep.subr.bf16.mxu0 0
        %3021 = vmatpush1.bf16.msra.mxu0 0
        %3022 = vmatprep.subr.bf16.mxu0 0
        %3023 = vmatpush1.bf16.msra.mxu0 0
        %3024 = vmatprep.subr.bf16.mxu0 0
        %3025 = vmatpush1.bf16.msra.mxu0 0
        %3026 = vmatprep.subr.bf16.mxu0 0
        %3027 = vmatpush1.bf16.msra.mxu0 0
        %3028 = vmatprep.mubr.bf16.mxu0 0
        %3029 = vmatmul.mubr.bf16.gmra.mrb[0].mxu0 %v2994
        %v3030 = vpop.f32.mrb[0].mxu0
        %v3031 = vadd.f32 %v2980, %v3030
        %v3032 = vpop.f32.mrb[0].mxu0
        %v3033 = vpop.f32.mrb[0].mxu0
        %v3034 = vpop.f32.mrb[0].mxu0
        %3035 = vdwg.mxu0
        %v3036 = vtanh.pop %v3031
        %v3037 = vld [vmem:[%s737] sm:$0x1]
        %v3038 = vmul.f32 %v3036, %v3037
        %v3039 = vpack.c.bf16 %v3038, %v3038
        %v3040 = vld [vmem:[%s16] sm:$0xf]
        %v3041 = vld [vmem:[%s16 + $0x4] sm:$0xf]
        %v3042 = vld [vmem:[%s16 + $0x8] sm:$0xf]
        %v3043 = vld [vmem:[%s16 + $0xc] sm:$0xf]
        %v3044 = vld [vmem:[%s17] sm:$0x1]
        %v3049 = vunpack.c.l.b16 %v3040
        %v3050 = vunpack.c.l.b16 %v3041
        %v3051 = vunpack.c.l.b16 %v3042
        %v3052 = vunpack.c.l.b16 %v3043
        %v3053 = vpack.c.b16 %v3050, %v3049
        %v3054 = vpack.c.b16 %v3052, %v3051
        %v3058 = vsel %vm776, %v3039, 0
        %3060 = vmatprep.subr.bf16.mxu0 0
        %3061 = vmatpush1.bf16.msra.mxu0 %v3053
        %3062 = vmatprep.subr.bf16.mxu0 0
        %3063 = vmatpush1.bf16.msra.mxu0 %v3054
        %3064 = vmatprep.subr.bf16.mxu0 0
        %3065 = vmatpush1.bf16.msra.mxu0 0
        %3066 = vmatprep.subr.bf16.mxu0 0
        %3067 = vmatpush1.bf16.msra.mxu0 0
        %3068 = vmatprep.subr.bf16.mxu0 0
        %3069 = vmatpush1.bf16.msra.mxu0 0
        %3070 = vmatprep.subr.bf16.mxu0 0
        %3071 = vmatpush1.bf16.msra.mxu0 0
        %3072 = vmatprep.subr.bf16.mxu0 0
        %3073 = vmatpush1.bf16.msra.mxu0 0
        %3074 = vmatprep.subr.bf16.mxu0 0
        %3075 = vmatpush1.bf16.msra.mxu0 0
        %3076 = vmatprep.subr.bf16.mxu0 0
        %3077 = vmatpush1.bf16.msra.mxu0 0
        %3078 = vmatprep.subr.bf16.mxu0 0
        %3079 = vmatpush1.bf16.msra.mxu0 0
        %3080 = vmatprep.subr.bf16.mxu0 0
        %3081 = vmatpush1.bf16.msra.mxu0 0
        %3082 = vmatprep.subr.bf16.mxu0 0
        %3083 = vmatpush1.bf16.msra.mxu0 0
        %3084 = vmatprep.subr.bf16.mxu0 0
        %3085 = vmatpush1.bf16.msra.mxu0 0
        %3086 = vmatprep.subr.bf16.mxu0 0
        %3087 = vmatpush1.bf16.msra.mxu0 0
        %3088 = vmatprep.subr.bf16.mxu0 0
        %3089 = vmatpush1.bf16.msra.mxu0 0
        %3090 = vmatprep.subr.bf16.mxu0 0
        %3091 = vmatpush1.bf16.msra.mxu0 0
        %3092 = vmatprep.mubr.bf16.mxu0 0
        %3093 = vmatmul.mubr.bf16.gmra.mrb[0].mxu0 %v3058
        %v3094 = vpop.f32.mrb[0].mxu0
        %v3095 = vadd.f32 %v3044, %v3094
        %v3096 = vpop.f32.mrb[0].mxu0
        %v3097 = vpop.f32.mrb[0].mxu0
        %v3098 = vpop.f32.mrb[0].mxu0
        %3099 = vdwg.mxu0
        %3100 = vst [vmem:[%s727] sm:$0x1] %v3095
        %s3101 = sand.u32 %s460, 1
        %s3102 = scalar_lea.sflag [#allocation4], %s3101
        %s3103 = sand.u32 %s460, 1
        %s3104 = scalar_lea.vmem [#allocation17], %s3103
        // Predicated region
        $region133: #{tpu_custom_call.1} parent=95 // pred_check
          %p3105 = pneg %p470
        $region134: #{tpu_custom_call.1} parent=95 // pred_check_branch
          %3107 = sbr.rel (%p3105) target = $region136
        $region135: #{tpu_custom_call.1} parent=95 // pred_region
          %s3109 = ssub.s32 16, 16
          %3110 = vsyncadd %s3102, %s3109
          %s3111 = smul.addr %s38, 16
          %s3112 = scalar_lea.hbm %s19, %s3111
          %s3114 = sshll.u32 %s3104, 4
          %s3115 = int_to_ptr.vmem [resolvable:$true] %s3114
          %3117 = dma.vmem_to_hbm [thread:$0]  %s3115, 16, %s3112, %s3102
        $region136: #{tpu_custom_call.1} parent=95 // pred_fallthru
          _
      $region96: #{tpu_custom_call.1} parent=5 // pred_fallthru
        _
      %p3118 = scmp.le.s32.totalorder 2, %s33
      // Predicated region
      $region137: #{tpu_custom_call.1} parent=5 // pred_check
        %p3119 = pneg %p3118
      $region138: #{tpu_custom_call.1} parent=5 // pred_check_branch
        %3121 = sbr.rel (%p3119) target = $region140
      $region139: #{tpu_custom_call.1} parent=5 // pred_region
        %s3122 = ssub.s32 %s33, 2
        // Predicated region
        $region141: #{tpu_custom_call.1} parent=139 // pred_check
          %p3123 = pneg %p476
        $region142: #{tpu_custom_call.1} parent=139 // pred_check_branch
          %3125 = sbr.rel (%p3123) target = $region144
        $region143: #{tpu_custom_call.1} parent=139 // pred_region
          %s3126 = sand.u32 %s461, 1
          %s3127 = scalar_lea.sflag [#allocation4], %s3126
          %s3128 = sand.u32 %s461, 1
          %s3129 = scalar_lea.vmem [#allocation17], %s3128
          %3130 = dma.done %s3127, 16
        $region144: #{tpu_custom_call.1} parent=139 // pred_fallthru
          _
      $region140: #{tpu_custom_call.1} parent=5 // pred_fallthru
        _
    $region6: #{tpu_custom_call.1} parent=1 // loop_footer
      %s37 = sadd.s32 1, %s33
    $region7: #{tpu_custom_call.1} parent=1 // loop_footer_branch
      %32 = sbr.rel target = $region3
    $region8: #{tpu_custom_call.1} parent=1 // loop_exit
      _
    %3131 = vsyncpa [#allocation3], 1
    %s3132 = scalar_lea.sflag [#allocation3], 1
    %3133 = vsyncpa %s3132, 1
    %3134 = vsyncpa [#allocation6], 1
    %3135 = vsyncpa [#allocation9], 1
    %3136 = vsyncpa [#allocation12], 1
    %3137 = vsyncpa [#allocation15], 1
    %3138 = vsyncpa [#allocation4], 1
    %s3139 = scalar_lea.sflag [#allocation4], 1
    %3140 = vsyncpa %s3139, 1

</llo_original>
